<compile_context>
chip_gen: v7x
topology: tpu7x:2x2x1
jax: 0.10.0
libtpu: 0.0.40
codegen_flags: <defaults>
</compile_context>

<pallas_src>
import functools
from types import SimpleNamespace

import jax
import jax.numpy as jnp
from jax.experimental import pallas as pl
from jax.experimental.pallas import tpu as pltpu

_LANE = 128     # vreg lane width
_SUBLANE = 8    # f32 sublane count


def _ceil_to(x, m):
    return ((x + m - 1) // m) * m


# ------------------------------ fused kernel ---------------------------------

def _make_fused_kernel(T, Bp, Hp, L, aggregation):
    """Fused forward kernel for static (padded) sizes."""
    inv_T = 1.0 / T

    def kernel(*refs):
        idx = 0
        x_ref = refs[idx]; idx += 1                 # (T*Bp, Ep)
        wih_refs, whh_refs, b_refs = [], [], []
        for _ in range(L):
            wih_refs.append(refs[idx]); idx += 1    # (in_pad, 4*Hp) pre-transposed, gate-aligned
            whh_refs.append(refs[idx]); idx += 1    # (Hp, 4*Hp)
            b_refs.append(refs[idx]); idx += 1      # (1, 4*Hp)      b_ih + b_hh
        h0_ref = refs[idx]; idx += 1                # (L, Bp, Hp)
        c0_ref = refs[idx]; idx += 1                # (L, Bp, Hp)
        dec_w_ref = refs[idx]; idx += 1             # (Hp, Np)
        dec_b_ref = refs[idx]; idx += 1             # (1, Np)  pad cols = -1e30
        prob_ref = refs[idx]; idx += 1              # (Bp, Np)       out
        hN_ref = refs[idx]; idx += 1                # (L, Bp, Hp)    out
        cN_ref = refs[idx]; idx += 1                # (L, Bp, Hp)    out
        gates_sc = refs[idx]; idx += 1              # (T*Bp, 4*Hp)   VMEM scratch

        layer_in = x_ref[...]                       # (T*Bp, in_pad)
        agg = None
        for l in range(L):
            last = (l == L - 1)
            # Whole-sequence input projection: one GEMM, staged in VMEM so the
            # serial loop below reads an aligned (Bp, 4Hp) block per step.
            gates_sc[...] = (jnp.dot(layer_in, wih_refs[l][...],
                                     preferred_element_type=jnp.float32)
                             + b_refs[l][...])
            h = h0_ref[l]                           # (Bp, Hp)
            c = c0_ref[l]                           # (Bp, Hp)
            acc = jnp.zeros((Bp, Hp), jnp.float32)
            outs = []
            for t in range(T):                      # small static trip count
                g = (gates_sc[t * Bp:(t + 1) * Bp, :]
                     + jnp.dot(h, whh_refs[l][...],
                               preferred_element_type=jnp.float32))   # (Bp, 4Hp)
                # PyTorch gate order i, f, g, o; each gate is its own full
                # 128-lane block -> vreg-aligned slices, no lane shuffles.
                i_g = jax.nn.sigmoid(g[:, 0 * Hp:1 * Hp])
                f_g = jax.nn.sigmoid(g[:, 1 * Hp:2 * Hp])
                g_g = jnp.tanh(g[:, 2 * Hp:3 * Hp])
                o_g = jax.nn.sigmoid(g[:, 3 * Hp:4 * Hp])
                c = f_g * c + i_g * g_g
                h = o_g * jnp.tanh(c)
                if last:
                    acc = acc + h                   # running sum for mean-pool
                else:
                    outs.append(h)                  # stays in vregs
            hN_ref[l] = h
            cN_ref[l] = c
            if last:
                agg = acc * inv_T if aggregation == "mean" else h
            else:
                # Register-resident stack: feeds next layer's GEMM, no VMEM trip.
                layer_in = jnp.concatenate(outs, axis=0)   # (T*Bp, Hp)

        # Decoder + softmax (padded logit columns carry a -1e30 bias -> prob 0).
        logits = (jnp.dot(agg, dec_w_ref[...], preferred_element_type=jnp.float32)
                  + dec_b_ref[...])                 # (Bp, Np)
        m = jnp.max(logits, axis=-1, keepdims=True)
        e = jnp.exp(logits - m)
        prob_ref[...] = e * pl.reciprocal(jnp.sum(e, axis=-1, keepdims=True),
                                          approx=True)

    return kernel


# ----------------------------- wrapper / padding ------------------------------

def _pad_gate_cols(w_t, in_pad, H, Hp):
    """(in_dim, 4H) -> (in_pad, 4*Hp) with each gate block lane-aligned."""
    in_dim = w_t.shape[0]
    out = jnp.zeros((in_pad, 4 * Hp), jnp.float32)
    for gate in range(4):
        out = out.at[:in_dim, gate * Hp:gate * Hp + H].set(
            w_t[:, gate * H:(gate + 1) * H])
    return out


def _pad_gate_bias(b, H, Hp):
    out = jnp.zeros((1, 4 * Hp), jnp.float32)
    for gate in range(4):
        out = out.at[0, gate * Hp:gate * Hp + H].set(b[gate * H:(gate + 1) * H])
    return out


def basic_rnn_forward(params, input_ids, input_adv_ids, metafeature, hidden,
                      aggregation="mean"):
    # Dead code in the reference forward (never used in prob / returned hidden):
    #   * the advertising LSTM pass (output_advertising, hidden_advertising)
    #   * the metafeature Linear
    del input_adv_ids, metafeature
    h0, c0 = hidden
    L, B, H = h0.shape
    T = input_ids.shape[0]
    emb = params["embedding"]
    E = emb.shape[1]
    n_out = params["dec_w"].shape[0]

    Bp = _ceil_to(max(B, _SUBLANE), _SUBLANE)   # batch -> f32 sublane multiple
    Hp = _ceil_to(H, _LANE)                     # hidden -> full lane block
    Ep = _ceil_to(E, _LANE)
    Np = _ceil_to(n_out, _LANE)

    # Embedding lookup (gather; eval-mode dropout = identity), padded so every
    # per-timestep row block in the kernel is sublane/lane aligned.
    x = jnp.take(emb, input_ids, axis=0)                           # (T, B, E)
    x_pad = jnp.zeros((T, Bp, Ep), jnp.float32).at[:, :B, :E].set(x)
    x_flat = x_pad.reshape(T * Bp, Ep)

    # Pre-transpose + gate-align all weights ONCE in the wrapper.
    flat_args = [x_flat]
    for l, (w_ih, w_hh, b) in enumerate(params["lstm"]):
        in_pad = Ep if l == 0 else Hp
        flat_args.append(_pad_gate_cols(w_ih.T, in_pad, H, Hp))
        flat_args.append(_pad_gate_cols(w_hh.T, Hp, H, Hp))
        flat_args.append(_pad_gate_bias(b, H, Hp))

    h0_pad = jnp.zeros((L, Bp, Hp), jnp.float32).at[:, :B, :H].set(h0)
    c0_pad = jnp.zeros((L, Bp, Hp), jnp.float32).at[:, :B, :H].set(c0)
    dec_w_pad = jnp.zeros((Hp, Np), jnp.float32).at[:H, :n_out].set(params["dec_w"].T)
    dec_b_pad = jnp.full((1, Np), -1e30, jnp.float32).at[0, :n_out].set(params["dec_b"])
    flat_args += [h0_pad, c0_pad, dec_w_pad, dec_b_pad]

    kernel = _make_fused_kernel(T, Bp, Hp, L, aggregation)
    prob_pad, hN_pad, cN_pad = pl.pallas_call(
        kernel,
        out_shape=(
            jax.ShapeDtypeStruct((Bp, Np), jnp.float32),     # prob (padded)
            jax.ShapeDtypeStruct((L, Bp, Hp), jnp.float32),  # final h (padded)
            jax.ShapeDtypeStruct((L, Bp, Hp), jnp.float32),  # final c (padded)
        ),
        scratch_shapes=[pltpu.VMEM((T * Bp, 4 * Hp), jnp.float32)],
        compiler_params=pltpu.CompilerParams(vmem_limit_bytes=32 * 1024 * 1024),
    )(*flat_args)

    # Slice padded results back to the real sizes.
    prob = prob_pad[:B, :n_out]
    hN = hN_pad[:, :B, :H]
    cN = cN_pad[:, :B, :H]
    return prob, (hN, cN)


# ----------------------------------- main -------------------------------------

if __name__ == "__main__":
    args = SimpleNamespace(dropout=0.0, embedding_size=32, rnn_size=32,
                           rnn_layers=2, metafeature_dim=8,
                           aggregation="mean", trainable=True)
    vocab_size = 50
    T, B = 8, 2
    E, H, L, M = args.embedding_size, args.rnn_size, args.rnn_layers, args.metafeature_dim

    key = jax.random.PRNGKey(0)
    keys = jax.random.split(key, 16)

    # "pretrained" embeddings (synthetic, deterministic).
    embedding = 0.1 * jax.random.normal(keys[0], (vocab_size, E), jnp.float32)

    lstm_params = []
    k = 1
    bound = 1.0 / (H ** 0.5)
    for l in range(L):
        in_dim = E if l == 0 else H
        w_ih = jax.random.uniform(keys[k], (4 * H, in_dim), jnp.float32, -bound, bound); k += 1
        w_hh = jax.random.uniform(keys[k], (4 * H, H), jnp.float32, -bound, bound); k += 1
        b_ih = jax.random.uniform(keys[k], (4 * H,), jnp.float32, -bound, bound); k += 1
        b_hh = jax.random.uniform(keys[k], (4 * H,), jnp.float32, -bound, bound); k += 1
        lstm_params.append((w_ih, w_hh, b_ih + b_hh))   # PyTorch layout; padded in wrapper

    mbound = 1.0 / (M ** 0.5)
    meta_w = jax.random.uniform(keys[k], (M, M), jnp.float32, -mbound, mbound); k += 1
    meta_b = jnp.zeros((M,), jnp.float32)
    dec_w = jax.random.uniform(keys[k], (2, H), jnp.float32, -0.1, 0.1); k += 1
    dec_b = jnp.zeros((2,), jnp.float32)

    params = dict(embedding=embedding, lstm=lstm_params,
                  meta_w=meta_w, meta_b=meta_b,   # interface fidelity (dead code in forward)
                  dec_w=dec_w, dec_b=dec_b)

    input_ids = jax.random.randint(keys[k], (T, B), 0, vocab_size, jnp.int32); k += 1
    input_adv_ids = jax.random.randint(keys[k], (T, B), 0, vocab_size, jnp.int32); k += 1
    metafeature = jax.random.normal(keys[k], (M, B), jnp.float32); k += 1

    # init_hidden(batch_size): zeros.
    h0 = jnp.zeros((L, B, H), jnp.float32)
    c0 = jnp.zeros((L, B, H), jnp.float32)

    forward = jax.jit(functools.partial(basic_rnn_forward,
                                        aggregation=args.aggregation))
    prob, hidden1 = forward(params, input_ids, input_adv_ids, metafeature, (h0, c0))
    jax.block_until_ready((prob, hidden1))

    assert prob.shape == (B, 2)
    assert hidden1[0].shape == (L, B, H) and hidden1[1].shape == (L, B, H)
    assert bool(jnp.all(jnp.isfinite(prob)))
    # approx reciprocal in the softmax -> slightly relaxed row-sum tolerance.
    assert bool(jnp.allclose(jnp.sum(prob, axis=-1), 1.0, atol=1e-2))
    print("KERNEL_OK")
</pallas_src>

<mosaic_0001>
module attributes {stable_mosaic.version = 11 : i64} {
  func.func @kernel(%arg0: memref<64x128xf32, #tpu.memory_space<vmem>>, %arg1: memref<128x512xf32, #tpu.memory_space<vmem>>, %arg2: memref<128x512xf32, #tpu.memory_space<vmem>>, %arg3: memref<1x512xf32, #tpu.memory_space<vmem>>, %arg4: memref<128x512xf32, #tpu.memory_space<vmem>>, %arg5: memref<128x512xf32, #tpu.memory_space<vmem>>, %arg6: memref<1x512xf32, #tpu.memory_space<vmem>>, %arg7: memref<2x8x128xf32, #tpu.memory_space<vmem>>, %arg8: memref<2x8x128xf32, #tpu.memory_space<vmem>>, %arg9: memref<128x128xf32, #tpu.memory_space<vmem>>, %arg10: memref<1x128xf32, #tpu.memory_space<vmem>>, %arg11: memref<8x128xf32, #tpu.memory_space<vmem>>, %arg12: memref<2x8x128xf32, #tpu.memory_space<vmem>>, %arg13: memref<2x8x128xf32, #tpu.memory_space<vmem>>, %arg14: memref<64x512xf32, #tpu.memory_space<vmem>>) attributes {dimension_semantics = [], scalar_prefetch = 0 : i64, scratch_operands = 1 : i64, tpu.core_type = #tpu.core_type<tc>} {
    %c0 = arith.constant 0 : index
    %c0_0 = arith.constant 0 : index
    %0 = vector.load %arg0[%c0, %c0_0] : memref<64x128xf32, #tpu.memory_space<vmem>>, vector<64x128xf32>
    %c0_1 = arith.constant 0 : index
    %c0_2 = arith.constant 0 : index
    %1 = vector.load %arg1[%c0_1, %c0_2] : memref<128x512xf32, #tpu.memory_space<vmem>>, vector<128x512xf32>
    %cst = arith.constant dense<0.000000e+00> : vector<64x512xf32>
    %2 = tpu.matmul %0, %1, %cst {dimension_numbers = #tpu.dot_dimension_numbers<[1], [0], [0], [1], [0, 0, 1, 1], [], []>} : vector<64x128xf32>, vector<128x512xf32>, vector<64x512xf32> -> vector<64x512xf32>
    %c0_3 = arith.constant 0 : index
    %c0_4 = arith.constant 0 : index
    %3 = vector.load %arg3[%c0_3, %c0_4] : memref<1x512xf32, #tpu.memory_space<vmem>>, vector<1x512xf32>
    %4 = vector.broadcast %3 : vector<1x512xf32> to vector<64x512xf32>
    %5 = arith.addf %2, %4 : vector<64x512xf32>
    %c0_5 = arith.constant 0 : index
    %c0_6 = arith.constant 0 : index
    %6 = vector.load %arg14[%c0_5, %c0_6] : memref<64x512xf32, #tpu.memory_space<vmem>>, vector<64x512xf32>
    tpu.vector_store %arg14[%c0_5, %c0_6], %5 {strides = array<i32>} : memref<64x512xf32, #tpu.memory_space<vmem>>, vector<64x512xf32>,
    %c0_7 = arith.constant 0 : index
    %c0_8 = arith.constant 0 : index
    %c0_9 = arith.constant 0 : index
    %7 = vector.load %arg7[%c0_7, %c0_8, %c0_9] : memref<2x8x128xf32, #tpu.memory_space<vmem>>, vector<1x8x128xf32>
    %8 = vector.shape_cast %7 : vector<1x8x128xf32> to vector<8x128xf32>
    %c0_10 = arith.constant 0 : index
    %c0_11 = arith.constant 0 : index
    %c0_12 = arith.constant 0 : index
    %9 = vector.load %arg8[%c0_10, %c0_11, %c0_12] : memref<2x8x128xf32, #tpu.memory_space<vmem>>, vector<1x8x128xf32>
    %10 = vector.shape_cast %9 : vector<1x8x128xf32> to vector<8x128xf32>
    %c0_13 = arith.constant 0 : index
    %c0_14 = arith.constant 0 : index
    %11 = vector.load %arg14[%c0_13, %c0_14] : memref<64x512xf32, #tpu.memory_space<vmem>>, vector<8x512xf32>
    %c0_15 = arith.constant 0 : index
    %c0_16 = arith.constant 0 : index
    %12 = vector.load %arg2[%c0_15, %c0_16] : memref<128x512xf32, #tpu.memory_space<vmem>>, vector<128x512xf32>
    %cst_17 = arith.constant dense<0.000000e+00> : vector<8x512xf32>
    %13 = tpu.matmul %8, %12, %cst_17 {dimension_numbers = #tpu.dot_dimension_numbers<[1], [0], [0], [1], [0, 0, 1, 1], [], []>} : vector<8x128xf32>, vector<128x512xf32>, vector<8x512xf32> -> vector<8x512xf32>
    %14 = arith.addf %11, %13 : vector<8x512xf32>
    %15 = vector.extract_strided_slice %14 {offsets = [0, 0], sizes = [8, 128], strides = [1, 1]} : vector<8x512xf32> to vector<8x128xf32>
    %16 = arith.negf %15 : vector<8x128xf32>
    %17 = math.exp %16 : vector<8x128xf32>
    %cst_18 = arith.constant 1.000000e+00 : f32
    %18 = vector.broadcast %cst_18 : f32 to vector<8x128xf32>
    %19 = arith.addf %18, %17 : vector<8x128xf32>
    %20 = arith.divf %18, %19 : vector<8x128xf32>
    %21 = vector.extract_strided_slice %14 {offsets = [0, 128], sizes = [8, 128], strides = [1, 1]} : vector<8x512xf32> to vector<8x128xf32>
    %22 = arith.negf %21 : vector<8x128xf32>
    %23 = math.exp %22 : vector<8x128xf32>
    %cst_19 = arith.constant 1.000000e+00 : f32
    %24 = vector.broadcast %cst_19 : f32 to vector<8x128xf32>
    %25 = arith.addf %24, %23 : vector<8x128xf32>
    %26 = arith.divf %24, %25 : vector<8x128xf32>
    %27 = vector.extract_strided_slice %14 {offsets = [0, 256], sizes = [8, 128], strides = [1, 1]} : vector<8x512xf32> to vector<8x128xf32>
    %28 = math.tanh %27 : vector<8x128xf32>
    %29 = vector.extract_strided_slice %14 {offsets = [0, 384], sizes = [8, 128], strides = [1, 1]} : vector<8x512xf32> to vector<8x128xf32>
    %30 = arith.negf %29 : vector<8x128xf32>
    %31 = math.exp %30 : vector<8x128xf32>
    %cst_20 = arith.constant 1.000000e+00 : f32
    %32 = vector.broadcast %cst_20 : f32 to vector<8x128xf32>
    %33 = arith.addf %32, %31 : vector<8x128xf32>
    %34 = arith.divf %32, %33 : vector<8x128xf32>
    %35 = arith.mulf %26, %10 : vector<8x128xf32>
    %36 = arith.mulf %20, %28 : vector<8x128xf32>
    %37 = arith.addf %35, %36 : vector<8x128xf32>
    %38 = math.tanh %37 : vector<8x128xf32>
    %39 = arith.mulf %34, %38 : vector<8x128xf32>
    %c8 = arith.constant 8 : index
    %c0_21 = arith.constant 0 : index
    %40 = vector.load %arg14[%c8, %c0_21] : memref<64x512xf32, #tpu.memory_space<vmem>>, vector<8x512xf32>
    %c0_22 = arith.constant 0 : index
    %c0_23 = arith.constant 0 : index
    %41 = vector.load %arg2[%c0_22, %c0_23] : memref<128x512xf32, #tpu.memory_space<vmem>>, vector<128x512xf32>
    %cst_24 = arith.constant dense<0.000000e+00> : vector<8x512xf32>
    %42 = tpu.matmul %39, %41, %cst_24 {dimension_numbers = #tpu.dot_dimension_numbers<[1], [0], [0], [1], [0, 0, 1, 1], [], []>} : vector<8x128xf32>, vector<128x512xf32>, vector<8x512xf32> -> vector<8x512xf32>
    %43 = arith.addf %40, %42 : vector<8x512xf32>
    %44 = vector.extract_strided_slice %43 {offsets = [0, 0], sizes = [8, 128], strides = [1, 1]} : vector<8x512xf32> to vector<8x128xf32>
    %45 = arith.negf %44 : vector<8x128xf32>
    %46 = math.exp %45 : vector<8x128xf32>
    %cst_25 = arith.constant 1.000000e+00 : f32
    %47 = vector.broadcast %cst_25 : f32 to vector<8x128xf32>
    %48 = arith.addf %47, %46 : vector<8x128xf32>
    %49 = arith.divf %47, %48 : vector<8x128xf32>
    %50 = vector.extract_strided_slice %43 {offsets = [0, 128], sizes = [8, 128], strides = [1, 1]} : vector<8x512xf32> to vector<8x128xf32>
    %51 = arith.negf %50 : vector<8x128xf32>
    %52 = math.exp %51 : vector<8x128xf32>
    %cst_26 = arith.constant 1.000000e+00 : f32
    %53 = vector.broadcast %cst_26 : f32 to vector<8x128xf32>
    %54 = arith.addf %53, %52 : vector<8x128xf32>
    %55 = arith.divf %53, %54 : vector<8x128xf32>
    %56 = vector.extract_strided_slice %43 {offsets = [0, 256], sizes = [8, 128], strides = [1, 1]} : vector<8x512xf32> to vector<8x128xf32>
    %57 = math.tanh %56 : vector<8x128xf32>
    %58 = vector.extract_strided_slice %43 {offsets = [0, 384], sizes = [8, 128], strides = [1, 1]} : vector<8x512xf32> to vector<8x128xf32>
    %59 = arith.negf %58 : vector<8x128xf32>
    %60 = math.exp %59 : vector<8x128xf32>
    %cst_27 = arith.constant 1.000000e+00 : f32
    %61 = vector.broadcast %cst_27 : f32 to vector<8x128xf32>
    %62 = arith.addf %61, %60 : vector<8x128xf32>
    %63 = arith.divf %61, %62 : vector<8x128xf32>
    %64 = arith.mulf %55, %37 : vector<8x128xf32>
    %65 = arith.mulf %49, %57 : vector<8x128xf32>
    %66 = arith.addf %64, %65 : vector<8x128xf32>
    %67 = math.tanh %66 : vector<8x128xf32>
    %68 = arith.mulf %63, %67 : vector<8x128xf32>
    %c16 = arith.constant 16 : index
    %c0_28 = arith.constant 0 : index
    %69 = vector.load %arg14[%c16, %c0_28] : memref<64x512xf32, #tpu.memory_space<vmem>>, vector<8x512xf32>
    %c0_29 = arith.constant 0 : index
    %c0_30 = arith.constant 0 : index
    %70 = vector.load %arg2[%c0_29, %c0_30] : memref<128x512xf32, #tpu.memory_space<vmem>>, vector<128x512xf32>
    %cst_31 = arith.constant dense<0.000000e+00> : vector<8x512xf32>
    %71 = tpu.matmul %68, %70, %cst_31 {dimension_numbers = #tpu.dot_dimension_numbers<[1], [0], [0], [1], [0, 0, 1, 1], [], []>} : vector<8x128xf32>, vector<128x512xf32>, vector<8x512xf32> -> vector<8x512xf32>
    %72 = arith.addf %69, %71 : vector<8x512xf32>
    %73 = vector.extract_strided_slice %72 {offsets = [0, 0], sizes = [8, 128], strides = [1, 1]} : vector<8x512xf32> to vector<8x128xf32>
    %74 = arith.negf %73 : vector<8x128xf32>
    %75 = math.exp %74 : vector<8x128xf32>
    %cst_32 = arith.constant 1.000000e+00 : f32
    %76 = vector.broadcast %cst_32 : f32 to vector<8x128xf32>
    %77 = arith.addf %76, %75 : vector<8x128xf32>
    %78 = arith.divf %76, %77 : vector<8x128xf32>
    %79 = vector.extract_strided_slice %72 {offsets = [0, 128], sizes = [8, 128], strides = [1, 1]} : vector<8x512xf32> to vector<8x128xf32>
    %80 = arith.negf %79 : vector<8x128xf32>
    %81 = math.exp %80 : vector<8x128xf32>
    %cst_33 = arith.constant 1.000000e+00 : f32
    %82 = vector.broadcast %cst_33 : f32 to vector<8x128xf32>
    %83 = arith.addf %82, %81 : vector<8x128xf32>
    %84 = arith.divf %82, %83 : vector<8x128xf32>
    %85 = vector.extract_strided_slice %72 {offsets = [0, 256], sizes = [8, 128], strides = [1, 1]} : vector<8x512xf32> to vector<8x128xf32>
    %86 = math.tanh %85 : vector<8x128xf32>
    %87 = vector.extract_strided_slice %72 {offsets = [0, 384], sizes = [8, 128], strides = [1, 1]} : vector<8x512xf32> to vector<8x128xf32>
    %88 = arith.negf %87 : vector<8x128xf32>
    %89 = math.exp %88 : vector<8x128xf32>
    %cst_34 = arith.constant 1.000000e+00 : f32
    %90 = vector.broadcast %cst_34 : f32 to vector<8x128xf32>
    %91 = arith.addf %90, %89 : vector<8x128xf32>
    %92 = arith.divf %90, %91 : vector<8x128xf32>
    %93 = arith.mulf %84, %66 : vector<8x128xf32>
    %94 = arith.mulf %78, %86 : vector<8x128xf32>
    %95 = arith.addf %93, %94 : vector<8x128xf32>
    %96 = math.tanh %95 : vector<8x128xf32>
    %97 = arith.mulf %92, %96 : vector<8x128xf32>
    %c24 = arith.constant 24 : index
    %c0_35 = arith.constant 0 : index
    %98 = vector.load %arg14[%c24, %c0_35] : memref<64x512xf32, #tpu.memory_space<vmem>>, vector<8x512xf32>
    %c0_36 = arith.constant 0 : index
    %c0_37 = arith.constant 0 : index
    %99 = vector.load %arg2[%c0_36, %c0_37] : memref<128x512xf32, #tpu.memory_space<vmem>>, vector<128x512xf32>
    %cst_38 = arith.constant dense<0.000000e+00> : vector<8x512xf32>
    %100 = tpu.matmul %97, %99, %cst_38 {dimension_numbers = #tpu.dot_dimension_numbers<[1], [0], [0], [1], [0, 0, 1, 1], [], []>} : vector<8x128xf32>, vector<128x512xf32>, vector<8x512xf32> -> vector<8x512xf32>
    %101 = arith.addf %98, %100 : vector<8x512xf32>
    %102 = vector.extract_strided_slice %101 {offsets = [0, 0], sizes = [8, 128], strides = [1, 1]} : vector<8x512xf32> to vector<8x128xf32>
    %103 = arith.negf %102 : vector<8x128xf32>
    %104 = math.exp %103 : vector<8x128xf32>
    %cst_39 = arith.constant 1.000000e+00 : f32
    %105 = vector.broadcast %cst_39 : f32 to vector<8x128xf32>
    %106 = arith.addf %105, %104 : vector<8x128xf32>
    %107 = arith.divf %105, %106 : vector<8x128xf32>
    %108 = vector.extract_strided_slice %101 {offsets = [0, 128], sizes = [8, 128], strides = [1, 1]} : vector<8x512xf32> to vector<8x128xf32>
    %109 = arith.negf %108 : vector<8x128xf32>
    %110 = math.exp %109 : vector<8x128xf32>
    %cst_40 = arith.constant 1.000000e+00 : f32
    %111 = vector.broadcast %cst_40 : f32 to vector<8x128xf32>
    %112 = arith.addf %111, %110 : vector<8x128xf32>
    %113 = arith.divf %111, %112 : vector<8x128xf32>
    %114 = vector.extract_strided_slice %101 {offsets = [0, 256], sizes = [8, 128], strides = [1, 1]} : vector<8x512xf32> to vector<8x128xf32>
    %115 = math.tanh %114 : vector<8x128xf32>
    %116 = vector.extract_strided_slice %101 {offsets = [0, 384], sizes = [8, 128], strides = [1, 1]} : vector<8x512xf32> to vector<8x128xf32>
    %117 = arith.negf %116 : vector<8x128xf32>
    %118 = math.exp %117 : vector<8x128xf32>
    %cst_41 = arith.constant 1.000000e+00 : f32
    %119 = vector.broadcast %cst_41 : f32 to vector<8x128xf32>
    %120 = arith.addf %119, %118 : vector<8x128xf32>
    %121 = arith.divf %119, %120 : vector<8x128xf32>
    %122 = arith.mulf %113, %95 : vector<8x128xf32>
    %123 = arith.mulf %107, %115 : vector<8x128xf32>
    %124 = arith.addf %122, %123 : vector<8x128xf32>
    %125 = math.tanh %124 : vector<8x128xf32>
    %126 = arith.mulf %121, %125 : vector<8x128xf32>
    %c32 = arith.constant 32 : index
    %c0_42 = arith.constant 0 : index
    %127 = vector.load %arg14[%c32, %c0_42] : memref<64x512xf32, #tpu.memory_space<vmem>>, vector<8x512xf32>
    %c0_43 = arith.constant 0 : index
    %c0_44 = arith.constant 0 : index
    %128 = vector.load %arg2[%c0_43, %c0_44] : memref<128x512xf32, #tpu.memory_space<vmem>>, vector<128x512xf32>
    %cst_45 = arith.constant dense<0.000000e+00> : vector<8x512xf32>
    %129 = tpu.matmul %126, %128, %cst_45 {dimension_numbers = #tpu.dot_dimension_numbers<[1], [0], [0], [1], [0, 0, 1, 1], [], []>} : vector<8x128xf32>, vector<128x512xf32>, vector<8x512xf32> -> vector<8x512xf32>
    %130 = arith.addf %127, %129 : vector<8x512xf32>
    %131 = vector.extract_strided_slice %130 {offsets = [0, 0], sizes = [8, 128], strides = [1, 1]} : vector<8x512xf32> to vector<8x128xf32>
    %132 = arith.negf %131 : vector<8x128xf32>
    %133 = math.exp %132 : vector<8x128xf32>
    %cst_46 = arith.constant 1.000000e+00 : f32
    %134 = vector.broadcast %cst_46 : f32 to vector<8x128xf32>
    %135 = arith.addf %134, %133 : vector<8x128xf32>
    %136 = arith.divf %134, %135 : vector<8x128xf32>
    %137 = vector.extract_strided_slice %130 {offsets = [0, 128], sizes = [8, 128], strides = [1, 1]} : vector<8x512xf32> to vector<8x128xf32>
    %138 = arith.negf %137 : vector<8x128xf32>
    %139 = math.exp %138 : vector<8x128xf32>
    %cst_47 = arith.constant 1.000000e+00 : f32
    %140 = vector.broadcast %cst_47 : f32 to vector<8x128xf32>
    %141 = arith.addf %140, %139 : vector<8x128xf32>
    %142 = arith.divf %140, %141 : vector<8x128xf32>
    %143 = vector.extract_strided_slice %130 {offsets = [0, 256], sizes = [8, 128], strides = [1, 1]} : vector<8x512xf32> to vector<8x128xf32>
    %144 = math.tanh %143 : vector<8x128xf32>
    %145 = vector.extract_strided_slice %130 {offsets = [0, 384], sizes = [8, 128], strides = [1, 1]} : vector<8x512xf32> to vector<8x128xf32>
    %146 = arith.negf %145 : vector<8x128xf32>
    %147 = math.exp %146 : vector<8x128xf32>
    %cst_48 = arith.constant 1.000000e+00 : f32
    %148 = vector.broadcast %cst_48 : f32 to vector<8x128xf32>
    %149 = arith.addf %148, %147 : vector<8x128xf32>
    %150 = arith.divf %148, %149 : vector<8x128xf32>
    %151 = arith.mulf %142, %124 : vector<8x128xf32>
    %152 = arith.mulf %136, %144 : vector<8x128xf32>
    %153 = arith.addf %151, %152 : vector<8x128xf32>
    %154 = math.tanh %153 : vector<8x128xf32>
    %155 = arith.mulf %150, %154 : vector<8x128xf32>
    %c40 = arith.constant 40 : index
    %c0_49 = arith.constant 0 : index
    %156 = vector.load %arg14[%c40, %c0_49] : memref<64x512xf32, #tpu.memory_space<vmem>>, vector<8x512xf32>
    %c0_50 = arith.constant 0 : index
    %c0_51 = arith.constant 0 : index
    %157 = vector.load %arg2[%c0_50, %c0_51] : memref<128x512xf32, #tpu.memory_space<vmem>>, vector<128x512xf32>
    %cst_52 = arith.constant dense<0.000000e+00> : vector<8x512xf32>
    %158 = tpu.matmul %155, %157, %cst_52 {dimension_numbers = #tpu.dot_dimension_numbers<[1], [0], [0], [1], [0, 0, 1, 1], [], []>} : vector<8x128xf32>, vector<128x512xf32>, vector<8x512xf32> -> vector<8x512xf32>
    %159 = arith.addf %156, %158 : vector<8x512xf32>
    %160 = vector.extract_strided_slice %159 {offsets = [0, 0], sizes = [8, 128], strides = [1, 1]} : vector<8x512xf32> to vector<8x128xf32>
    %161 = arith.negf %160 : vector<8x128xf32>
    %162 = math.exp %161 : vector<8x128xf32>
    %cst_53 = arith.constant 1.000000e+00 : f32
    %163 = vector.broadcast %cst_53 : f32 to vector<8x128xf32>
    %164 = arith.addf %163, %162 : vector<8x128xf32>
    %165 = arith.divf %163, %164 : vector<8x128xf32>
    %166 = vector.extract_strided_slice %159 {offsets = [0, 128], sizes = [8, 128], strides = [1, 1]} : vector<8x512xf32> to vector<8x128xf32>
    %167 = arith.negf %166 : vector<8x128xf32>
    %168 = math.exp %167 : vector<8x128xf32>
    %cst_54 = arith.constant 1.000000e+00 : f32
    %169 = vector.broadcast %cst_54 : f32 to vector<8x128xf32>
    %170 = arith.addf %169, %168 : vector<8x128xf32>
    %171 = arith.divf %169, %170 : vector<8x128xf32>
    %172 = vector.extract_strided_slice %159 {offsets = [0, 256], sizes = [8, 128], strides = [1, 1]} : vector<8x512xf32> to vector<8x128xf32>
    %173 = math.tanh %172 : vector<8x128xf32>
    %174 = vector.extract_strided_slice %159 {offsets = [0, 384], sizes = [8, 128], strides = [1, 1]} : vector<8x512xf32> to vector<8x128xf32>
    %175 = arith.negf %174 : vector<8x128xf32>
    %176 = math.exp %175 : vector<8x128xf32>
    %cst_55 = arith.constant 1.000000e+00 : f32
    %177 = vector.broadcast %cst_55 : f32 to vector<8x128xf32>
    %178 = arith.addf %177, %176 : vector<8x128xf32>
    %179 = arith.divf %177, %178 : vector<8x128xf32>
    %180 = arith.mulf %171, %153 : vector<8x128xf32>
    %181 = arith.mulf %165, %173 : vector<8x128xf32>
    %182 = arith.addf %180, %181 : vector<8x128xf32>
    %183 = math.tanh %182 : vector<8x128xf32>
    %184 = arith.mulf %179, %183 : vector<8x128xf32>
    %c48 = arith.constant 48 : index
    %c0_56 = arith.constant 0 : index
    %185 = vector.load %arg14[%c48, %c0_56] : memref<64x512xf32, #tpu.memory_space<vmem>>, vector<8x512xf32>
    %c0_57 = arith.constant 0 : index
    %c0_58 = arith.constant 0 : index
    %186 = vector.load %arg2[%c0_57, %c0_58] : memref<128x512xf32, #tpu.memory_space<vmem>>, vector<128x512xf32>
    %cst_59 = arith.constant dense<0.000000e+00> : vector<8x512xf32>
    %187 = tpu.matmul %184, %186, %cst_59 {dimension_numbers = #tpu.dot_dimension_numbers<[1], [0], [0], [1], [0, 0, 1, 1], [], []>} : vector<8x128xf32>, vector<128x512xf32>, vector<8x512xf32> -> vector<8x512xf32>
    %188 = arith.addf %185, %187 : vector<8x512xf32>
    %189 = vector.extract_strided_slice %188 {offsets = [0, 0], sizes = [8, 128], strides = [1, 1]} : vector<8x512xf32> to vector<8x128xf32>
    %190 = arith.negf %189 : vector<8x128xf32>
    %191 = math.exp %190 : vector<8x128xf32>
    %cst_60 = arith.constant 1.000000e+00 : f32
    %192 = vector.broadcast %cst_60 : f32 to vector<8x128xf32>
    %193 = arith.addf %192, %191 : vector<8x128xf32>
    %194 = arith.divf %192, %193 : vector<8x128xf32>
    %195 = vector.extract_strided_slice %188 {offsets = [0, 128], sizes = [8, 128], strides = [1, 1]} : vector<8x512xf32> to vector<8x128xf32>
    %196 = arith.negf %195 : vector<8x128xf32>
    %197 = math.exp %196 : vector<8x128xf32>
    %cst_61 = arith.constant 1.000000e+00 : f32
    %198 = vector.broadcast %cst_61 : f32 to vector<8x128xf32>
    %199 = arith.addf %198, %197 : vector<8x128xf32>
    %200 = arith.divf %198, %199 : vector<8x128xf32>
    %201 = vector.extract_strided_slice %188 {offsets = [0, 256], sizes = [8, 128], strides = [1, 1]} : vector<8x512xf32> to vector<8x128xf32>
    %202 = math.tanh %201 : vector<8x128xf32>
    %203 = vector.extract_strided_slice %188 {offsets = [0, 384], sizes = [8, 128], strides = [1, 1]} : vector<8x512xf32> to vector<8x128xf32>
    %204 = arith.negf %203 : vector<8x128xf32>
    %205 = math.exp %204 : vector<8x128xf32>
    %cst_62 = arith.constant 1.000000e+00 : f32
    %206 = vector.broadcast %cst_62 : f32 to vector<8x128xf32>
    %207 = arith.addf %206, %205 : vector<8x128xf32>
    %208 = arith.divf %206, %207 : vector<8x128xf32>
    %209 = arith.mulf %200, %182 : vector<8x128xf32>
    %210 = arith.mulf %194, %202 : vector<8x128xf32>
    %211 = arith.addf %209, %210 : vector<8x128xf32>
    %212 = math.tanh %211 : vector<8x128xf32>
    %213 = arith.mulf %208, %212 : vector<8x128xf32>
    %c56 = arith.constant 56 : index
    %c0_63 = arith.constant 0 : index
    %214 = vector.load %arg14[%c56, %c0_63] : memref<64x512xf32, #tpu.memory_space<vmem>>, vector<8x512xf32>
    %c0_64 = arith.constant 0 : index
    %c0_65 = arith.constant 0 : index
    %215 = vector.load %arg2[%c0_64, %c0_65] : memref<128x512xf32, #tpu.memory_space<vmem>>, vector<128x512xf32>
    %cst_66 = arith.constant dense<0.000000e+00> : vector<8x512xf32>
    %216 = tpu.matmul %213, %215, %cst_66 {dimension_numbers = #tpu.dot_dimension_numbers<[1], [0], [0], [1], [0, 0, 1, 1], [], []>} : vector<8x128xf32>, vector<128x512xf32>, vector<8x512xf32> -> vector<8x512xf32>
    %217 = arith.addf %214, %216 : vector<8x512xf32>
    %218 = vector.extract_strided_slice %217 {offsets = [0, 0], sizes = [8, 128], strides = [1, 1]} : vector<8x512xf32> to vector<8x128xf32>
    %219 = arith.negf %218 : vector<8x128xf32>
    %220 = math.exp %219 : vector<8x128xf32>
    %cst_67 = arith.constant 1.000000e+00 : f32
    %221 = vector.broadcast %cst_67 : f32 to vector<8x128xf32>
    %222 = arith.addf %221, %220 : vector<8x128xf32>
    %223 = arith.divf %221, %222 : vector<8x128xf32>
    %224 = vector.extract_strided_slice %217 {offsets = [0, 128], sizes = [8, 128], strides = [1, 1]} : vector<8x512xf32> to vector<8x128xf32>
    %225 = arith.negf %224 : vector<8x128xf32>
    %226 = math.exp %225 : vector<8x128xf32>
    %cst_68 = arith.constant 1.000000e+00 : f32
    %227 = vector.broadcast %cst_68 : f32 to vector<8x128xf32>
    %228 = arith.addf %227, %226 : vector<8x128xf32>
    %229 = arith.divf %227, %228 : vector<8x128xf32>
    %230 = vector.extract_strided_slice %217 {offsets = [0, 256], sizes = [8, 128], strides = [1, 1]} : vector<8x512xf32> to vector<8x128xf32>
    %231 = math.tanh %230 : vector<8x128xf32>
    %232 = vector.extract_strided_slice %217 {offsets = [0, 384], sizes = [8, 128], strides = [1, 1]} : vector<8x512xf32> to vector<8x128xf32>
    %233 = arith.negf %232 : vector<8x128xf32>
    %234 = math.exp %233 : vector<8x128xf32>
    %cst_69 = arith.constant 1.000000e+00 : f32
    %235 = vector.broadcast %cst_69 : f32 to vector<8x128xf32>
    %236 = arith.addf %235, %234 : vector<8x128xf32>
    %237 = arith.divf %235, %236 : vector<8x128xf32>
    %238 = arith.mulf %229, %211 : vector<8x128xf32>
    %239 = arith.mulf %223, %231 : vector<8x128xf32>
    %240 = arith.addf %238, %239 : vector<8x128xf32>
    %241 = math.tanh %240 : vector<8x128xf32>
    %242 = arith.mulf %237, %241 : vector<8x128xf32>
    %c0_70 = arith.constant 0 : index
    %c0_71 = arith.constant 0 : index
    %c0_72 = arith.constant 0 : index
    %243 = vector.load %arg12[%c0_70, %c0_71, %c0_72] : memref<2x8x128xf32, #tpu.memory_space<vmem>>, vector<1x8x128xf32>
    %244 = vector.shape_cast %243 : vector<1x8x128xf32> to vector<8x128xf32>
    %245 = vector.shape_cast %242 : vector<8x128xf32> to vector<1x8x128xf32>
    tpu.vector_store %arg12[%c0_70, %c0_71, %c0_72], %245 {strides = array<i32>} : memref<2x8x128xf32, #tpu.memory_space<vmem>>, vector<1x8x128xf32>,
    %c0_73 = arith.constant 0 : index
    %c0_74 = arith.constant 0 : index
    %c0_75 = arith.constant 0 : index
    %246 = vector.load %arg13[%c0_73, %c0_74, %c0_75] : memref<2x8x128xf32, #tpu.memory_space<vmem>>, vector<1x8x128xf32>
    %247 = vector.shape_cast %246 : vector<1x8x128xf32> to vector<8x128xf32>
    %248 = vector.shape_cast %240 : vector<8x128xf32> to vector<1x8x128xf32>
    tpu.vector_store %arg13[%c0_73, %c0_74, %c0_75], %248 {strides = array<i32>} : memref<2x8x128xf32, #tpu.memory_space<vmem>>, vector<1x8x128xf32>,
    %249 = tpu.concatenate %39, %68, %97, %126, %155, %184, %213, %242 in 0 : vector<8x128xf32>, vector<8x128xf32>, vector<8x128xf32>, vector<8x128xf32>, vector<8x128xf32>, vector<8x128xf32>, vector<8x128xf32>, vector<8x128xf32> -> vector<64x128xf32>
    %c0_76 = arith.constant 0 : index
    %c0_77 = arith.constant 0 : index
    %250 = vector.load %arg4[%c0_76, %c0_77] : memref<128x512xf32, #tpu.memory_space<vmem>>, vector<128x512xf32>
    %cst_78 = arith.constant dense<0.000000e+00> : vector<64x512xf32>
    %251 = tpu.matmul %249, %250, %cst_78 {dimension_numbers = #tpu.dot_dimension_numbers<[1], [0], [0], [1], [0, 0, 1, 1], [], []>} : vector<64x128xf32>, vector<128x512xf32>, vector<64x512xf32> -> vector<64x512xf32>
    %c0_79 = arith.constant 0 : index
    %c0_80 = arith.constant 0 : index
    %252 = vector.load %arg6[%c0_79, %c0_80] : memref<1x512xf32, #tpu.memory_space<vmem>>, vector<1x512xf32>
    %253 = vector.broadcast %252 : vector<1x512xf32> to vector<64x512xf32>
    %254 = arith.addf %251, %253 : vector<64x512xf32>
    %c0_81 = arith.constant 0 : index
    %c0_82 = arith.constant 0 : index
    %255 = vector.load %arg14[%c0_81, %c0_82] : memref<64x512xf32, #tpu.memory_space<vmem>>, vector<64x512xf32>
    tpu.vector_store %arg14[%c0_81, %c0_82], %254 {strides = array<i32>} : memref<64x512xf32, #tpu.memory_space<vmem>>, vector<64x512xf32>,
    %c1 = arith.constant 1 : index
    %c0_83 = arith.constant 0 : index
    %c0_84 = arith.constant 0 : index
    %256 = vector.load %arg7[%c1, %c0_83, %c0_84] : memref<2x8x128xf32, #tpu.memory_space<vmem>>, vector<1x8x128xf32>
    %257 = vector.shape_cast %256 : vector<1x8x128xf32> to vector<8x128xf32>
    %c1_85 = arith.constant 1 : index
    %c0_86 = arith.constant 0 : index
    %c0_87 = arith.constant 0 : index
    %258 = vector.load %arg8[%c1_85, %c0_86, %c0_87] : memref<2x8x128xf32, #tpu.memory_space<vmem>>, vector<1x8x128xf32>
    %259 = vector.shape_cast %258 : vector<1x8x128xf32> to vector<8x128xf32>
    %cst_88 = arith.constant 0.000000e+00 : f32
    %260 = vector.broadcast %cst_88 : f32 to vector<8x128xf32>
    %c0_89 = arith.constant 0 : index
    %c0_90 = arith.constant 0 : index
    %261 = vector.load %arg14[%c0_89, %c0_90] : memref<64x512xf32, #tpu.memory_space<vmem>>, vector<8x512xf32>
    %c0_91 = arith.constant 0 : index
    %c0_92 = arith.constant 0 : index
    %262 = vector.load %arg5[%c0_91, %c0_92] : memref<128x512xf32, #tpu.memory_space<vmem>>, vector<128x512xf32>
    %cst_93 = arith.constant dense<0.000000e+00> : vector<8x512xf32>
    %263 = tpu.matmul %257, %262, %cst_93 {dimension_numbers = #tpu.dot_dimension_numbers<[1], [0], [0], [1], [0, 0, 1, 1], [], []>} : vector<8x128xf32>, vector<128x512xf32>, vector<8x512xf32> -> vector<8x512xf32>
    %264 = arith.addf %261, %263 : vector<8x512xf32>
    %265 = vector.extract_strided_slice %264 {offsets = [0, 0], sizes = [8, 128], strides = [1, 1]} : vector<8x512xf32> to vector<8x128xf32>
    %266 = arith.negf %265 : vector<8x128xf32>
    %267 = math.exp %266 : vector<8x128xf32>
    %cst_94 = arith.constant 1.000000e+00 : f32
    %268 = vector.broadcast %cst_94 : f32 to vector<8x128xf32>
    %269 = arith.addf %268, %267 : vector<8x128xf32>
    %270 = arith.divf %268, %269 : vector<8x128xf32>
    %271 = vector.extract_strided_slice %264 {offsets = [0, 128], sizes = [8, 128], strides = [1, 1]} : vector<8x512xf32> to vector<8x128xf32>
    %272 = arith.negf %271 : vector<8x128xf32>
    %273 = math.exp %272 : vector<8x128xf32>
    %cst_95 = arith.constant 1.000000e+00 : f32
    %274 = vector.broadcast %cst_95 : f32 to vector<8x128xf32>
    %275 = arith.addf %274, %273 : vector<8x128xf32>
    %276 = arith.divf %274, %275 : vector<8x128xf32>
    %277 = vector.extract_strided_slice %264 {offsets = [0, 256], sizes = [8, 128], strides = [1, 1]} : vector<8x512xf32> to vector<8x128xf32>
    %278 = math.tanh %277 : vector<8x128xf32>
    %279 = vector.extract_strided_slice %264 {offsets = [0, 384], sizes = [8, 128], strides = [1, 1]} : vector<8x512xf32> to vector<8x128xf32>
    %280 = arith.negf %279 : vector<8x128xf32>
    %281 = math.exp %280 : vector<8x128xf32>
    %cst_96 = arith.constant 1.000000e+00 : f32
    %282 = vector.broadcast %cst_96 : f32 to vector<8x128xf32>
    %283 = arith.addf %282, %281 : vector<8x128xf32>
    %284 = arith.divf %282, %283 : vector<8x128xf32>
    %285 = arith.mulf %276, %259 : vector<8x128xf32>
    %286 = arith.mulf %270, %278 : vector<8x128xf32>
    %287 = arith.addf %285, %286 : vector<8x128xf32>
    %288 = math.tanh %287 : vector<8x128xf32>
    %289 = arith.mulf %284, %288 : vector<8x128xf32>
    %290 = arith.addf %260, %289 : vector<8x128xf32>
    %c8_97 = arith.constant 8 : index
    %c0_98 = arith.constant 0 : index
    %291 = vector.load %arg14[%c8_97, %c0_98] : memref<64x512xf32, #tpu.memory_space<vmem>>, vector<8x512xf32>
    %c0_99 = arith.constant 0 : index
    %c0_100 = arith.constant 0 : index
    %292 = vector.load %arg5[%c0_99, %c0_100] : memref<128x512xf32, #tpu.memory_space<vmem>>, vector<128x512xf32>
    %cst_101 = arith.constant dense<0.000000e+00> : vector<8x512xf32>
    %293 = tpu.matmul %289, %292, %cst_101 {dimension_numbers = #tpu.dot_dimension_numbers<[1], [0], [0], [1], [0, 0, 1, 1], [], []>} : vector<8x128xf32>, vector<128x512xf32>, vector<8x512xf32> -> vector<8x512xf32>
    %294 = arith.addf %291, %293 : vector<8x512xf32>
    %295 = vector.extract_strided_slice %294 {offsets = [0, 0], sizes = [8, 128], strides = [1, 1]} : vector<8x512xf32> to vector<8x128xf32>
    %296 = arith.negf %295 : vector<8x128xf32>
    %297 = math.exp %296 : vector<8x128xf32>
    %cst_102 = arith.constant 1.000000e+00 : f32
    %298 = vector.broadcast %cst_102 : f32 to vector<8x128xf32>
    %299 = arith.addf %298, %297 : vector<8x128xf32>
    %300 = arith.divf %298, %299 : vector<8x128xf32>
    %301 = vector.extract_strided_slice %294 {offsets = [0, 128], sizes = [8, 128], strides = [1, 1]} : vector<8x512xf32> to vector<8x128xf32>
    %302 = arith.negf %301 : vector<8x128xf32>
    %303 = math.exp %302 : vector<8x128xf32>
    %cst_103 = arith.constant 1.000000e+00 : f32
    %304 = vector.broadcast %cst_103 : f32 to vector<8x128xf32>
    %305 = arith.addf %304, %303 : vector<8x128xf32>
    %306 = arith.divf %304, %305 : vector<8x128xf32>
    %307 = vector.extract_strided_slice %294 {offsets = [0, 256], sizes = [8, 128], strides = [1, 1]} : vector<8x512xf32> to vector<8x128xf32>
    %308 = math.tanh %307 : vector<8x128xf32>
    %309 = vector.extract_strided_slice %294 {offsets = [0, 384], sizes = [8, 128], strides = [1, 1]} : vector<8x512xf32> to vector<8x128xf32>
    %310 = arith.negf %309 : vector<8x128xf32>
    %311 = math.exp %310 : vector<8x128xf32>
    %cst_104 = arith.constant 1.000000e+00 : f32
    %312 = vector.broadcast %cst_104 : f32 to vector<8x128xf32>
    %313 = arith.addf %312, %311 : vector<8x128xf32>
    %314 = arith.divf %312, %313 : vector<8x128xf32>
    %315 = arith.mulf %306, %287 : vector<8x128xf32>
    %316 = arith.mulf %300, %308 : vector<8x128xf32>
    %317 = arith.addf %315, %316 : vector<8x128xf32>
    %318 = math.tanh %317 : vector<8x128xf32>
    %319 = arith.mulf %314, %318 : vector<8x128xf32>
    %320 = arith.addf %290, %319 : vector<8x128xf32>
    %c16_105 = arith.constant 16 : index
    %c0_106 = arith.constant 0 : index
    %321 = vector.load %arg14[%c16_105, %c0_106] : memref<64x512xf32, #tpu.memory_space<vmem>>, vector<8x512xf32>
    %c0_107 = arith.constant 0 : index
    %c0_108 = arith.constant 0 : index
    %322 = vector.load %arg5[%c0_107, %c0_108] : memref<128x512xf32, #tpu.memory_space<vmem>>, vector<128x512xf32>
    %cst_109 = arith.constant dense<0.000000e+00> : vector<8x512xf32>
    %323 = tpu.matmul %319, %322, %cst_109 {dimension_numbers = #tpu.dot_dimension_numbers<[1], [0], [0], [1], [0, 0, 1, 1], [], []>} : vector<8x128xf32>, vector<128x512xf32>, vector<8x512xf32> -> vector<8x512xf32>
    %324 = arith.addf %321, %323 : vector<8x512xf32>
    %325 = vector.extract_strided_slice %324 {offsets = [0, 0], sizes = [8, 128], strides = [1, 1]} : vector<8x512xf32> to vector<8x128xf32>
    %326 = arith.negf %325 : vector<8x128xf32>
    %327 = math.exp %326 : vector<8x128xf32>
    %cst_110 = arith.constant 1.000000e+00 : f32
    %328 = vector.broadcast %cst_110 : f32 to vector<8x128xf32>
    %329 = arith.addf %328, %327 : vector<8x128xf32>
    %330 = arith.divf %328, %329 : vector<8x128xf32>
    %331 = vector.extract_strided_slice %324 {offsets = [0, 128], sizes = [8, 128], strides = [1, 1]} : vector<8x512xf32> to vector<8x128xf32>
    %332 = arith.negf %331 : vector<8x128xf32>
    %333 = math.exp %332 : vector<8x128xf32>
    %cst_111 = arith.constant 1.000000e+00 : f32
    %334 = vector.broadcast %cst_111 : f32 to vector<8x128xf32>
    %335 = arith.addf %334, %333 : vector<8x128xf32>
    %336 = arith.divf %334, %335 : vector<8x128xf32>
    %337 = vector.extract_strided_slice %324 {offsets = [0, 256], sizes = [8, 128], strides = [1, 1]} : vector<8x512xf32> to vector<8x128xf32>
    %338 = math.tanh %337 : vector<8x128xf32>
    %339 = vector.extract_strided_slice %324 {offsets = [0, 384], sizes = [8, 128], strides = [1, 1]} : vector<8x512xf32> to vector<8x128xf32>
    %340 = arith.negf %339 : vector<8x128xf32>
    %341 = math.exp %340 : vector<8x128xf32>
    %cst_112 = arith.constant 1.000000e+00 : f32
    %342 = vector.broadcast %cst_112 : f32 to vector<8x128xf32>
    %343 = arith.addf %342, %341 : vector<8x128xf32>
    %344 = arith.divf %342, %343 : vector<8x128xf32>
    %345 = arith.mulf %336, %317 : vector<8x128xf32>
    %346 = arith.mulf %330, %338 : vector<8x128xf32>
    %347 = arith.addf %345, %346 : vector<8x128xf32>
    %348 = math.tanh %347 : vector<8x128xf32>
    %349 = arith.mulf %344, %348 : vector<8x128xf32>
    %350 = arith.addf %320, %349 : vector<8x128xf32>
    %c24_113 = arith.constant 24 : index
    %c0_114 = arith.constant 0 : index
    %351 = vector.load %arg14[%c24_113, %c0_114] : memref<64x512xf32, #tpu.memory_space<vmem>>, vector<8x512xf32>
    %c0_115 = arith.constant 0 : index
    %c0_116 = arith.constant 0 : index
    %352 = vector.load %arg5[%c0_115, %c0_116] : memref<128x512xf32, #tpu.memory_space<vmem>>, vector<128x512xf32>
    %cst_117 = arith.constant dense<0.000000e+00> : vector<8x512xf32>
    %353 = tpu.matmul %349, %352, %cst_117 {dimension_numbers = #tpu.dot_dimension_numbers<[1], [0], [0], [1], [0, 0, 1, 1], [], []>} : vector<8x128xf32>, vector<128x512xf32>, vector<8x512xf32> -> vector<8x512xf32>
    %354 = arith.addf %351, %353 : vector<8x512xf32>
    %355 = vector.extract_strided_slice %354 {offsets = [0, 0], sizes = [8, 128], strides = [1, 1]} : vector<8x512xf32> to vector<8x128xf32>
    %356 = arith.negf %355 : vector<8x128xf32>
    %357 = math.exp %356 : vector<8x128xf32>
    %cst_118 = arith.constant 1.000000e+00 : f32
    %358 = vector.broadcast %cst_118 : f32 to vector<8x128xf32>
    %359 = arith.addf %358, %357 : vector<8x128xf32>
    %360 = arith.divf %358, %359 : vector<8x128xf32>
    %361 = vector.extract_strided_slice %354 {offsets = [0, 128], sizes = [8, 128], strides = [1, 1]} : vector<8x512xf32> to vector<8x128xf32>
    %362 = arith.negf %361 : vector<8x128xf32>
    %363 = math.exp %362 : vector<8x128xf32>
    %cst_119 = arith.constant 1.000000e+00 : f32
    %364 = vector.broadcast %cst_119 : f32 to vector<8x128xf32>
    %365 = arith.addf %364, %363 : vector<8x128xf32>
    %366 = arith.divf %364, %365 : vector<8x128xf32>
    %367 = vector.extract_strided_slice %354 {offsets = [0, 256], sizes = [8, 128], strides = [1, 1]} : vector<8x512xf32> to vector<8x128xf32>
    %368 = math.tanh %367 : vector<8x128xf32>
    %369 = vector.extract_strided_slice %354 {offsets = [0, 384], sizes = [8, 128], strides = [1, 1]} : vector<8x512xf32> to vector<8x128xf32>
    %370 = arith.negf %369 : vector<8x128xf32>
    %371 = math.exp %370 : vector<8x128xf32>
    %cst_120 = arith.constant 1.000000e+00 : f32
    %372 = vector.broadcast %cst_120 : f32 to vector<8x128xf32>
    %373 = arith.addf %372, %371 : vector<8x128xf32>
    %374 = arith.divf %372, %373 : vector<8x128xf32>
    %375 = arith.mulf %366, %347 : vector<8x128xf32>
    %376 = arith.mulf %360, %368 : vector<8x128xf32>
    %377 = arith.addf %375, %376 : vector<8x128xf32>
    %378 = math.tanh %377 : vector<8x128xf32>
    %379 = arith.mulf %374, %378 : vector<8x128xf32>
    %380 = arith.addf %350, %379 : vector<8x128xf32>
    %c32_121 = arith.constant 32 : index
    %c0_122 = arith.constant 0 : index
    %381 = vector.load %arg14[%c32_121, %c0_122] : memref<64x512xf32, #tpu.memory_space<vmem>>, vector<8x512xf32>
    %c0_123 = arith.constant 0 : index
    %c0_124 = arith.constant 0 : index
    %382 = vector.load %arg5[%c0_123, %c0_124] : memref<128x512xf32, #tpu.memory_space<vmem>>, vector<128x512xf32>
    %cst_125 = arith.constant dense<0.000000e+00> : vector<8x512xf32>
    %383 = tpu.matmul %379, %382, %cst_125 {dimension_numbers = #tpu.dot_dimension_numbers<[1], [0], [0], [1], [0, 0, 1, 1], [], []>} : vector<8x128xf32>, vector<128x512xf32>, vector<8x512xf32> -> vector<8x512xf32>
    %384 = arith.addf %381, %383 : vector<8x512xf32>
    %385 = vector.extract_strided_slice %384 {offsets = [0, 0], sizes = [8, 128], strides = [1, 1]} : vector<8x512xf32> to vector<8x128xf32>
    %386 = arith.negf %385 : vector<8x128xf32>
    %387 = math.exp %386 : vector<8x128xf32>
    %cst_126 = arith.constant 1.000000e+00 : f32
    %388 = vector.broadcast %cst_126 : f32 to vector<8x128xf32>
    %389 = arith.addf %388, %387 : vector<8x128xf32>
    %390 = arith.divf %388, %389 : vector<8x128xf32>
    %391 = vector.extract_strided_slice %384 {offsets = [0, 128], sizes = [8, 128], strides = [1, 1]} : vector<8x512xf32> to vector<8x128xf32>
    %392 = arith.negf %391 : vector<8x128xf32>
    %393 = math.exp %392 : vector<8x128xf32>
    %cst_127 = arith.constant 1.000000e+00 : f32
    %394 = vector.broadcast %cst_127 : f32 to vector<8x128xf32>
    %395 = arith.addf %394, %393 : vector<8x128xf32>
    %396 = arith.divf %394, %395 : vector<8x128xf32>
    %397 = vector.extract_strided_slice %384 {offsets = [0, 256], sizes = [8, 128], strides = [1, 1]} : vector<8x512xf32> to vector<8x128xf32>
    %398 = math.tanh %397 : vector<8x128xf32>
    %399 = vector.extract_strided_slice %384 {offsets = [0, 384], sizes = [8, 128], strides = [1, 1]} : vector<8x512xf32> to vector<8x128xf32>
    %400 = arith.negf %399 : vector<8x128xf32>
    %401 = math.exp %400 : vector<8x128xf32>
    %cst_128 = arith.constant 1.000000e+00 : f32
    %402 = vector.broadcast %cst_128 : f32 to vector<8x128xf32>
    %403 = arith.addf %402, %401 : vector<8x128xf32>
    %404 = arith.divf %402, %403 : vector<8x128xf32>
    %405 = arith.mulf %396, %377 : vector<8x128xf32>
    %406 = arith.mulf %390, %398 : vector<8x128xf32>
    %407 = arith.addf %405, %406 : vector<8x128xf32>
    %408 = math.tanh %407 : vector<8x128xf32>
    %409 = arith.mulf %404, %408 : vector<8x128xf32>
    %410 = arith.addf %380, %409 : vector<8x128xf32>
    %c40_129 = arith.constant 40 : index
    %c0_130 = arith.constant 0 : index
    %411 = vector.load %arg14[%c40_129, %c0_130] : memref<64x512xf32, #tpu.memory_space<vmem>>, vector<8x512xf32>
    %c0_131 = arith.constant 0 : index
    %c0_132 = arith.constant 0 : index
    %412 = vector.load %arg5[%c0_131, %c0_132] : memref<128x512xf32, #tpu.memory_space<vmem>>, vector<128x512xf32>
    %cst_133 = arith.constant dense<0.000000e+00> : vector<8x512xf32>
    %413 = tpu.matmul %409, %412, %cst_133 {dimension_numbers = #tpu.dot_dimension_numbers<[1], [0], [0], [1], [0, 0, 1, 1], [], []>} : vector<8x128xf32>, vector<128x512xf32>, vector<8x512xf32> -> vector<8x512xf32>
    %414 = arith.addf %411, %413 : vector<8x512xf32>
    %415 = vector.extract_strided_slice %414 {offsets = [0, 0], sizes = [8, 128], strides = [1, 1]} : vector<8x512xf32> to vector<8x128xf32>
    %416 = arith.negf %415 : vector<8x128xf32>
    %417 = math.exp %416 : vector<8x128xf32>
    %cst_134 = arith.constant 1.000000e+00 : f32
    %418 = vector.broadcast %cst_134 : f32 to vector<8x128xf32>
    %419 = arith.addf %418, %417 : vector<8x128xf32>
    %420 = arith.divf %418, %419 : vector<8x128xf32>
    %421 = vector.extract_strided_slice %414 {offsets = [0, 128], sizes = [8, 128], strides = [1, 1]} : vector<8x512xf32> to vector<8x128xf32>
    %422 = arith.negf %421 : vector<8x128xf32>
    %423 = math.exp %422 : vector<8x128xf32>
    %cst_135 = arith.constant 1.000000e+00 : f32
    %424 = vector.broadcast %cst_135 : f32 to vector<8x128xf32>
    %425 = arith.addf %424, %423 : vector<8x128xf32>
    %426 = arith.divf %424, %425 : vector<8x128xf32>
    %427 = vector.extract_strided_slice %414 {offsets = [0, 256], sizes = [8, 128], strides = [1, 1]} : vector<8x512xf32> to vector<8x128xf32>
    %428 = math.tanh %427 : vector<8x128xf32>
    %429 = vector.extract_strided_slice %414 {offsets = [0, 384], sizes = [8, 128], strides = [1, 1]} : vector<8x512xf32> to vector<8x128xf32>
    %430 = arith.negf %429 : vector<8x128xf32>
    %431 = math.exp %430 : vector<8x128xf32>
    %cst_136 = arith.constant 1.000000e+00 : f32
    %432 = vector.broadcast %cst_136 : f32 to vector<8x128xf32>
    %433 = arith.addf %432, %431 : vector<8x128xf32>
    %434 = arith.divf %432, %433 : vector<8x128xf32>
    %435 = arith.mulf %426, %407 : vector<8x128xf32>
    %436 = arith.mulf %420, %428 : vector<8x128xf32>
    %437 = arith.addf %435, %436 : vector<8x128xf32>
    %438 = math.tanh %437 : vector<8x128xf32>
    %439 = arith.mulf %434, %438 : vector<8x128xf32>
    %440 = arith.addf %410, %439 : vector<8x128xf32>
    %c48_137 = arith.constant 48 : index
    %c0_138 = arith.constant 0 : index
    %441 = vector.load %arg14[%c48_137, %c0_138] : memref<64x512xf32, #tpu.memory_space<vmem>>, vector<8x512xf32>
    %c0_139 = arith.constant 0 : index
    %c0_140 = arith.constant 0 : index
    %442 = vector.load %arg5[%c0_139, %c0_140] : memref<128x512xf32, #tpu.memory_space<vmem>>, vector<128x512xf32>
    %cst_141 = arith.constant dense<0.000000e+00> : vector<8x512xf32>
    %443 = tpu.matmul %439, %442, %cst_141 {dimension_numbers = #tpu.dot_dimension_numbers<[1], [0], [0], [1], [0, 0, 1, 1], [], []>} : vector<8x128xf32>, vector<128x512xf32>, vector<8x512xf32> -> vector<8x512xf32>
    %444 = arith.addf %441, %443 : vector<8x512xf32>
    %445 = vector.extract_strided_slice %444 {offsets = [0, 0], sizes = [8, 128], strides = [1, 1]} : vector<8x512xf32> to vector<8x128xf32>
    %446 = arith.negf %445 : vector<8x128xf32>
    %447 = math.exp %446 : vector<8x128xf32>
    %cst_142 = arith.constant 1.000000e+00 : f32
    %448 = vector.broadcast %cst_142 : f32 to vector<8x128xf32>
    %449 = arith.addf %448, %447 : vector<8x128xf32>
    %450 = arith.divf %448, %449 : vector<8x128xf32>
    %451 = vector.extract_strided_slice %444 {offsets = [0, 128], sizes = [8, 128], strides = [1, 1]} : vector<8x512xf32> to vector<8x128xf32>
    %452 = arith.negf %451 : vector<8x128xf32>
    %453 = math.exp %452 : vector<8x128xf32>
    %cst_143 = arith.constant 1.000000e+00 : f32
    %454 = vector.broadcast %cst_143 : f32 to vector<8x128xf32>
    %455 = arith.addf %454, %453 : vector<8x128xf32>
    %456 = arith.divf %454, %455 : vector<8x128xf32>
    %457 = vector.extract_strided_slice %444 {offsets = [0, 256], sizes = [8, 128], strides = [1, 1]} : vector<8x512xf32> to vector<8x128xf32>
    %458 = math.tanh %457 : vector<8x128xf32>
    %459 = vector.extract_strided_slice %444 {offsets = [0, 384], sizes = [8, 128], strides = [1, 1]} : vector<8x512xf32> to vector<8x128xf32>
    %460 = arith.negf %459 : vector<8x128xf32>
    %461 = math.exp %460 : vector<8x128xf32>
    %cst_144 = arith.constant 1.000000e+00 : f32
    %462 = vector.broadcast %cst_144 : f32 to vector<8x128xf32>
    %463 = arith.addf %462, %461 : vector<8x128xf32>
    %464 = arith.divf %462, %463 : vector<8x128xf32>
    %465 = arith.mulf %456, %437 : vector<8x128xf32>
    %466 = arith.mulf %450, %458 : vector<8x128xf32>
    %467 = arith.addf %465, %466 : vector<8x128xf32>
    %468 = math.tanh %467 : vector<8x128xf32>
    %469 = arith.mulf %464, %468 : vector<8x128xf32>
    %470 = arith.addf %440, %469 : vector<8x128xf32>
    %c56_145 = arith.constant 56 : index
    %c0_146 = arith.constant 0 : index
    %471 = vector.load %arg14[%c56_145, %c0_146] : memref<64x512xf32, #tpu.memory_space<vmem>>, vector<8x512xf32>
    %c0_147 = arith.constant 0 : index
    %c0_148 = arith.constant 0 : index
    %472 = vector.load %arg5[%c0_147, %c0_148] : memref<128x512xf32, #tpu.memory_space<vmem>>, vector<128x512xf32>
    %cst_149 = arith.constant dense<0.000000e+00> : vector<8x512xf32>
    %473 = tpu.matmul %469, %472, %cst_149 {dimension_numbers = #tpu.dot_dimension_numbers<[1], [0], [0], [1], [0, 0, 1, 1], [], []>} : vector<8x128xf32>, vector<128x512xf32>, vector<8x512xf32> -> vector<8x512xf32>
    %474 = arith.addf %471, %473 : vector<8x512xf32>
    %475 = vector.extract_strided_slice %474 {offsets = [0, 0], sizes = [8, 128], strides = [1, 1]} : vector<8x512xf32> to vector<8x128xf32>
    %476 = arith.negf %475 : vector<8x128xf32>
    %477 = math.exp %476 : vector<8x128xf32>
    %cst_150 = arith.constant 1.000000e+00 : f32
    %478 = vector.broadcast %cst_150 : f32 to vector<8x128xf32>
    %479 = arith.addf %478, %477 : vector<8x128xf32>
    %480 = arith.divf %478, %479 : vector<8x128xf32>
    %481 = vector.extract_strided_slice %474 {offsets = [0, 128], sizes = [8, 128], strides = [1, 1]} : vector<8x512xf32> to vector<8x128xf32>
    %482 = arith.negf %481 : vector<8x128xf32>
    %483 = math.exp %482 : vector<8x128xf32>
    %cst_151 = arith.constant 1.000000e+00 : f32
    %484 = vector.broadcast %cst_151 : f32 to vector<8x128xf32>
    %485 = arith.addf %484, %483 : vector<8x128xf32>
    %486 = arith.divf %484, %485 : vector<8x128xf32>
    %487 = vector.extract_strided_slice %474 {offsets = [0, 256], sizes = [8, 128], strides = [1, 1]} : vector<8x512xf32> to vector<8x128xf32>
    %488 = math.tanh %487 : vector<8x128xf32>
    %489 = vector.extract_strided_slice %474 {offsets = [0, 384], sizes = [8, 128], strides = [1, 1]} : vector<8x512xf32> to vector<8x128xf32>
    %490 = arith.negf %489 : vector<8x128xf32>
    %491 = math.exp %490 : vector<8x128xf32>
    %cst_152 = arith.constant 1.000000e+00 : f32
    %492 = vector.broadcast %cst_152 : f32 to vector<8x128xf32>
    %493 = arith.addf %492, %491 : vector<8x128xf32>
    %494 = arith.divf %492, %493 : vector<8x128xf32>
    %495 = arith.mulf %486, %467 : vector<8x128xf32>
    %496 = arith.mulf %480, %488 : vector<8x128xf32>
    %497 = arith.addf %495, %496 : vector<8x128xf32>
    %498 = math.tanh %497 : vector<8x128xf32>
    %499 = arith.mulf %494, %498 : vector<8x128xf32>
    %500 = arith.addf %470, %499 : vector<8x128xf32>
    %c1_153 = arith.constant 1 : index
    %c0_154 = arith.constant 0 : index
    %c0_155 = arith.constant 0 : index
    %501 = vector.load %arg12[%c1_153, %c0_154, %c0_155] : memref<2x8x128xf32, #tpu.memory_space<vmem>>, vector<1x8x128xf32>
    %502 = vector.shape_cast %501 : vector<1x8x128xf32> to vector<8x128xf32>
    %503 = vector.shape_cast %499 : vector<8x128xf32> to vector<1x8x128xf32>
    tpu.vector_store %arg12[%c1_153, %c0_154, %c0_155], %503 {strides = array<i32>} : memref<2x8x128xf32, #tpu.memory_space<vmem>>, vector<1x8x128xf32>,
    %c1_156 = arith.constant 1 : index
    %c0_157 = arith.constant 0 : index
    %c0_158 = arith.constant 0 : index
    %504 = vector.load %arg13[%c1_156, %c0_157, %c0_158] : memref<2x8x128xf32, #tpu.memory_space<vmem>>, vector<1x8x128xf32>
    %505 = vector.shape_cast %504 : vector<1x8x128xf32> to vector<8x128xf32>
    %506 = vector.shape_cast %497 : vector<8x128xf32> to vector<1x8x128xf32>
    tpu.vector_store %arg13[%c1_156, %c0_157, %c0_158], %506 {strides = array<i32>} : memref<2x8x128xf32, #tpu.memory_space<vmem>>, vector<1x8x128xf32>,
    %cst_159 = arith.constant 1.250000e-01 : f32
    %507 = vector.broadcast %cst_159 : f32 to vector<8x128xf32>
    %508 = arith.mulf %500, %507 : vector<8x128xf32>
    %c0_160 = arith.constant 0 : index
    %c0_161 = arith.constant 0 : index
    %509 = vector.load %arg9[%c0_160, %c0_161] : memref<128x128xf32, #tpu.memory_space<vmem>>, vector<128x128xf32>
    %cst_162 = arith.constant dense<0.000000e+00> : vector<8x128xf32>
    %510 = tpu.matmul %508, %509, %cst_162 {dimension_numbers = #tpu.dot_dimension_numbers<[1], [0], [0], [1], [0, 0, 1, 1], [], []>} : vector<8x128xf32>, vector<128x128xf32>, vector<8x128xf32> -> vector<8x128xf32>
    %c0_163 = arith.constant 0 : index
    %c0_164 = arith.constant 0 : index
    %511 = vector.load %arg10[%c0_163, %c0_164] : memref<1x128xf32, #tpu.memory_space<vmem>>, vector<1x128xf32>
    %512 = vector.broadcast %511 : vector<1x128xf32> to vector<8x128xf32>
    %513 = arith.addf %510, %512 : vector<8x128xf32>
    %cst_165 = arith.constant dense<0xFF800000> : vector<8xf32>
    %514 = vector.multi_reduction <maximumf>, %513, %cst_165 [1] : vector<8x128xf32> to vector<8xf32>
    %515 = vector.shape_cast %514 : vector<8xf32> to vector<8x1xf32>
    %516 = vector.broadcast %515 : vector<8x1xf32> to vector<8x128xf32>
    %517 = arith.subf %513, %516 : vector<8x128xf32>
    %518 = math.exp %517 : vector<8x128xf32>
    %cst_166 = arith.constant dense<0.000000e+00> : vector<8xf32>
    %519 = vector.multi_reduction <add>, %518, %cst_166 [1] : vector<8x128xf32> to vector<8xf32>
    %520 = vector.shape_cast %519 : vector<8xf32> to vector<8x1xf32>
    %521 = tpu.reciprocal %520 {approx = true} : vector<8x1xf32> -> vector<8x1xf32>
    %522 = vector.broadcast %521 : vector<8x1xf32> to vector<8x128xf32>
    %523 = arith.mulf %518, %522 : vector<8x128xf32>
    %c0_167 = arith.constant 0 : index
    %c0_168 = arith.constant 0 : index
    %524 = vector.load %arg11[%c0_167, %c0_168] : memref<8x128xf32, #tpu.memory_space<vmem>>, vector<8x128xf32>
    tpu.vector_store %arg11[%c0_167, %c0_168], %523 {strides = array<i32>} : memref<8x128xf32, #tpu.memory_space<vmem>>, vector<8x128xf32>,
    return
  }
}

</mosaic_0001>

<llo_original>
// kernel: basic_rnn_forward.1
$region0: #{basic_rnn_forward.1}
  #allocation0 [shape = 'u32[]', space=smem, size = 0x4, offset = 0x4, fixed_abs, tag = 'smem constant byte address 0x4 - core index']
  #allocation1 [shape = 'u32[144,128]{1,0:T(1,128)}', space=vmem, size = 0x12000, scoped, tag = 'internal scratch']
  #allocation2 [shape = 'f32[64,512]{1,0:T(8,128)}', space=vmem, size = 0x20000, scoped, tag = 'scratch operand']
  %s0 = inlined_call_operand.vmem [shape: f32[64,128], index: 0, kind: input, shape index: {}]
  %s1 = inlined_call_operand.vmem [shape: f32[128,512], index: 1, kind: input, shape index: {}]
  %s2 = inlined_call_operand.vmem [shape: f32[128,512], index: 2, kind: input, shape index: {}]
  %s3 = inlined_call_operand.vmem [shape: f32[1,512], index: 3, kind: input, shape index: {}]
  %s4 = inlined_call_operand.vmem [shape: f32[128,512], index: 4, kind: input, shape index: {}]
  %s5 = inlined_call_operand.vmem [shape: f32[128,512], index: 5, kind: input, shape index: {}]
  %s6 = inlined_call_operand.vmem [shape: f32[1,512], index: 6, kind: input, shape index: {}]
  %s7 = inlined_call_operand.vmem [shape: f32[2,8,128], index: 7, kind: input, shape index: {}]
  %s8 = inlined_call_operand.vmem [shape: f32[2,8,128], index: 8, kind: input, shape index: {}]
  %s9 = inlined_call_operand.vmem [shape: f32[128,128], index: 9, kind: input, shape index: {}]
  %s10 = inlined_call_operand.vmem [shape: f32[1,128], index: 10, kind: input, shape index: {}]
  %s11 = inlined_call_operand.vmem [shape: f32[8,128], index: 11, kind: output, shape index: {0}]
  %s12 = inlined_call_operand.vmem [shape: f32[2,8,128], index: 12, kind: output, shape index: {1}]
  %s13 = inlined_call_operand.vmem [shape: f32[2,8,128], index: 13, kind: output, shape index: {2}]
  %14 = xla_tuple %s11, %s12, %s13
  %s15 = sld [smem:[#allocation0]]
  $region70: #{basic_rnn_forward.1} parent=0
    _
  %s17 = ssub.s32 1, %s15
  %s18 = scalar_select 0, %s17, %s15
  // Predicated region
  $region2: #{basic_rnn_forward.1} parent=0 // pred_check
    _
  $region3: #{basic_rnn_forward.1} parent=0 // pred_check_branch
    %20 = sbr.rel (0) target = $region5
  $region4: #{basic_rnn_forward.1} parent=0 // pred_region
    _
  $region5: #{basic_rnn_forward.1} parent=0 // pred_fallthru
    _
  // Predicated region
  $region6: #{basic_rnn_forward.1} parent=0 // pred_check
    _
  $region7: #{basic_rnn_forward.1} parent=0 // pred_check_branch
    %22 = sbr.rel (0) target = $region9
  $region8: #{basic_rnn_forward.1} parent=0 // pred_region
    _
  $region9: #{basic_rnn_forward.1} parent=0 // pred_fallthru
    _
  // Predicated region
  $region10: #{basic_rnn_forward.1} parent=0 // pred_check
    _
  $region11: #{basic_rnn_forward.1} parent=0 // pred_check_branch
    %24 = sbr.rel (0) target = $region13
  $region12: #{basic_rnn_forward.1} parent=0 // pred_region
    _
  $region13: #{basic_rnn_forward.1} parent=0 // pred_fallthru
    _
  // Predicated region
  $region14: #{basic_rnn_forward.1} parent=0 // pred_check
    _
  $region15: #{basic_rnn_forward.1} parent=0 // pred_check_branch
    %26 = sbr.rel (0) target = $region17
  $region16: #{basic_rnn_forward.1} parent=0 // pred_region
    _
  $region17: #{basic_rnn_forward.1} parent=0 // pred_fallthru
    _
  // Predicated region
  $region18: #{basic_rnn_forward.1} parent=0 // pred_check
    _
  $region19: #{basic_rnn_forward.1} parent=0 // pred_check_branch
    %28 = sbr.rel (0) target = $region21
  $region20: #{basic_rnn_forward.1} parent=0 // pred_region
    _
  $region21: #{basic_rnn_forward.1} parent=0 // pred_fallthru
    _
  // Predicated region
  $region22: #{basic_rnn_forward.1} parent=0 // pred_check
    _
  $region23: #{basic_rnn_forward.1} parent=0 // pred_check_branch
    %30 = sbr.rel (0) target = $region25
  $region24: #{basic_rnn_forward.1} parent=0 // pred_region
    _
  $region25: #{basic_rnn_forward.1} parent=0 // pred_fallthru
    _
  // Predicated region
  $region26: #{basic_rnn_forward.1} parent=0 // pred_check
    _
  $region27: #{basic_rnn_forward.1} parent=0 // pred_check_branch
    %32 = sbr.rel (0) target = $region29
  $region28: #{basic_rnn_forward.1} parent=0 // pred_region
    _
  $region29: #{basic_rnn_forward.1} parent=0 // pred_fallthru
    _
  // Predicated region
  $region30: #{basic_rnn_forward.1} parent=0 // pred_check
    _
  $region31: #{basic_rnn_forward.1} parent=0 // pred_check_branch
    %34 = sbr.rel (0) target = $region33
  $region32: #{basic_rnn_forward.1} parent=0 // pred_region
    _
  $region33: #{basic_rnn_forward.1} parent=0 // pred_fallthru
    _
  // Predicated region
  $region34: #{basic_rnn_forward.1} parent=0 // pred_check
    _
  $region35: #{basic_rnn_forward.1} parent=0 // pred_check_branch
    %36 = sbr.rel (0) target = $region37
  $region36: #{basic_rnn_forward.1} parent=0 // pred_region
    _
  $region37: #{basic_rnn_forward.1} parent=0 // pred_fallthru
    _
  // Predicated region
  $region38: #{basic_rnn_forward.1} parent=0 // pred_check
    _
  $region39: #{basic_rnn_forward.1} parent=0 // pred_check_branch
    %38 = sbr.rel (0) target = $region41
  $region40: #{basic_rnn_forward.1} parent=0 // pred_region
    _
  $region41: #{basic_rnn_forward.1} parent=0 // pred_fallthru
    _
  // Predicated region
  $region42: #{basic_rnn_forward.1} parent=0 // pred_check
    _
  $region43: #{basic_rnn_forward.1} parent=0 // pred_check_branch
    %40 = sbr.rel (0) target = $region45
  $region44: #{basic_rnn_forward.1} parent=0 // pred_region
    _
  $region45: #{basic_rnn_forward.1} parent=0 // pred_fallthru
    _
  %v41 = vld [vmem:[%s0] sm:$0xff]
  %v42 = vld [vmem:[%s0 + $0x8] sm:$0xff]
  %v43 = vld [vmem:[%s0 + $0x10] sm:$0xff]
  %v44 = vld [vmem:[%s0 + $0x18] sm:$0xff]
  %v45 = vld [vmem:[%s0 + $0x20] sm:$0xff]
  %v46 = vld [vmem:[%s0 + $0x28] sm:$0xff]
  %v47 = vld [vmem:[%s0 + $0x30] sm:$0xff]
  %v48 = vld [vmem:[%s0 + $0x38] sm:$0xff]
  %v49 = vld [vmem:[%s1] sm:$0xff]
  %v50 = vld [vmem:[%s1 + $0x8] sm:$0xff]
  %v51 = vld [vmem:[%s1 + $0x10] sm:$0xff]
  %v52 = vld [vmem:[%s1 + $0x18] sm:$0xff]
  %v53 = vld [vmem:[%s1 + $0x20] sm:$0xff]
  %v54 = vld [vmem:[%s1 + $0x28] sm:$0xff]
  %v55 = vld [vmem:[%s1 + $0x30] sm:$0xff]
  %v56 = vld [vmem:[%s1 + $0x38] sm:$0xff]
  %v57 = vld [vmem:[%s1 + $0x40] sm:$0xff]
  %v58 = vld [vmem:[%s1 + $0x48] sm:$0xff]
  %v59 = vld [vmem:[%s1 + $0x50] sm:$0xff]
  %v60 = vld [vmem:[%s1 + $0x58] sm:$0xff]
  %v61 = vld [vmem:[%s1 + $0x60] sm:$0xff]
  %v62 = vld [vmem:[%s1 + $0x68] sm:$0xff]
  %v63 = vld [vmem:[%s1 + $0x70] sm:$0xff]
  %v64 = vld [vmem:[%s1 + $0x78] sm:$0xff]
  %v65 = vld [vmem:[%s1 + $0x80] sm:$0xff]
  %v66 = vld [vmem:[%s1 + $0x88] sm:$0xff]
  %v67 = vld [vmem:[%s1 + $0x90] sm:$0xff]
  %v68 = vld [vmem:[%s1 + $0x98] sm:$0xff]
  %v69 = vld [vmem:[%s1 + $0xa0] sm:$0xff]
  %v70 = vld [vmem:[%s1 + $0xa8] sm:$0xff]
  %v71 = vld [vmem:[%s1 + $0xb0] sm:$0xff]
  %v72 = vld [vmem:[%s1 + $0xb8] sm:$0xff]
  %v73 = vld [vmem:[%s1 + $0xc0] sm:$0xff]
  %v74 = vld [vmem:[%s1 + $0xc8] sm:$0xff]
  %v75 = vld [vmem:[%s1 + $0xd0] sm:$0xff]
  %v76 = vld [vmem:[%s1 + $0xd8] sm:$0xff]
  %v77 = vld [vmem:[%s1 + $0xe0] sm:$0xff]
  %v78 = vld [vmem:[%s1 + $0xe8] sm:$0xff]
  %v79 = vld [vmem:[%s1 + $0xf0] sm:$0xff]
  %v80 = vld [vmem:[%s1 + $0xf8] sm:$0xff]
  %v81 = vld [vmem:[%s1 + $0x100] sm:$0xff]
  %v82 = vld [vmem:[%s1 + $0x108] sm:$0xff]
  %v83 = vld [vmem:[%s1 + $0x110] sm:$0xff]
  %v84 = vld [vmem:[%s1 + $0x118] sm:$0xff]
  %v85 = vld [vmem:[%s1 + $0x120] sm:$0xff]
  %v86 = vld [vmem:[%s1 + $0x128] sm:$0xff]
  %v87 = vld [vmem:[%s1 + $0x130] sm:$0xff]
  %v88 = vld [vmem:[%s1 + $0x138] sm:$0xff]
  %v89 = vld [vmem:[%s1 + $0x140] sm:$0xff]
  %v90 = vld [vmem:[%s1 + $0x148] sm:$0xff]
  %v91 = vld [vmem:[%s1 + $0x150] sm:$0xff]
  %v92 = vld [vmem:[%s1 + $0x158] sm:$0xff]
  %v93 = vld [vmem:[%s1 + $0x160] sm:$0xff]
  %v94 = vld [vmem:[%s1 + $0x168] sm:$0xff]
  %v95 = vld [vmem:[%s1 + $0x170] sm:$0xff]
  %v96 = vld [vmem:[%s1 + $0x178] sm:$0xff]
  %v97 = vld [vmem:[%s1 + $0x180] sm:$0xff]
  %v98 = vld [vmem:[%s1 + $0x188] sm:$0xff]
  %v99 = vld [vmem:[%s1 + $0x190] sm:$0xff]
  %v100 = vld [vmem:[%s1 + $0x198] sm:$0xff]
  %v101 = vld [vmem:[%s1 + $0x1a0] sm:$0xff]
  %v102 = vld [vmem:[%s1 + $0x1a8] sm:$0xff]
  %v103 = vld [vmem:[%s1 + $0x1b0] sm:$0xff]
  %v104 = vld [vmem:[%s1 + $0x1b8] sm:$0xff]
  %v105 = vld [vmem:[%s1 + $0x1c0] sm:$0xff]
  %v106 = vld [vmem:[%s1 + $0x1c8] sm:$0xff]
  %v107 = vld [vmem:[%s1 + $0x1d0] sm:$0xff]
  %v108 = vld [vmem:[%s1 + $0x1d8] sm:$0xff]
  %v109 = vld [vmem:[%s1 + $0x1e0] sm:$0xff]
  %v110 = vld [vmem:[%s1 + $0x1e8] sm:$0xff]
  %v111 = vld [vmem:[%s1 + $0x1f0] sm:$0xff]
  %v112 = vld [vmem:[%s1 + $0x1f8] sm:$0xff]
  %v113 = vld [vmem:[%s3] sm:$0xf]
  %v115 = vlaneseq
  %v116 = vshrl.u32 %v115, 7
  %v117 = vsub.s32 0, %v116
  %v118 = vrot.slane %v113, %v117
  %v119 = vlaneseq
  %v120 = vshrl.u32 %v119, 7
  %v121 = vsub.s32 1, %v120
  %v122 = vrot.slane %v113, %v121
  %v123 = vlaneseq
  %v124 = vshrl.u32 %v123, 7
  %v125 = vsub.s32 2, %v124
  %v126 = vrot.slane %v113, %v125
  %v127 = vlaneseq
  %v128 = vshrl.u32 %v127, 7
  %v129 = vsub.s32 3, %v128
  %v130 = vrot.slane %v113, %v129
  %135 = vmatprep.subr.mxu0 %v50
  %136 = vmatpush1.msra.mxu0 %v49
  %137 = vmatprep.subr.mxu0 %v54
  %138 = vmatpush1.msra.mxu0 %v53
  %139 = vmatprep.subr.mxu0 %v58
  %140 = vmatpush1.msra.mxu0 %v57
  %141 = vmatprep.subr.mxu0 %v62
  %142 = vmatpush1.msra.mxu0 %v61
  %143 = vmatprep.subr.mxu0 %v66
  %144 = vmatpush1.msra.mxu0 %v65
  %145 = vmatprep.subr.mxu0 %v70
  %146 = vmatpush1.msra.mxu0 %v69
  %147 = vmatprep.subr.mxu0 %v74
  %148 = vmatpush1.msra.mxu0 %v73
  %149 = vmatprep.subr.mxu0 %v78
  %150 = vmatpush1.msra.mxu0 %v77
  %151 = vmatprep.subr.mxu0 %v82
  %152 = vmatpush1.msra.mxu0 %v81
  %153 = vmatprep.subr.mxu0 %v86
  %154 = vmatpush1.msra.mxu0 %v85
  %155 = vmatprep.subr.mxu0 %v90
  %156 = vmatpush1.msra.mxu0 %v89
  %157 = vmatprep.subr.mxu0 %v94
  %158 = vmatpush1.msra.mxu0 %v93
  %159 = vmatprep.subr.mxu0 %v98
  %160 = vmatpush1.msra.mxu0 %v97
  %161 = vmatprep.subr.mxu0 %v102
  %162 = vmatpush1.msra.mxu0 %v101
  %163 = vmatprep.subr.mxu0 %v106
  %164 = vmatpush1.msra.mxu0 %v105
  %165 = vmatprep.subr.mxu0 %v110
  %166 = vmatpush1.msra.mxu0 %v109
  %167 = vmatprep.subr.mxu0 0.0
  %168 = vmatpush1.msra.mxu0 0.0
  %169 = vmatprep.subr.mxu0 0.0
  %170 = vmatpush1.msra.mxu0 0.0
  %171 = vmatprep.subr.mxu0 0.0
  %172 = vmatpush1.msra.mxu0 0.0
  %173 = vmatprep.subr.mxu0 0.0
  %174 = vmatpush1.msra.mxu0 0.0
  %175 = vmatprep.subr.mxu0 0.0
  %176 = vmatpush1.msra.mxu0 0.0
  %177 = vmatprep.subr.mxu0 0.0
  %178 = vmatpush1.msra.mxu0 0.0
  %179 = vmatprep.subr.mxu0 0.0
  %180 = vmatpush1.msra.mxu0 0.0
  %181 = vmatprep.subr.mxu0 0.0
  %182 = vmatpush1.msra.mxu0 0.0
  %183 = vmatprep.subr.mxu0 0.0
  %184 = vmatpush1.msra.mxu0 0.0
  %185 = vmatprep.subr.mxu0 0.0
  %186 = vmatpush1.msra.mxu0 0.0
  %187 = vmatprep.subr.mxu0 0.0
  %188 = vmatpush1.msra.mxu0 0.0
  %189 = vmatprep.subr.mxu0 0.0
  %190 = vmatpush1.msra.mxu0 0.0
  %191 = vmatprep.subr.mxu0 0.0
  %192 = vmatpush1.msra.mxu0 0.0
  %193 = vmatprep.subr.mxu0 0.0
  %194 = vmatpush1.msra.mxu0 0.0
  %195 = vmatprep.subr.mxu0 0.0
  %196 = vmatpush1.msra.mxu0 0.0
  %197 = vmatprep.subr.mxu0 0.0
  %198 = vmatpush1.msra.mxu0 0.0
  %199 = vmatprep.mubr.f32.mxu0 0.0
  %200 = vmatmul.mubr.f32.gmra.mrb[0].mxu0 %v41
  %v201 = vpop.f32.mrb[0].mxu0
  %v202 = vadd.f32 %v118, %v201
  %v203 = vpop.f32.mrb[0].mxu0
  %v204 = vadd.f32 %v122, %v203
  %205 = vmatprep.mubr.f32.mxu0 0.0
  %206 = vmatmul.mubr.f32.gmra.mrb[0].mxu0 %v42
  %v207 = vpop.f32.mrb[0].mxu0
  %v208 = vadd.f32 %v118, %v207
  %v209 = vpop.f32.mrb[0].mxu0
  %v210 = vadd.f32 %v122, %v209
  %211 = vmatprep.mubr.f32.mxu0 0.0
  %212 = vmatmul.mubr.f32.gmra.mrb[0].mxu0 %v43
  %v213 = vpop.f32.mrb[0].mxu0
  %v214 = vadd.f32 %v118, %v213
  %v215 = vpop.f32.mrb[0].mxu0
  %v216 = vadd.f32 %v122, %v215
  %217 = vmatprep.mubr.f32.mxu0 0.0
  %218 = vmatmul.mubr.f32.gmra.mrb[0].mxu0 %v44
  %v219 = vpop.f32.mrb[0].mxu0
  %v220 = vadd.f32 %v118, %v219
  %v221 = vpop.f32.mrb[0].mxu0
  %v222 = vadd.f32 %v122, %v221
  %223 = vmatprep.mubr.f32.mxu0 0.0
  %224 = vmatmul.mubr.f32.gmra.mrb[0].mxu0 %v45
  %v225 = vpop.f32.mrb[0].mxu0
  %v226 = vadd.f32 %v118, %v225
  %v227 = vpop.f32.mrb[0].mxu0
  %v228 = vadd.f32 %v122, %v227
  %229 = vmatprep.mubr.f32.mxu0 0.0
  %230 = vmatmul.mubr.f32.gmra.mrb[0].mxu0 %v46
  %v231 = vpop.f32.mrb[0].mxu0
  %v232 = vadd.f32 %v118, %v231
  %v233 = vpop.f32.mrb[0].mxu0
  %v234 = vadd.f32 %v122, %v233
  %235 = vmatprep.mubr.f32.mxu0 0.0
  %236 = vmatmul.mubr.f32.gmra.mrb[0].mxu0 %v47
  %v237 = vpop.f32.mrb[0].mxu0
  %v238 = vadd.f32 %v118, %v237
  %v239 = vpop.f32.mrb[0].mxu0
  %v240 = vadd.f32 %v122, %v239
  %241 = vmatprep.mubr.f32.mxu0 0.0
  %242 = vmatmul.mubr.f32.gmra.mrb[0].mxu0 %v48
  %v243 = vpop.f32.mrb[0].mxu0
  %v244 = vadd.f32 %v118, %v243
  %v245 = vpop.f32.mrb[0].mxu0
  %v246 = vadd.f32 %v122, %v245
  %247 = vdwg.mxu0
  %248 = vmatprep.subr.mxu0 %v52
  %249 = vmatpush1.msra.mxu0 %v51
  %250 = vmatprep.subr.mxu0 %v56
  %251 = vmatpush1.msra.mxu0 %v55
  %252 = vmatprep.subr.mxu0 %v60
  %253 = vmatpush1.msra.mxu0 %v59
  %254 = vmatprep.subr.mxu0 %v64
  %255 = vmatpush1.msra.mxu0 %v63
  %256 = vmatprep.subr.mxu0 %v68
  %257 = vmatpush1.msra.mxu0 %v67
  %258 = vmatprep.subr.mxu0 %v72
  %259 = vmatpush1.msra.mxu0 %v71
  %260 = vmatprep.subr.mxu0 %v76
  %261 = vmatpush1.msra.mxu0 %v75
  %262 = vmatprep.subr.mxu0 %v80
  %263 = vmatpush1.msra.mxu0 %v79
  %264 = vmatprep.subr.mxu0 %v84
  %265 = vmatpush1.msra.mxu0 %v83
  %266 = vmatprep.subr.mxu0 %v88
  %267 = vmatpush1.msra.mxu0 %v87
  %268 = vmatprep.subr.mxu0 %v92
  %269 = vmatpush1.msra.mxu0 %v91
  %270 = vmatprep.subr.mxu0 %v96
  %271 = vmatpush1.msra.mxu0 %v95
  %272 = vmatprep.subr.mxu0 %v100
  %273 = vmatpush1.msra.mxu0 %v99
  %274 = vmatprep.subr.mxu0 %v104
  %275 = vmatpush1.msra.mxu0 %v103
  %276 = vmatprep.subr.mxu0 %v108
  %277 = vmatpush1.msra.mxu0 %v107
  %278 = vmatprep.subr.mxu0 %v112
  %279 = vmatpush1.msra.mxu0 %v111
  %280 = vmatprep.subr.mxu0 0.0
  %281 = vmatpush1.msra.mxu0 0.0
  %282 = vmatprep.subr.mxu0 0.0
  %283 = vmatpush1.msra.mxu0 0.0
  %284 = vmatprep.subr.mxu0 0.0
  %285 = vmatpush1.msra.mxu0 0.0
  %286 = vmatprep.subr.mxu0 0.0
  %287 = vmatpush1.msra.mxu0 0.0
  %288 = vmatprep.subr.mxu0 0.0
  %289 = vmatpush1.msra.mxu0 0.0
  %290 = vmatprep.subr.mxu0 0.0
  %291 = vmatpush1.msra.mxu0 0.0
  %292 = vmatprep.subr.mxu0 0.0
  %293 = vmatpush1.msra.mxu0 0.0
  %294 = vmatprep.subr.mxu0 0.0
  %295 = vmatpush1.msra.mxu0 0.0
  %296 = vmatprep.subr.mxu0 0.0
  %297 = vmatpush1.msra.mxu0 0.0
  %298 = vmatprep.subr.mxu0 0.0
  %299 = vmatpush1.msra.mxu0 0.0
  %300 = vmatprep.subr.mxu0 0.0
  %301 = vmatpush1.msra.mxu0 0.0
  %302 = vmatprep.subr.mxu0 0.0
  %303 = vmatpush1.msra.mxu0 0.0
  %304 = vmatprep.subr.mxu0 0.0
  %305 = vmatpush1.msra.mxu0 0.0
  %306 = vmatprep.subr.mxu0 0.0
  %307 = vmatpush1.msra.mxu0 0.0
  %308 = vmatprep.subr.mxu0 0.0
  %309 = vmatpush1.msra.mxu0 0.0
  %310 = vmatprep.subr.mxu0 0.0
  %311 = vmatpush1.msra.mxu0 0.0
  %312 = vmatprep.mubr.f32.mxu0 0.0
  %313 = vmatmul.mubr.f32.gmra.mrb[0].mxu0 %v41
  %v314 = vpop.f32.mrb[0].mxu0
  %v315 = vadd.f32 %v126, %v314
  %v316 = vpop.f32.mrb[0].mxu0
  %v317 = vadd.f32 %v130, %v316
  %318 = vmatprep.mubr.f32.mxu0 0.0
  %319 = vmatmul.mubr.f32.gmra.mrb[0].mxu0 %v42
  %v320 = vpop.f32.mrb[0].mxu0
  %v321 = vadd.f32 %v126, %v320
  %v322 = vpop.f32.mrb[0].mxu0
  %v323 = vadd.f32 %v130, %v322
  %324 = vmatprep.mubr.f32.mxu0 0.0
  %325 = vmatmul.mubr.f32.gmra.mrb[0].mxu0 %v43
  %v326 = vpop.f32.mrb[0].mxu0
  %v327 = vadd.f32 %v126, %v326
  %v328 = vpop.f32.mrb[0].mxu0
  %v329 = vadd.f32 %v130, %v328
  %330 = vmatprep.mubr.f32.mxu0 0.0
  %331 = vmatmul.mubr.f32.gmra.mrb[0].mxu0 %v44
  %v332 = vpop.f32.mrb[0].mxu0
  %v333 = vadd.f32 %v126, %v332
  %v334 = vpop.f32.mrb[0].mxu0
  %v335 = vadd.f32 %v130, %v334
  %336 = vmatprep.mubr.f32.mxu0 0.0
  %337 = vmatmul.mubr.f32.gmra.mrb[0].mxu0 %v45
  %v338 = vpop.f32.mrb[0].mxu0
  %v339 = vadd.f32 %v126, %v338
  %v340 = vpop.f32.mrb[0].mxu0
  %v341 = vadd.f32 %v130, %v340
  %342 = vmatprep.mubr.f32.mxu0 0.0
  %343 = vmatmul.mubr.f32.gmra.mrb[0].mxu0 %v46
  %v344 = vpop.f32.mrb[0].mxu0
  %v345 = vadd.f32 %v126, %v344
  %v346 = vpop.f32.mrb[0].mxu0
  %v347 = vadd.f32 %v130, %v346
  %348 = vmatprep.mubr.f32.mxu0 0.0
  %349 = vmatmul.mubr.f32.gmra.mrb[0].mxu0 %v47
  %v350 = vpop.f32.mrb[0].mxu0
  %v351 = vadd.f32 %v126, %v350
  %v352 = vpop.f32.mrb[0].mxu0
  %v353 = vadd.f32 %v130, %v352
  %354 = vmatprep.mubr.f32.mxu0 0.0
  %355 = vmatmul.mubr.f32.gmra.mrb[0].mxu0 %v48
  %v356 = vpop.f32.mrb[0].mxu0
  %v357 = vadd.f32 %v126, %v356
  %v358 = vpop.f32.mrb[0].mxu0
  %v359 = vadd.f32 %v130, %v358
  %360 = vdwg.mxu0
  %361 = vst [vmem:[#allocation2] sm:$0xff] %v202
  %362 = vst [vmem:[#allocation2 + $0x8] sm:$0xff] %v204
  %363 = vst [vmem:[#allocation2 + $0x10] sm:$0xff] %v315
  %364 = vst [vmem:[#allocation2 + $0x18] sm:$0xff] %v317
  %365 = vst [vmem:[#allocation2 + $0x20] sm:$0xff] %v208
  %366 = vst [vmem:[#allocation2 + $0x28] sm:$0xff] %v210
  %367 = vst [vmem:[#allocation2 + $0x30] sm:$0xff] %v321
  %368 = vst [vmem:[#allocation2 + $0x38] sm:$0xff] %v323
  %369 = vst [vmem:[#allocation2 + $0x40] sm:$0xff] %v214
  %370 = vst [vmem:[#allocation2 + $0x48] sm:$0xff] %v216
  %371 = vst [vmem:[#allocation2 + $0x50] sm:$0xff] %v327
  %372 = vst [vmem:[#allocation2 + $0x58] sm:$0xff] %v329
  %373 = vst [vmem:[#allocation2 + $0x60] sm:$0xff] %v220
  %374 = vst [vmem:[#allocation2 + $0x68] sm:$0xff] %v222
  %375 = vst [vmem:[#allocation2 + $0x70] sm:$0xff] %v333
  %376 = vst [vmem:[#allocation2 + $0x78] sm:$0xff] %v335
  %377 = vst [vmem:[#allocation2 + $0x80] sm:$0xff] %v226
  %378 = vst [vmem:[#allocation2 + $0x88] sm:$0xff] %v228
  %379 = vst [vmem:[#allocation2 + $0x90] sm:$0xff] %v339
  %380 = vst [vmem:[#allocation2 + $0x98] sm:$0xff] %v341
  %381 = vst [vmem:[#allocation2 + $0xa0] sm:$0xff] %v232
  %382 = vst [vmem:[#allocation2 + $0xa8] sm:$0xff] %v234
  %383 = vst [vmem:[#allocation2 + $0xb0] sm:$0xff] %v345
  %384 = vst [vmem:[#allocation2 + $0xb8] sm:$0xff] %v347
  %385 = vst [vmem:[#allocation2 + $0xc0] sm:$0xff] %v238
  %386 = vst [vmem:[#allocation2 + $0xc8] sm:$0xff] %v240
  %387 = vst [vmem:[#allocation2 + $0xd0] sm:$0xff] %v351
  %388 = vst [vmem:[#allocation2 + $0xd8] sm:$0xff] %v353
  %389 = vst [vmem:[#allocation2 + $0xe0] sm:$0xff] %v244
  %390 = vst [vmem:[#allocation2 + $0xe8] sm:$0xff] %v246
  %391 = vst [vmem:[#allocation2 + $0xf0] sm:$0xff] %v357
  %392 = vst [vmem:[#allocation2 + $0xf8] sm:$0xff] %v359
  %v393 = vld [vmem:[%s7] sm:$0xff]
  %v394 = vld [vmem:[%s8] sm:$0xff]
  %v395 = vld [vmem:[#allocation2] sm:$0xff]
  %v396 = vld [vmem:[#allocation2 + $0x8] sm:$0xff]
  %v397 = vld [vmem:[#allocation2 + $0x10] sm:$0xff]
  %v398 = vld [vmem:[#allocation2 + $0x18] sm:$0xff]
  %v399 = vld [vmem:[%s2] sm:$0xff]
  %v400 = vld [vmem:[%s2 + $0x8] sm:$0xff]
  %v401 = vld [vmem:[%s2 + $0x10] sm:$0xff]
  %v402 = vld [vmem:[%s2 + $0x18] sm:$0xff]
  %v403 = vld [vmem:[%s2 + $0x20] sm:$0xff]
  %v404 = vld [vmem:[%s2 + $0x28] sm:$0xff]
  %v405 = vld [vmem:[%s2 + $0x30] sm:$0xff]
  %v406 = vld [vmem:[%s2 + $0x38] sm:$0xff]
  %v407 = vld [vmem:[%s2 + $0x40] sm:$0xff]
  %v408 = vld [vmem:[%s2 + $0x48] sm:$0xff]
  %v409 = vld [vmem:[%s2 + $0x50] sm:$0xff]
  %v410 = vld [vmem:[%s2 + $0x58] sm:$0xff]
  %v411 = vld [vmem:[%s2 + $0x60] sm:$0xff]
  %v412 = vld [vmem:[%s2 + $0x68] sm:$0xff]
  %v413 = vld [vmem:[%s2 + $0x70] sm:$0xff]
  %v414 = vld [vmem:[%s2 + $0x78] sm:$0xff]
  %v415 = vld [vmem:[%s2 + $0x80] sm:$0xff]
  %v416 = vld [vmem:[%s2 + $0x88] sm:$0xff]
  %v417 = vld [vmem:[%s2 + $0x90] sm:$0xff]
  %v418 = vld [vmem:[%s2 + $0x98] sm:$0xff]
  %v419 = vld [vmem:[%s2 + $0xa0] sm:$0xff]
  %v420 = vld [vmem:[%s2 + $0xa8] sm:$0xff]
  %v421 = vld [vmem:[%s2 + $0xb0] sm:$0xff]
  %v422 = vld [vmem:[%s2 + $0xb8] sm:$0xff]
  %v423 = vld [vmem:[%s2 + $0xc0] sm:$0xff]
  %v424 = vld [vmem:[%s2 + $0xc8] sm:$0xff]
  %v425 = vld [vmem:[%s2 + $0xd0] sm:$0xff]
  %v426 = vld [vmem:[%s2 + $0xd8] sm:$0xff]
  %v427 = vld [vmem:[%s2 + $0xe0] sm:$0xff]
  %v428 = vld [vmem:[%s2 + $0xe8] sm:$0xff]
  %v429 = vld [vmem:[%s2 + $0xf0] sm:$0xff]
  %v430 = vld [vmem:[%s2 + $0xf8] sm:$0xff]
  %v431 = vld [vmem:[%s2 + $0x100] sm:$0xff]
  %v432 = vld [vmem:[%s2 + $0x108] sm:$0xff]
  %v433 = vld [vmem:[%s2 + $0x110] sm:$0xff]
  %v434 = vld [vmem:[%s2 + $0x118] sm:$0xff]
  %v435 = vld [vmem:[%s2 + $0x120] sm:$0xff]
  %v436 = vld [vmem:[%s2 + $0x128] sm:$0xff]
  %v437 = vld [vmem:[%s2 + $0x130] sm:$0xff]
  %v438 = vld [vmem:[%s2 + $0x138] sm:$0xff]
  %v439 = vld [vmem:[%s2 + $0x140] sm:$0xff]
  %v440 = vld [vmem:[%s2 + $0x148] sm:$0xff]
  %v441 = vld [vmem:[%s2 + $0x150] sm:$0xff]
  %v442 = vld [vmem:[%s2 + $0x158] sm:$0xff]
  %v443 = vld [vmem:[%s2 + $0x160] sm:$0xff]
  %v444 = vld [vmem:[%s2 + $0x168] sm:$0xff]
  %v445 = vld [vmem:[%s2 + $0x170] sm:$0xff]
  %v446 = vld [vmem:[%s2 + $0x178] sm:$0xff]
  %v447 = vld [vmem:[%s2 + $0x180] sm:$0xff]
  %v448 = vld [vmem:[%s2 + $0x188] sm:$0xff]
  %v449 = vld [vmem:[%s2 + $0x190] sm:$0xff]
  %v450 = vld [vmem:[%s2 + $0x198] sm:$0xff]
  %v451 = vld [vmem:[%s2 + $0x1a0] sm:$0xff]
  %v452 = vld [vmem:[%s2 + $0x1a8] sm:$0xff]
  %v453 = vld [vmem:[%s2 + $0x1b0] sm:$0xff]
  %v454 = vld [vmem:[%s2 + $0x1b8] sm:$0xff]
  %v455 = vld [vmem:[%s2 + $0x1c0] sm:$0xff]
  %v456 = vld [vmem:[%s2 + $0x1c8] sm:$0xff]
  %v457 = vld [vmem:[%s2 + $0x1d0] sm:$0xff]
  %v458 = vld [vmem:[%s2 + $0x1d8] sm:$0xff]
  %v459 = vld [vmem:[%s2 + $0x1e0] sm:$0xff]
  %v460 = vld [vmem:[%s2 + $0x1e8] sm:$0xff]
  %v461 = vld [vmem:[%s2 + $0x1f0] sm:$0xff]
  %v462 = vld [vmem:[%s2 + $0x1f8] sm:$0xff]
  %463 = vmatprep.subr.mxu0 %v400
  %464 = vmatpush1.msra.mxu0 %v399
  %465 = vmatprep.subr.mxu0 %v404
  %466 = vmatpush1.msra.mxu0 %v403
  %467 = vmatprep.subr.mxu0 %v408
  %468 = vmatpush1.msra.mxu0 %v407
  %469 = vmatprep.subr.mxu0 %v412
  %470 = vmatpush1.msra.mxu0 %v411
  %471 = vmatprep.subr.mxu0 %v416
  %472 = vmatpush1.msra.mxu0 %v415
  %473 = vmatprep.subr.mxu0 %v420
  %474 = vmatpush1.msra.mxu0 %v419
  %475 = vmatprep.subr.mxu0 %v424
  %476 = vmatpush1.msra.mxu0 %v423
  %477 = vmatprep.subr.mxu0 %v428
  %478 = vmatpush1.msra.mxu0 %v427
  %479 = vmatprep.subr.mxu0 %v432
  %480 = vmatpush1.msra.mxu0 %v431
  %481 = vmatprep.subr.mxu0 %v436
  %482 = vmatpush1.msra.mxu0 %v435
  %483 = vmatprep.subr.mxu0 %v440
  %484 = vmatpush1.msra.mxu0 %v439
  %485 = vmatprep.subr.mxu0 %v444
  %486 = vmatpush1.msra.mxu0 %v443
  %487 = vmatprep.subr.mxu0 %v448
  %488 = vmatpush1.msra.mxu0 %v447
  %489 = vmatprep.subr.mxu0 %v452
  %490 = vmatpush1.msra.mxu0 %v451
  %491 = vmatprep.subr.mxu0 %v456
  %492 = vmatpush1.msra.mxu0 %v455
  %493 = vmatprep.subr.mxu0 %v460
  %494 = vmatpush1.msra.mxu0 %v459
  %495 = vmatprep.subr.mxu0 0.0
  %496 = vmatpush1.msra.mxu0 0.0
  %497 = vmatprep.subr.mxu0 0.0
  %498 = vmatpush1.msra.mxu0 0.0
  %499 = vmatprep.subr.mxu0 0.0
  %500 = vmatpush1.msra.mxu0 0.0
  %501 = vmatprep.subr.mxu0 0.0
  %502 = vmatpush1.msra.mxu0 0.0
  %503 = vmatprep.subr.mxu0 0.0
  %504 = vmatpush1.msra.mxu0 0.0
  %505 = vmatprep.subr.mxu0 0.0
  %506 = vmatpush1.msra.mxu0 0.0
  %507 = vmatprep.subr.mxu0 0.0
  %508 = vmatpush1.msra.mxu0 0.0
  %509 = vmatprep.subr.mxu0 0.0
  %510 = vmatpush1.msra.mxu0 0.0
  %511 = vmatprep.subr.mxu0 0.0
  %512 = vmatpush1.msra.mxu0 0.0
  %513 = vmatprep.subr.mxu0 0.0
  %514 = vmatpush1.msra.mxu0 0.0
  %515 = vmatprep.subr.mxu0 0.0
  %516 = vmatpush1.msra.mxu0 0.0
  %517 = vmatprep.subr.mxu0 0.0
  %518 = vmatpush1.msra.mxu0 0.0
  %519 = vmatprep.subr.mxu0 0.0
  %520 = vmatpush1.msra.mxu0 0.0
  %521 = vmatprep.subr.mxu0 0.0
  %522 = vmatpush1.msra.mxu0 0.0
  %523 = vmatprep.subr.mxu0 0.0
  %524 = vmatpush1.msra.mxu0 0.0
  %525 = vmatprep.subr.mxu0 0.0
  %526 = vmatpush1.msra.mxu0 0.0
  %527 = vmatprep.mubr.f32.mxu0 0.0
  %528 = vmatmul.mubr.f32.gmra.mrb[0].mxu0 %v393
  %v529 = vpop.f32.mrb[0].mxu0
  %v530 = vadd.f32 0.0, %v529
  %v531 = vpop.f32.mrb[0].mxu0
  %v532 = vadd.f32 0.0, %v531
  %533 = vdwg.mxu0
  %534 = vmatprep.subr.mxu0 %v402
  %535 = vmatpush1.msra.mxu0 %v401
  %536 = vmatprep.subr.mxu0 %v406
  %537 = vmatpush1.msra.mxu0 %v405
  %538 = vmatprep.subr.mxu0 %v410
  %539 = vmatpush1.msra.mxu0 %v409
  %540 = vmatprep.subr.mxu0 %v414
  %541 = vmatpush1.msra.mxu0 %v413
  %542 = vmatprep.subr.mxu0 %v418
  %543 = vmatpush1.msra.mxu0 %v417
  %544 = vmatprep.subr.mxu0 %v422
  %545 = vmatpush1.msra.mxu0 %v421
  %546 = vmatprep.subr.mxu0 %v426
  %547 = vmatpush1.msra.mxu0 %v425
  %548 = vmatprep.subr.mxu0 %v430
  %549 = vmatpush1.msra.mxu0 %v429
  %550 = vmatprep.subr.mxu0 %v434
  %551 = vmatpush1.msra.mxu0 %v433
  %552 = vmatprep.subr.mxu0 %v438
  %553 = vmatpush1.msra.mxu0 %v437
  %554 = vmatprep.subr.mxu0 %v442
  %555 = vmatpush1.msra.mxu0 %v441
  %556 = vmatprep.subr.mxu0 %v446
  %557 = vmatpush1.msra.mxu0 %v445
  %558 = vmatprep.subr.mxu0 %v450
  %559 = vmatpush1.msra.mxu0 %v449
  %560 = vmatprep.subr.mxu0 %v454
  %561 = vmatpush1.msra.mxu0 %v453
  %562 = vmatprep.subr.mxu0 %v458
  %563 = vmatpush1.msra.mxu0 %v457
  %564 = vmatprep.subr.mxu0 %v462
  %565 = vmatpush1.msra.mxu0 %v461
  %566 = vmatprep.subr.mxu0 0.0
  %567 = vmatpush1.msra.mxu0 0.0
  %568 = vmatprep.subr.mxu0 0.0
  %569 = vmatpush1.msra.mxu0 0.0
  %570 = vmatprep.subr.mxu0 0.0
  %571 = vmatpush1.msra.mxu0 0.0
  %572 = vmatprep.subr.mxu0 0.0
  %573 = vmatpush1.msra.mxu0 0.0
  %574 = vmatprep.subr.mxu0 0.0
  %575 = vmatpush1.msra.mxu0 0.0
  %576 = vmatprep.subr.mxu0 0.0
  %577 = vmatpush1.msra.mxu0 0.0
  %578 = vmatprep.subr.mxu0 0.0
  %579 = vmatpush1.msra.mxu0 0.0
  %580 = vmatprep.subr.mxu0 0.0
  %581 = vmatpush1.msra.mxu0 0.0
  %582 = vmatprep.subr.mxu0 0.0
  %583 = vmatpush1.msra.mxu0 0.0
  %584 = vmatprep.subr.mxu0 0.0
  %585 = vmatpush1.msra.mxu0 0.0
  %586 = vmatprep.subr.mxu0 0.0
  %587 = vmatpush1.msra.mxu0 0.0
  %588 = vmatprep.subr.mxu0 0.0
  %589 = vmatpush1.msra.mxu0 0.0
  %590 = vmatprep.subr.mxu0 0.0
  %591 = vmatpush1.msra.mxu0 0.0
  %592 = vmatprep.subr.mxu0 0.0
  %593 = vmatpush1.msra.mxu0 0.0
  %594 = vmatprep.subr.mxu0 0.0
  %595 = vmatpush1.msra.mxu0 0.0
  %596 = vmatprep.subr.mxu0 0.0
  %597 = vmatpush1.msra.mxu0 0.0
  %598 = vmatprep.mubr.f32.mxu0 0.0
  %599 = vmatmul.mubr.f32.gmra.mrb[0].mxu0 %v393
  %v600 = vpop.f32.mrb[0].mxu0
  %v601 = vadd.f32 0.0, %v600
  %v602 = vpop.f32.mrb[0].mxu0
  %v603 = vadd.f32 0.0, %v602
  %604 = vdwg.mxu0
  %v605 = vadd.f32 %v395, %v530
  %v606 = vadd.f32 %v396, %v532
  %v607 = vadd.f32 %v397, %v601
  %v608 = vadd.f32 %v398, %v603
  %v609 = vxor.u32 %v605, 2147483648
  %v610 = vmul.f32 %v609, 1.442695
  %v611 = vpow.pop %v610
  %v612 = vadd.f32 %v611, 1.0
  %v613 = vrcp.pop %v612
  %v614 = vmul.f32 1.0, %v613
  %v615 = vxor.u32 %v606, 2147483648
  %v616 = vmul.f32 %v615, 1.442695
  %v617 = vpow.pop %v616
  %v618 = vadd.f32 %v617, 1.0
  %v619 = vrcp.pop %v618
  %v620 = vmul.f32 1.0, %v619
  %v621 = vtanh.pop %v607
  %v622 = vxor.u32 %v608, 2147483648
  %v623 = vmul.f32 %v622, 1.442695
  %v624 = vpow.pop %v623
  %v625 = vadd.f32 %v624, 1.0
  %v626 = vrcp.pop %v625
  %v627 = vmul.f32 1.0, %v626
  %v628 = vmul.f32 %v620, %v394
  %v629 = vmul.f32 %v614, %v621
  %v630 = vadd.f32 %v628, %v629
  %v631 = vtanh.pop %v630
  %v632 = vmul.f32 %v627, %v631
  %v633 = vld [vmem:[#allocation2 + $0x20] sm:$0xff]
  %v634 = vld [vmem:[#allocation2 + $0x28] sm:$0xff]
  %v635 = vld [vmem:[#allocation2 + $0x30] sm:$0xff]
  %v636 = vld [vmem:[#allocation2 + $0x38] sm:$0xff]
  %637 = vmatprep.subr.mxu0 %v400
  %638 = vmatpush1.msra.mxu0 %v399
  %639 = vmatprep.subr.mxu0 %v404
  %640 = vmatpush1.msra.mxu0 %v403
  %641 = vmatprep.subr.mxu0 %v408
  %642 = vmatpush1.msra.mxu0 %v407
  %643 = vmatprep.subr.mxu0 %v412
  %644 = vmatpush1.msra.mxu0 %v411
  %645 = vmatprep.subr.mxu0 %v416
  %646 = vmatpush1.msra.mxu0 %v415
  %647 = vmatprep.subr.mxu0 %v420
  %648 = vmatpush1.msra.mxu0 %v419
  %649 = vmatprep.subr.mxu0 %v424
  %650 = vmatpush1.msra.mxu0 %v423
  %651 = vmatprep.subr.mxu0 %v428
  %652 = vmatpush1.msra.mxu0 %v427
  %653 = vmatprep.subr.mxu0 %v432
  %654 = vmatpush1.msra.mxu0 %v431
  %655 = vmatprep.subr.mxu0 %v436
  %656 = vmatpush1.msra.mxu0 %v435
  %657 = vmatprep.subr.mxu0 %v440
  %658 = vmatpush1.msra.mxu0 %v439
  %659 = vmatprep.subr.mxu0 %v444
  %660 = vmatpush1.msra.mxu0 %v443
  %661 = vmatprep.subr.mxu0 %v448
  %662 = vmatpush1.msra.mxu0 %v447
  %663 = vmatprep.subr.mxu0 %v452
  %664 = vmatpush1.msra.mxu0 %v451
  %665 = vmatprep.subr.mxu0 %v456
  %666 = vmatpush1.msra.mxu0 %v455
  %667 = vmatprep.subr.mxu0 %v460
  %668 = vmatpush1.msra.mxu0 %v459
  %669 = vmatprep.subr.mxu0 0.0
  %670 = vmatpush1.msra.mxu0 0.0
  %671 = vmatprep.subr.mxu0 0.0
  %672 = vmatpush1.msra.mxu0 0.0
  %673 = vmatprep.subr.mxu0 0.0
  %674 = vmatpush1.msra.mxu0 0.0
  %675 = vmatprep.subr.mxu0 0.0
  %676 = vmatpush1.msra.mxu0 0.0
  %677 = vmatprep.subr.mxu0 0.0
  %678 = vmatpush1.msra.mxu0 0.0
  %679 = vmatprep.subr.mxu0 0.0
  %680 = vmatpush1.msra.mxu0 0.0
  %681 = vmatprep.subr.mxu0 0.0
  %682 = vmatpush1.msra.mxu0 0.0
  %683 = vmatprep.subr.mxu0 0.0
  %684 = vmatpush1.msra.mxu0 0.0
  %685 = vmatprep.subr.mxu0 0.0
  %686 = vmatpush1.msra.mxu0 0.0
  %687 = vmatprep.subr.mxu0 0.0
  %688 = vmatpush1.msra.mxu0 0.0
  %689 = vmatprep.subr.mxu0 0.0
  %690 = vmatpush1.msra.mxu0 0.0
  %691 = vmatprep.subr.mxu0 0.0
  %692 = vmatpush1.msra.mxu0 0.0
  %693 = vmatprep.subr.mxu0 0.0
  %694 = vmatpush1.msra.mxu0 0.0
  %695 = vmatprep.subr.mxu0 0.0
  %696 = vmatpush1.msra.mxu0 0.0
  %697 = vmatprep.subr.mxu0 0.0
  %698 = vmatpush1.msra.mxu0 0.0
  %699 = vmatprep.subr.mxu0 0.0
  %700 = vmatpush1.msra.mxu0 0.0
  %701 = vmatprep.mubr.f32.mxu0 0.0
  %702 = vmatmul.mubr.f32.gmra.mrb[0].mxu0 %v632
  %v703 = vpop.f32.mrb[0].mxu0
  %v704 = vadd.f32 0.0, %v703
  %v705 = vpop.f32.mrb[0].mxu0
  %v706 = vadd.f32 0.0, %v705
  %707 = vdwg.mxu0
  %708 = vmatprep.subr.mxu0 %v402
  %709 = vmatpush1.msra.mxu0 %v401
  %710 = vmatprep.subr.mxu0 %v406
  %711 = vmatpush1.msra.mxu0 %v405
  %712 = vmatprep.subr.mxu0 %v410
  %713 = vmatpush1.msra.mxu0 %v409
  %714 = vmatprep.subr.mxu0 %v414
  %715 = vmatpush1.msra.mxu0 %v413
  %716 = vmatprep.subr.mxu0 %v418
  %717 = vmatpush1.msra.mxu0 %v417
  %718 = vmatprep.subr.mxu0 %v422
  %719 = vmatpush1.msra.mxu0 %v421
  %720 = vmatprep.subr.mxu0 %v426
  %721 = vmatpush1.msra.mxu0 %v425
  %722 = vmatprep.subr.mxu0 %v430
  %723 = vmatpush1.msra.mxu0 %v429
  %724 = vmatprep.subr.mxu0 %v434
  %725 = vmatpush1.msra.mxu0 %v433
  %726 = vmatprep.subr.mxu0 %v438
  %727 = vmatpush1.msra.mxu0 %v437
  %728 = vmatprep.subr.mxu0 %v442
  %729 = vmatpush1.msra.mxu0 %v441
  %730 = vmatprep.subr.mxu0 %v446
  %731 = vmatpush1.msra.mxu0 %v445
  %732 = vmatprep.subr.mxu0 %v450
  %733 = vmatpush1.msra.mxu0 %v449
  %734 = vmatprep.subr.mxu0 %v454
  %735 = vmatpush1.msra.mxu0 %v453
  %736 = vmatprep.subr.mxu0 %v458
  %737 = vmatpush1.msra.mxu0 %v457
  %738 = vmatprep.subr.mxu0 %v462
  %739 = vmatpush1.msra.mxu0 %v461
  %740 = vmatprep.subr.mxu0 0.0
  %741 = vmatpush1.msra.mxu0 0.0
  %742 = vmatprep.subr.mxu0 0.0
  %743 = vmatpush1.msra.mxu0 0.0
  %744 = vmatprep.subr.mxu0 0.0
  %745 = vmatpush1.msra.mxu0 0.0
  %746 = vmatprep.subr.mxu0 0.0
  %747 = vmatpush1.msra.mxu0 0.0
  %748 = vmatprep.subr.mxu0 0.0
  %749 = vmatpush1.msra.mxu0 0.0
  %750 = vmatprep.subr.mxu0 0.0
  %751 = vmatpush1.msra.mxu0 0.0
  %752 = vmatprep.subr.mxu0 0.0
  %753 = vmatpush1.msra.mxu0 0.0
  %754 = vmatprep.subr.mxu0 0.0
  %755 = vmatpush1.msra.mxu0 0.0
  %756 = vmatprep.subr.mxu0 0.0
  %757 = vmatpush1.msra.mxu0 0.0
  %758 = vmatprep.subr.mxu0 0.0
  %759 = vmatpush1.msra.mxu0 0.0
  %760 = vmatprep.subr.mxu0 0.0
  %761 = vmatpush1.msra.mxu0 0.0
  %762 = vmatprep.subr.mxu0 0.0
  %763 = vmatpush1.msra.mxu0 0.0
  %764 = vmatprep.subr.mxu0 0.0
  %765 = vmatpush1.msra.mxu0 0.0
  %766 = vmatprep.subr.mxu0 0.0
  %767 = vmatpush1.msra.mxu0 0.0
  %768 = vmatprep.subr.mxu0 0.0
  %769 = vmatpush1.msra.mxu0 0.0
  %770 = vmatprep.subr.mxu0 0.0
  %771 = vmatpush1.msra.mxu0 0.0
  %772 = vmatprep.mubr.f32.mxu0 0.0
  %773 = vmatmul.mubr.f32.gmra.mrb[0].mxu0 %v632
  %v774 = vpop.f32.mrb[0].mxu0
  %v775 = vadd.f32 0.0, %v774
  %v776 = vpop.f32.mrb[0].mxu0
  %v777 = vadd.f32 0.0, %v776
  %778 = vdwg.mxu0
  %v779 = vadd.f32 %v633, %v704
  %v780 = vadd.f32 %v634, %v706
  %v781 = vadd.f32 %v635, %v775
  %v782 = vadd.f32 %v636, %v777
  %v783 = vxor.u32 %v779, 2147483648
  %v784 = vmul.f32 %v783, 1.442695
  %v785 = vpow.pop %v784
  %v786 = vadd.f32 %v785, 1.0
  %v787 = vrcp.pop %v786
  %v788 = vmul.f32 1.0, %v787
  %v789 = vxor.u32 %v780, 2147483648
  %v790 = vmul.f32 %v789, 1.442695
  %v791 = vpow.pop %v790
  %v792 = vadd.f32 %v791, 1.0
  %v793 = vrcp.pop %v792
  %v794 = vmul.f32 1.0, %v793
  %v795 = vtanh.pop %v781
  %v796 = vxor.u32 %v782, 2147483648
  %v797 = vmul.f32 %v796, 1.442695
  %v798 = vpow.pop %v797
  %v799 = vadd.f32 %v798, 1.0
  %v800 = vrcp.pop %v799
  %v801 = vmul.f32 1.0, %v800
  %v802 = vmul.f32 %v794, %v630
  %v803 = vmul.f32 %v788, %v795
  %v804 = vadd.f32 %v802, %v803
  %v805 = vtanh.pop %v804
  %v806 = vmul.f32 %v801, %v805
  %v807 = vld [vmem:[#allocation2 + $0x40] sm:$0xff]
  %v808 = vld [vmem:[#allocation2 + $0x48] sm:$0xff]
  %v809 = vld [vmem:[#allocation2 + $0x50] sm:$0xff]
  %v810 = vld [vmem:[#allocation2 + $0x58] sm:$0xff]
  %811 = vmatprep.subr.mxu0 %v400
  %812 = vmatpush1.msra.mxu0 %v399
  %813 = vmatprep.subr.mxu0 %v404
  %814 = vmatpush1.msra.mxu0 %v403
  %815 = vmatprep.subr.mxu0 %v408
  %816 = vmatpush1.msra.mxu0 %v407
  %817 = vmatprep.subr.mxu0 %v412
  %818 = vmatpush1.msra.mxu0 %v411
  %819 = vmatprep.subr.mxu0 %v416
  %820 = vmatpush1.msra.mxu0 %v415
  %821 = vmatprep.subr.mxu0 %v420
  %822 = vmatpush1.msra.mxu0 %v419
  %823 = vmatprep.subr.mxu0 %v424
  %824 = vmatpush1.msra.mxu0 %v423
  %825 = vmatprep.subr.mxu0 %v428
  %826 = vmatpush1.msra.mxu0 %v427
  %827 = vmatprep.subr.mxu0 %v432
  %828 = vmatpush1.msra.mxu0 %v431
  %829 = vmatprep.subr.mxu0 %v436
  %830 = vmatpush1.msra.mxu0 %v435
  %831 = vmatprep.subr.mxu0 %v440
  %832 = vmatpush1.msra.mxu0 %v439
  %833 = vmatprep.subr.mxu0 %v444
  %834 = vmatpush1.msra.mxu0 %v443
  %835 = vmatprep.subr.mxu0 %v448
  %836 = vmatpush1.msra.mxu0 %v447
  %837 = vmatprep.subr.mxu0 %v452
  %838 = vmatpush1.msra.mxu0 %v451
  %839 = vmatprep.subr.mxu0 %v456
  %840 = vmatpush1.msra.mxu0 %v455
  %841 = vmatprep.subr.mxu0 %v460
  %842 = vmatpush1.msra.mxu0 %v459
  %843 = vmatprep.subr.mxu0 0.0
  %844 = vmatpush1.msra.mxu0 0.0
  %845 = vmatprep.subr.mxu0 0.0
  %846 = vmatpush1.msra.mxu0 0.0
  %847 = vmatprep.subr.mxu0 0.0
  %848 = vmatpush1.msra.mxu0 0.0
  %849 = vmatprep.subr.mxu0 0.0
  %850 = vmatpush1.msra.mxu0 0.0
  %851 = vmatprep.subr.mxu0 0.0
  %852 = vmatpush1.msra.mxu0 0.0
  %853 = vmatprep.subr.mxu0 0.0
  %854 = vmatpush1.msra.mxu0 0.0
  %855 = vmatprep.subr.mxu0 0.0
  %856 = vmatpush1.msra.mxu0 0.0
  %857 = vmatprep.subr.mxu0 0.0
  %858 = vmatpush1.msra.mxu0 0.0
  %859 = vmatprep.subr.mxu0 0.0
  %860 = vmatpush1.msra.mxu0 0.0
  %861 = vmatprep.subr.mxu0 0.0
  %862 = vmatpush1.msra.mxu0 0.0
  %863 = vmatprep.subr.mxu0 0.0
  %864 = vmatpush1.msra.mxu0 0.0
  %865 = vmatprep.subr.mxu0 0.0
  %866 = vmatpush1.msra.mxu0 0.0
  %867 = vmatprep.subr.mxu0 0.0
  %868 = vmatpush1.msra.mxu0 0.0
  %869 = vmatprep.subr.mxu0 0.0
  %870 = vmatpush1.msra.mxu0 0.0
  %871 = vmatprep.subr.mxu0 0.0
  %872 = vmatpush1.msra.mxu0 0.0
  %873 = vmatprep.subr.mxu0 0.0
  %874 = vmatpush1.msra.mxu0 0.0
  %875 = vmatprep.mubr.f32.mxu0 0.0
  %876 = vmatmul.mubr.f32.gmra.mrb[0].mxu0 %v806
  %v877 = vpop.f32.mrb[0].mxu0
  %v878 = vadd.f32 0.0, %v877
  %v879 = vpop.f32.mrb[0].mxu0
  %v880 = vadd.f32 0.0, %v879
  %881 = vdwg.mxu0
  %882 = vmatprep.subr.mxu0 %v402
  %883 = vmatpush1.msra.mxu0 %v401
  %884 = vmatprep.subr.mxu0 %v406
  %885 = vmatpush1.msra.mxu0 %v405
  %886 = vmatprep.subr.mxu0 %v410
  %887 = vmatpush1.msra.mxu0 %v409
  %888 = vmatprep.subr.mxu0 %v414
  %889 = vmatpush1.msra.mxu0 %v413
  %890 = vmatprep.subr.mxu0 %v418
  %891 = vmatpush1.msra.mxu0 %v417
  %892 = vmatprep.subr.mxu0 %v422
  %893 = vmatpush1.msra.mxu0 %v421
  %894 = vmatprep.subr.mxu0 %v426
  %895 = vmatpush1.msra.mxu0 %v425
  %896 = vmatprep.subr.mxu0 %v430
  %897 = vmatpush1.msra.mxu0 %v429
  %898 = vmatprep.subr.mxu0 %v434
  %899 = vmatpush1.msra.mxu0 %v433
  %900 = vmatprep.subr.mxu0 %v438
  %901 = vmatpush1.msra.mxu0 %v437
  %902 = vmatprep.subr.mxu0 %v442
  %903 = vmatpush1.msra.mxu0 %v441
  %904 = vmatprep.subr.mxu0 %v446
  %905 = vmatpush1.msra.mxu0 %v445
  %906 = vmatprep.subr.mxu0 %v450
  %907 = vmatpush1.msra.mxu0 %v449
  %908 = vmatprep.subr.mxu0 %v454
  %909 = vmatpush1.msra.mxu0 %v453
  %910 = vmatprep.subr.mxu0 %v458
  %911 = vmatpush1.msra.mxu0 %v457
  %912 = vmatprep.subr.mxu0 %v462
  %913 = vmatpush1.msra.mxu0 %v461
  %914 = vmatprep.subr.mxu0 0.0
  %915 = vmatpush1.msra.mxu0 0.0
  %916 = vmatprep.subr.mxu0 0.0
  %917 = vmatpush1.msra.mxu0 0.0
  %918 = vmatprep.subr.mxu0 0.0
  %919 = vmatpush1.msra.mxu0 0.0
  %920 = vmatprep.subr.mxu0 0.0
  %921 = vmatpush1.msra.mxu0 0.0
  %922 = vmatprep.subr.mxu0 0.0
  %923 = vmatpush1.msra.mxu0 0.0
  %924 = vmatprep.subr.mxu0 0.0
  %925 = vmatpush1.msra.mxu0 0.0
  %926 = vmatprep.subr.mxu0 0.0
  %927 = vmatpush1.msra.mxu0 0.0
  %928 = vmatprep.subr.mxu0 0.0
  %929 = vmatpush1.msra.mxu0 0.0
  %930 = vmatprep.subr.mxu0 0.0
  %931 = vmatpush1.msra.mxu0 0.0
  %932 = vmatprep.subr.mxu0 0.0
  %933 = vmatpush1.msra.mxu0 0.0
  %934 = vmatprep.subr.mxu0 0.0
  %935 = vmatpush1.msra.mxu0 0.0
  %936 = vmatprep.subr.mxu0 0.0
  %937 = vmatpush1.msra.mxu0 0.0
  %938 = vmatprep.subr.mxu0 0.0
  %939 = vmatpush1.msra.mxu0 0.0
  %940 = vmatprep.subr.mxu0 0.0
  %941 = vmatpush1.msra.mxu0 0.0
  %942 = vmatprep.subr.mxu0 0.0
  %943 = vmatpush1.msra.mxu0 0.0
  %944 = vmatprep.subr.mxu0 0.0
  %945 = vmatpush1.msra.mxu0 0.0
  %946 = vmatprep.mubr.f32.mxu0 0.0
  %947 = vmatmul.mubr.f32.gmra.mrb[0].mxu0 %v806
  %v948 = vpop.f32.mrb[0].mxu0
  %v949 = vadd.f32 0.0, %v948
  %v950 = vpop.f32.mrb[0].mxu0
  %v951 = vadd.f32 0.0, %v950
  %952 = vdwg.mxu0
  %v953 = vadd.f32 %v807, %v878
  %v954 = vadd.f32 %v808, %v880
  %v955 = vadd.f32 %v809, %v949
  %v956 = vadd.f32 %v810, %v951
  %v957 = vxor.u32 %v953, 2147483648
  %v958 = vmul.f32 %v957, 1.442695
  %v959 = vpow.pop %v958
  %v960 = vadd.f32 %v959, 1.0
  %v961 = vrcp.pop %v960
  %v962 = vmul.f32 1.0, %v961
  %v963 = vxor.u32 %v954, 2147483648
  %v964 = vmul.f32 %v963, 1.442695
  %v965 = vpow.pop %v964
  %v966 = vadd.f32 %v965, 1.0
  %v967 = vrcp.pop %v966
  %v968 = vmul.f32 1.0, %v967
  %v969 = vtanh.pop %v955
  %v970 = vxor.u32 %v956, 2147483648
  %v971 = vmul.f32 %v970, 1.442695
  %v972 = vpow.pop %v971
  %v973 = vadd.f32 %v972, 1.0
  %v974 = vrcp.pop %v973
  %v975 = vmul.f32 1.0, %v974
  %v976 = vmul.f32 %v968, %v804
  %v977 = vmul.f32 %v962, %v969
  %v978 = vadd.f32 %v976, %v977
  %v979 = vtanh.pop %v978
  %v980 = vmul.f32 %v975, %v979
  %v981 = vld [vmem:[#allocation2 + $0x60] sm:$0xff]
  %v982 = vld [vmem:[#allocation2 + $0x68] sm:$0xff]
  %v983 = vld [vmem:[#allocation2 + $0x70] sm:$0xff]
  %v984 = vld [vmem:[#allocation2 + $0x78] sm:$0xff]
  %985 = vmatprep.subr.mxu0 %v400
  %986 = vmatpush1.msra.mxu0 %v399
  %987 = vmatprep.subr.mxu0 %v404
  %988 = vmatpush1.msra.mxu0 %v403
  %989 = vmatprep.subr.mxu0 %v408
  %990 = vmatpush1.msra.mxu0 %v407
  %991 = vmatprep.subr.mxu0 %v412
  %992 = vmatpush1.msra.mxu0 %v411
  %993 = vmatprep.subr.mxu0 %v416
  %994 = vmatpush1.msra.mxu0 %v415
  %995 = vmatprep.subr.mxu0 %v420
  %996 = vmatpush1.msra.mxu0 %v419
  %997 = vmatprep.subr.mxu0 %v424
  %998 = vmatpush1.msra.mxu0 %v423
  %999 = vmatprep.subr.mxu0 %v428
  %1000 = vmatpush1.msra.mxu0 %v427
  %1001 = vmatprep.subr.mxu0 %v432
  %1002 = vmatpush1.msra.mxu0 %v431
  %1003 = vmatprep.subr.mxu0 %v436
  %1004 = vmatpush1.msra.mxu0 %v435
  %1005 = vmatprep.subr.mxu0 %v440
  %1006 = vmatpush1.msra.mxu0 %v439
  %1007 = vmatprep.subr.mxu0 %v444
  %1008 = vmatpush1.msra.mxu0 %v443
  %1009 = vmatprep.subr.mxu0 %v448
  %1010 = vmatpush1.msra.mxu0 %v447
  %1011 = vmatprep.subr.mxu0 %v452
  %1012 = vmatpush1.msra.mxu0 %v451
  %1013 = vmatprep.subr.mxu0 %v456
  %1014 = vmatpush1.msra.mxu0 %v455
  %1015 = vmatprep.subr.mxu0 %v460
  %1016 = vmatpush1.msra.mxu0 %v459
  %1017 = vmatprep.subr.mxu0 0.0
  %1018 = vmatpush1.msra.mxu0 0.0
  %1019 = vmatprep.subr.mxu0 0.0
  %1020 = vmatpush1.msra.mxu0 0.0
  %1021 = vmatprep.subr.mxu0 0.0
  %1022 = vmatpush1.msra.mxu0 0.0
  %1023 = vmatprep.subr.mxu0 0.0
  %1024 = vmatpush1.msra.mxu0 0.0
  %1025 = vmatprep.subr.mxu0 0.0
  %1026 = vmatpush1.msra.mxu0 0.0
  %1027 = vmatprep.subr.mxu0 0.0
  %1028 = vmatpush1.msra.mxu0 0.0
  %1029 = vmatprep.subr.mxu0 0.0
  %1030 = vmatpush1.msra.mxu0 0.0
  %1031 = vmatprep.subr.mxu0 0.0
  %1032 = vmatpush1.msra.mxu0 0.0
  %1033 = vmatprep.subr.mxu0 0.0
  %1034 = vmatpush1.msra.mxu0 0.0
  %1035 = vmatprep.subr.mxu0 0.0
  %1036 = vmatpush1.msra.mxu0 0.0
  %1037 = vmatprep.subr.mxu0 0.0
  %1038 = vmatpush1.msra.mxu0 0.0
  %1039 = vmatprep.subr.mxu0 0.0
  %1040 = vmatpush1.msra.mxu0 0.0
  %1041 = vmatprep.subr.mxu0 0.0
  %1042 = vmatpush1.msra.mxu0 0.0
  %1043 = vmatprep.subr.mxu0 0.0
  %1044 = vmatpush1.msra.mxu0 0.0
  %1045 = vmatprep.subr.mxu0 0.0
  %1046 = vmatpush1.msra.mxu0 0.0
  %1047 = vmatprep.subr.mxu0 0.0
  %1048 = vmatpush1.msra.mxu0 0.0
  %1049 = vmatprep.mubr.f32.mxu0 0.0
  %1050 = vmatmul.mubr.f32.gmra.mrb[0].mxu0 %v980
  %v1051 = vpop.f32.mrb[0].mxu0
  %v1052 = vadd.f32 0.0, %v1051
  %v1053 = vpop.f32.mrb[0].mxu0
  %v1054 = vadd.f32 0.0, %v1053
  %1055 = vdwg.mxu0
  %1056 = vmatprep.subr.mxu0 %v402
  %1057 = vmatpush1.msra.mxu0 %v401
  %1058 = vmatprep.subr.mxu0 %v406
  %1059 = vmatpush1.msra.mxu0 %v405
  %1060 = vmatprep.subr.mxu0 %v410
  %1061 = vmatpush1.msra.mxu0 %v409
  %1062 = vmatprep.subr.mxu0 %v414
  %1063 = vmatpush1.msra.mxu0 %v413
  %1064 = vmatprep.subr.mxu0 %v418
  %1065 = vmatpush1.msra.mxu0 %v417
  %1066 = vmatprep.subr.mxu0 %v422
  %1067 = vmatpush1.msra.mxu0 %v421
  %1068 = vmatprep.subr.mxu0 %v426
  %1069 = vmatpush1.msra.mxu0 %v425
  %1070 = vmatprep.subr.mxu0 %v430
  %1071 = vmatpush1.msra.mxu0 %v429
  %1072 = vmatprep.subr.mxu0 %v434
  %1073 = vmatpush1.msra.mxu0 %v433
  %1074 = vmatprep.subr.mxu0 %v438
  %1075 = vmatpush1.msra.mxu0 %v437
  %1076 = vmatprep.subr.mxu0 %v442
  %1077 = vmatpush1.msra.mxu0 %v441
  %1078 = vmatprep.subr.mxu0 %v446
  %1079 = vmatpush1.msra.mxu0 %v445
  %1080 = vmatprep.subr.mxu0 %v450
  %1081 = vmatpush1.msra.mxu0 %v449
  %1082 = vmatprep.subr.mxu0 %v454
  %1083 = vmatpush1.msra.mxu0 %v453
  %1084 = vmatprep.subr.mxu0 %v458
  %1085 = vmatpush1.msra.mxu0 %v457
  %1086 = vmatprep.subr.mxu0 %v462
  %1087 = vmatpush1.msra.mxu0 %v461
  %1088 = vmatprep.subr.mxu0 0.0
  %1089 = vmatpush1.msra.mxu0 0.0
  %1090 = vmatprep.subr.mxu0 0.0
  %1091 = vmatpush1.msra.mxu0 0.0
  %1092 = vmatprep.subr.mxu0 0.0
  %1093 = vmatpush1.msra.mxu0 0.0
  %1094 = vmatprep.subr.mxu0 0.0
  %1095 = vmatpush1.msra.mxu0 0.0
  %1096 = vmatprep.subr.mxu0 0.0
  %1097 = vmatpush1.msra.mxu0 0.0
  %1098 = vmatprep.subr.mxu0 0.0
  %1099 = vmatpush1.msra.mxu0 0.0
  %1100 = vmatprep.subr.mxu0 0.0
  %1101 = vmatpush1.msra.mxu0 0.0
  %1102 = vmatprep.subr.mxu0 0.0
  %1103 = vmatpush1.msra.mxu0 0.0
  %1104 = vmatprep.subr.mxu0 0.0
  %1105 = vmatpush1.msra.mxu0 0.0
  %1106 = vmatprep.subr.mxu0 0.0
  %1107 = vmatpush1.msra.mxu0 0.0
  %1108 = vmatprep.subr.mxu0 0.0
  %1109 = vmatpush1.msra.mxu0 0.0
  %1110 = vmatprep.subr.mxu0 0.0
  %1111 = vmatpush1.msra.mxu0 0.0
  %1112 = vmatprep.subr.mxu0 0.0
  %1113 = vmatpush1.msra.mxu0 0.0
  %1114 = vmatprep.subr.mxu0 0.0
  %1115 = vmatpush1.msra.mxu0 0.0
  %1116 = vmatprep.subr.mxu0 0.0
  %1117 = vmatpush1.msra.mxu0 0.0
  %1118 = vmatprep.subr.mxu0 0.0
  %1119 = vmatpush1.msra.mxu0 0.0
  %1120 = vmatprep.mubr.f32.mxu0 0.0
  %1121 = vmatmul.mubr.f32.gmra.mrb[0].mxu0 %v980
  %v1122 = vpop.f32.mrb[0].mxu0
  %v1123 = vadd.f32 0.0, %v1122
  %v1124 = vpop.f32.mrb[0].mxu0
  %v1125 = vadd.f32 0.0, %v1124
  %1126 = vdwg.mxu0
  %v1127 = vadd.f32 %v981, %v1052
  %v1128 = vadd.f32 %v982, %v1054
  %v1129 = vadd.f32 %v983, %v1123
  %v1130 = vadd.f32 %v984, %v1125
  %v1131 = vxor.u32 %v1127, 2147483648
  %v1132 = vmul.f32 %v1131, 1.442695
  %v1133 = vpow.pop %v1132
  %v1134 = vadd.f32 %v1133, 1.0
  %v1135 = vrcp.pop %v1134
  %v1136 = vmul.f32 1.0, %v1135
  %v1137 = vxor.u32 %v1128, 2147483648
  %v1138 = vmul.f32 %v1137, 1.442695
  %v1139 = vpow.pop %v1138
  %v1140 = vadd.f32 %v1139, 1.0
  %v1141 = vrcp.pop %v1140
  %v1142 = vmul.f32 1.0, %v1141
  %v1143 = vtanh.pop %v1129
  %v1144 = vxor.u32 %v1130, 2147483648
  %v1145 = vmul.f32 %v1144, 1.442695
  %v1146 = vpow.pop %v1145
  %v1147 = vadd.f32 %v1146, 1.0
  %v1148 = vrcp.pop %v1147
  %v1149 = vmul.f32 1.0, %v1148
  %v1150 = vmul.f32 %v1142, %v978
  %v1151 = vmul.f32 %v1136, %v1143
  %v1152 = vadd.f32 %v1150, %v1151
  %v1153 = vtanh.pop %v1152
  %v1154 = vmul.f32 %v1149, %v1153
  %v1155 = vld [vmem:[#allocation2 + $0x80] sm:$0xff]
  %v1156 = vld [vmem:[#allocation2 + $0x88] sm:$0xff]
  %v1157 = vld [vmem:[#allocation2 + $0x90] sm:$0xff]
  %v1158 = vld [vmem:[#allocation2 + $0x98] sm:$0xff]
  %1159 = vmatprep.subr.mxu0 %v400
  %1160 = vmatpush1.msra.mxu0 %v399
  %1161 = vmatprep.subr.mxu0 %v404
  %1162 = vmatpush1.msra.mxu0 %v403
  %1163 = vmatprep.subr.mxu0 %v408
  %1164 = vmatpush1.msra.mxu0 %v407
  %1165 = vmatprep.subr.mxu0 %v412
  %1166 = vmatpush1.msra.mxu0 %v411
  %1167 = vmatprep.subr.mxu0 %v416
  %1168 = vmatpush1.msra.mxu0 %v415
  %1169 = vmatprep.subr.mxu0 %v420
  %1170 = vmatpush1.msra.mxu0 %v419
  %1171 = vmatprep.subr.mxu0 %v424
  %1172 = vmatpush1.msra.mxu0 %v423
  %1173 = vmatprep.subr.mxu0 %v428
  %1174 = vmatpush1.msra.mxu0 %v427
  %1175 = vmatprep.subr.mxu0 %v432
  %1176 = vmatpush1.msra.mxu0 %v431
  %1177 = vmatprep.subr.mxu0 %v436
  %1178 = vmatpush1.msra.mxu0 %v435
  %1179 = vmatprep.subr.mxu0 %v440
  %1180 = vmatpush1.msra.mxu0 %v439
  %1181 = vmatprep.subr.mxu0 %v444
  %1182 = vmatpush1.msra.mxu0 %v443
  %1183 = vmatprep.subr.mxu0 %v448
  %1184 = vmatpush1.msra.mxu0 %v447
  %1185 = vmatprep.subr.mxu0 %v452
  %1186 = vmatpush1.msra.mxu0 %v451
  %1187 = vmatprep.subr.mxu0 %v456
  %1188 = vmatpush1.msra.mxu0 %v455
  %1189 = vmatprep.subr.mxu0 %v460
  %1190 = vmatpush1.msra.mxu0 %v459
  %1191 = vmatprep.subr.mxu0 0.0
  %1192 = vmatpush1.msra.mxu0 0.0
  %1193 = vmatprep.subr.mxu0 0.0
  %1194 = vmatpush1.msra.mxu0 0.0
  %1195 = vmatprep.subr.mxu0 0.0
  %1196 = vmatpush1.msra.mxu0 0.0
  %1197 = vmatprep.subr.mxu0 0.0
  %1198 = vmatpush1.msra.mxu0 0.0
  %1199 = vmatprep.subr.mxu0 0.0
  %1200 = vmatpush1.msra.mxu0 0.0
  %1201 = vmatprep.subr.mxu0 0.0
  %1202 = vmatpush1.msra.mxu0 0.0
  %1203 = vmatprep.subr.mxu0 0.0
  %1204 = vmatpush1.msra.mxu0 0.0
  %1205 = vmatprep.subr.mxu0 0.0
  %1206 = vmatpush1.msra.mxu0 0.0
  %1207 = vmatprep.subr.mxu0 0.0
  %1208 = vmatpush1.msra.mxu0 0.0
  %1209 = vmatprep.subr.mxu0 0.0
  %1210 = vmatpush1.msra.mxu0 0.0
  %1211 = vmatprep.subr.mxu0 0.0
  %1212 = vmatpush1.msra.mxu0 0.0
  %1213 = vmatprep.subr.mxu0 0.0
  %1214 = vmatpush1.msra.mxu0 0.0
  %1215 = vmatprep.subr.mxu0 0.0
  %1216 = vmatpush1.msra.mxu0 0.0
  %1217 = vmatprep.subr.mxu0 0.0
  %1218 = vmatpush1.msra.mxu0 0.0
  %1219 = vmatprep.subr.mxu0 0.0
  %1220 = vmatpush1.msra.mxu0 0.0
  %1221 = vmatprep.subr.mxu0 0.0
  %1222 = vmatpush1.msra.mxu0 0.0
  %1223 = vmatprep.mubr.f32.mxu0 0.0
  %1224 = vmatmul.mubr.f32.gmra.mrb[0].mxu0 %v1154
  %v1225 = vpop.f32.mrb[0].mxu0
  %v1226 = vadd.f32 0.0, %v1225
  %v1227 = vpop.f32.mrb[0].mxu0
  %v1228 = vadd.f32 0.0, %v1227
  %1229 = vdwg.mxu0
  %1230 = vmatprep.subr.mxu0 %v402
  %1231 = vmatpush1.msra.mxu0 %v401
  %1232 = vmatprep.subr.mxu0 %v406
  %1233 = vmatpush1.msra.mxu0 %v405
  %1234 = vmatprep.subr.mxu0 %v410
  %1235 = vmatpush1.msra.mxu0 %v409
  %1236 = vmatprep.subr.mxu0 %v414
  %1237 = vmatpush1.msra.mxu0 %v413
  %1238 = vmatprep.subr.mxu0 %v418
  %1239 = vmatpush1.msra.mxu0 %v417
  %1240 = vmatprep.subr.mxu0 %v422
  %1241 = vmatpush1.msra.mxu0 %v421
  %1242 = vmatprep.subr.mxu0 %v426
  %1243 = vmatpush1.msra.mxu0 %v425
  %1244 = vmatprep.subr.mxu0 %v430
  %1245 = vmatpush1.msra.mxu0 %v429
  %1246 = vmatprep.subr.mxu0 %v434
  %1247 = vmatpush1.msra.mxu0 %v433
  %1248 = vmatprep.subr.mxu0 %v438
  %1249 = vmatpush1.msra.mxu0 %v437
  %1250 = vmatprep.subr.mxu0 %v442
  %1251 = vmatpush1.msra.mxu0 %v441
  %1252 = vmatprep.subr.mxu0 %v446
  %1253 = vmatpush1.msra.mxu0 %v445
  %1254 = vmatprep.subr.mxu0 %v450
  %1255 = vmatpush1.msra.mxu0 %v449
  %1256 = vmatprep.subr.mxu0 %v454
  %1257 = vmatpush1.msra.mxu0 %v453
  %1258 = vmatprep.subr.mxu0 %v458
  %1259 = vmatpush1.msra.mxu0 %v457
  %1260 = vmatprep.subr.mxu0 %v462
  %1261 = vmatpush1.msra.mxu0 %v461
  %1262 = vmatprep.subr.mxu0 0.0
  %1263 = vmatpush1.msra.mxu0 0.0
  %1264 = vmatprep.subr.mxu0 0.0
  %1265 = vmatpush1.msra.mxu0 0.0
  %1266 = vmatprep.subr.mxu0 0.0
  %1267 = vmatpush1.msra.mxu0 0.0
  %1268 = vmatprep.subr.mxu0 0.0
  %1269 = vmatpush1.msra.mxu0 0.0
  %1270 = vmatprep.subr.mxu0 0.0
  %1271 = vmatpush1.msra.mxu0 0.0
  %1272 = vmatprep.subr.mxu0 0.0
  %1273 = vmatpush1.msra.mxu0 0.0
  %1274 = vmatprep.subr.mxu0 0.0
  %1275 = vmatpush1.msra.mxu0 0.0
  %1276 = vmatprep.subr.mxu0 0.0
  %1277 = vmatpush1.msra.mxu0 0.0
  %1278 = vmatprep.subr.mxu0 0.0
  %1279 = vmatpush1.msra.mxu0 0.0
  %1280 = vmatprep.subr.mxu0 0.0
  %1281 = vmatpush1.msra.mxu0 0.0
  %1282 = vmatprep.subr.mxu0 0.0
  %1283 = vmatpush1.msra.mxu0 0.0
  %1284 = vmatprep.subr.mxu0 0.0
  %1285 = vmatpush1.msra.mxu0 0.0
  %1286 = vmatprep.subr.mxu0 0.0
  %1287 = vmatpush1.msra.mxu0 0.0
  %1288 = vmatprep.subr.mxu0 0.0
  %1289 = vmatpush1.msra.mxu0 0.0
  %1290 = vmatprep.subr.mxu0 0.0
  %1291 = vmatpush1.msra.mxu0 0.0
  %1292 = vmatprep.subr.mxu0 0.0
  %1293 = vmatpush1.msra.mxu0 0.0
  %1294 = vmatprep.mubr.f32.mxu0 0.0
  %1295 = vmatmul.mubr.f32.gmra.mrb[0].mxu0 %v1154
  %v1296 = vpop.f32.mrb[0].mxu0
  %v1297 = vadd.f32 0.0, %v1296
  %v1298 = vpop.f32.mrb[0].mxu0
  %v1299 = vadd.f32 0.0, %v1298
  %1300 = vdwg.mxu0
  %v1301 = vadd.f32 %v1155, %v1226
  %v1302 = vadd.f32 %v1156, %v1228
  %v1303 = vadd.f32 %v1157, %v1297
  %v1304 = vadd.f32 %v1158, %v1299
  %v1305 = vxor.u32 %v1301, 2147483648
  %v1306 = vmul.f32 %v1305, 1.442695
  %v1307 = vpow.pop %v1306
  %v1308 = vadd.f32 %v1307, 1.0
  %v1309 = vrcp.pop %v1308
  %v1310 = vmul.f32 1.0, %v1309
  %v1311 = vxor.u32 %v1302, 2147483648
  %v1312 = vmul.f32 %v1311, 1.442695
  %v1313 = vpow.pop %v1312
  %v1314 = vadd.f32 %v1313, 1.0
  %v1315 = vrcp.pop %v1314
  %v1316 = vmul.f32 1.0, %v1315
  %v1317 = vtanh.pop %v1303
  %v1318 = vxor.u32 %v1304, 2147483648
  %v1319 = vmul.f32 %v1318, 1.442695
  %v1320 = vpow.pop %v1319
  %v1321 = vadd.f32 %v1320, 1.0
  %v1322 = vrcp.pop %v1321
  %v1323 = vmul.f32 1.0, %v1322
  %v1324 = vmul.f32 %v1316, %v1152
  %v1325 = vmul.f32 %v1310, %v1317
  %v1326 = vadd.f32 %v1324, %v1325
  %v1327 = vtanh.pop %v1326
  %v1328 = vmul.f32 %v1323, %v1327
  %v1329 = vld [vmem:[#allocation2 + $0xa0] sm:$0xff]
  %v1330 = vld [vmem:[#allocation2 + $0xa8] sm:$0xff]
  %v1331 = vld [vmem:[#allocation2 + $0xb0] sm:$0xff]
  %v1332 = vld [vmem:[#allocation2 + $0xb8] sm:$0xff]
  %1333 = vmatprep.subr.mxu0 %v400
  %1334 = vmatpush1.msra.mxu0 %v399
  %1335 = vmatprep.subr.mxu0 %v404
  %1336 = vmatpush1.msra.mxu0 %v403
  %1337 = vmatprep.subr.mxu0 %v408
  %1338 = vmatpush1.msra.mxu0 %v407
  %1339 = vmatprep.subr.mxu0 %v412
  %1340 = vmatpush1.msra.mxu0 %v411
  %1341 = vmatprep.subr.mxu0 %v416
  %1342 = vmatpush1.msra.mxu0 %v415
  %1343 = vmatprep.subr.mxu0 %v420
  %1344 = vmatpush1.msra.mxu0 %v419
  %1345 = vmatprep.subr.mxu0 %v424
  %1346 = vmatpush1.msra.mxu0 %v423
  %1347 = vmatprep.subr.mxu0 %v428
  %1348 = vmatpush1.msra.mxu0 %v427
  %1349 = vmatprep.subr.mxu0 %v432
  %1350 = vmatpush1.msra.mxu0 %v431
  %1351 = vmatprep.subr.mxu0 %v436
  %1352 = vmatpush1.msra.mxu0 %v435
  %1353 = vmatprep.subr.mxu0 %v440
  %1354 = vmatpush1.msra.mxu0 %v439
  %1355 = vmatprep.subr.mxu0 %v444
  %1356 = vmatpush1.msra.mxu0 %v443
  %1357 = vmatprep.subr.mxu0 %v448
  %1358 = vmatpush1.msra.mxu0 %v447
  %1359 = vmatprep.subr.mxu0 %v452
  %1360 = vmatpush1.msra.mxu0 %v451
  %1361 = vmatprep.subr.mxu0 %v456
  %1362 = vmatpush1.msra.mxu0 %v455
  %1363 = vmatprep.subr.mxu0 %v460
  %1364 = vmatpush1.msra.mxu0 %v459
  %1365 = vmatprep.subr.mxu0 0.0
  %1366 = vmatpush1.msra.mxu0 0.0
  %1367 = vmatprep.subr.mxu0 0.0
  %1368 = vmatpush1.msra.mxu0 0.0
  %1369 = vmatprep.subr.mxu0 0.0
  %1370 = vmatpush1.msra.mxu0 0.0
  %1371 = vmatprep.subr.mxu0 0.0
  %1372 = vmatpush1.msra.mxu0 0.0
  %1373 = vmatprep.subr.mxu0 0.0
  %1374 = vmatpush1.msra.mxu0 0.0
  %1375 = vmatprep.subr.mxu0 0.0
  %1376 = vmatpush1.msra.mxu0 0.0
  %1377 = vmatprep.subr.mxu0 0.0
  %1378 = vmatpush1.msra.mxu0 0.0
  %1379 = vmatprep.subr.mxu0 0.0
  %1380 = vmatpush1.msra.mxu0 0.0
  %1381 = vmatprep.subr.mxu0 0.0
  %1382 = vmatpush1.msra.mxu0 0.0
  %1383 = vmatprep.subr.mxu0 0.0
  %1384 = vmatpush1.msra.mxu0 0.0
  %1385 = vmatprep.subr.mxu0 0.0
  %1386 = vmatpush1.msra.mxu0 0.0
  %1387 = vmatprep.subr.mxu0 0.0
  %1388 = vmatpush1.msra.mxu0 0.0
  %1389 = vmatprep.subr.mxu0 0.0
  %1390 = vmatpush1.msra.mxu0 0.0
  %1391 = vmatprep.subr.mxu0 0.0
  %1392 = vmatpush1.msra.mxu0 0.0
  %1393 = vmatprep.subr.mxu0 0.0
  %1394 = vmatpush1.msra.mxu0 0.0
  %1395 = vmatprep.subr.mxu0 0.0
  %1396 = vmatpush1.msra.mxu0 0.0
  %1397 = vmatprep.mubr.f32.mxu0 0.0
  %1398 = vmatmul.mubr.f32.gmra.mrb[0].mxu0 %v1328
  %v1399 = vpop.f32.mrb[0].mxu0
  %v1400 = vadd.f32 0.0, %v1399
  %v1401 = vpop.f32.mrb[0].mxu0
  %v1402 = vadd.f32 0.0, %v1401
  %1403 = vdwg.mxu0
  %1404 = vmatprep.subr.mxu0 %v402
  %1405 = vmatpush1.msra.mxu0 %v401
  %1406 = vmatprep.subr.mxu0 %v406
  %1407 = vmatpush1.msra.mxu0 %v405
  %1408 = vmatprep.subr.mxu0 %v410
  %1409 = vmatpush1.msra.mxu0 %v409
  %1410 = vmatprep.subr.mxu0 %v414
  %1411 = vmatpush1.msra.mxu0 %v413
  %1412 = vmatprep.subr.mxu0 %v418
  %1413 = vmatpush1.msra.mxu0 %v417
  %1414 = vmatprep.subr.mxu0 %v422
  %1415 = vmatpush1.msra.mxu0 %v421
  %1416 = vmatprep.subr.mxu0 %v426
  %1417 = vmatpush1.msra.mxu0 %v425
  %1418 = vmatprep.subr.mxu0 %v430
  %1419 = vmatpush1.msra.mxu0 %v429
  %1420 = vmatprep.subr.mxu0 %v434
  %1421 = vmatpush1.msra.mxu0 %v433
  %1422 = vmatprep.subr.mxu0 %v438
  %1423 = vmatpush1.msra.mxu0 %v437
  %1424 = vmatprep.subr.mxu0 %v442
  %1425 = vmatpush1.msra.mxu0 %v441
  %1426 = vmatprep.subr.mxu0 %v446
  %1427 = vmatpush1.msra.mxu0 %v445
  %1428 = vmatprep.subr.mxu0 %v450
  %1429 = vmatpush1.msra.mxu0 %v449
  %1430 = vmatprep.subr.mxu0 %v454
  %1431 = vmatpush1.msra.mxu0 %v453
  %1432 = vmatprep.subr.mxu0 %v458
  %1433 = vmatpush1.msra.mxu0 %v457
  %1434 = vmatprep.subr.mxu0 %v462
  %1435 = vmatpush1.msra.mxu0 %v461
  %1436 = vmatprep.subr.mxu0 0.0
  %1437 = vmatpush1.msra.mxu0 0.0
  %1438 = vmatprep.subr.mxu0 0.0
  %1439 = vmatpush1.msra.mxu0 0.0
  %1440 = vmatprep.subr.mxu0 0.0
  %1441 = vmatpush1.msra.mxu0 0.0
  %1442 = vmatprep.subr.mxu0 0.0
  %1443 = vmatpush1.msra.mxu0 0.0
  %1444 = vmatprep.subr.mxu0 0.0
  %1445 = vmatpush1.msra.mxu0 0.0
  %1446 = vmatprep.subr.mxu0 0.0
  %1447 = vmatpush1.msra.mxu0 0.0
  %1448 = vmatprep.subr.mxu0 0.0
  %1449 = vmatpush1.msra.mxu0 0.0
  %1450 = vmatprep.subr.mxu0 0.0
  %1451 = vmatpush1.msra.mxu0 0.0
  %1452 = vmatprep.subr.mxu0 0.0
  %1453 = vmatpush1.msra.mxu0 0.0
  %1454 = vmatprep.subr.mxu0 0.0
  %1455 = vmatpush1.msra.mxu0 0.0
  %1456 = vmatprep.subr.mxu0 0.0
  %1457 = vmatpush1.msra.mxu0 0.0
  %1458 = vmatprep.subr.mxu0 0.0
  %1459 = vmatpush1.msra.mxu0 0.0
  %1460 = vmatprep.subr.mxu0 0.0
  %1461 = vmatpush1.msra.mxu0 0.0
  %1462 = vmatprep.subr.mxu0 0.0
  %1463 = vmatpush1.msra.mxu0 0.0
  %1464 = vmatprep.subr.mxu0 0.0
  %1465 = vmatpush1.msra.mxu0 0.0
  %1466 = vmatprep.subr.mxu0 0.0
  %1467 = vmatpush1.msra.mxu0 0.0
  %1468 = vmatprep.mubr.f32.mxu0 0.0
  %1469 = vmatmul.mubr.f32.gmra.mrb[0].mxu0 %v1328
  %v1470 = vpop.f32.mrb[0].mxu0
  %v1471 = vadd.f32 0.0, %v1470
  %v1472 = vpop.f32.mrb[0].mxu0
  %v1473 = vadd.f32 0.0, %v1472
  %1474 = vdwg.mxu0
  %v1475 = vadd.f32 %v1329, %v1400
  %v1476 = vadd.f32 %v1330, %v1402
  %v1477 = vadd.f32 %v1331, %v1471
  %v1478 = vadd.f32 %v1332, %v1473
  %v1479 = vxor.u32 %v1475, 2147483648
  %v1480 = vmul.f32 %v1479, 1.442695
  %v1481 = vpow.pop %v1480
  %v1482 = vadd.f32 %v1481, 1.0
  %v1483 = vrcp.pop %v1482
  %v1484 = vmul.f32 1.0, %v1483
  %v1485 = vxor.u32 %v1476, 2147483648
  %v1486 = vmul.f32 %v1485, 1.442695
  %v1487 = vpow.pop %v1486
  %v1488 = vadd.f32 %v1487, 1.0
  %v1489 = vrcp.pop %v1488
  %v1490 = vmul.f32 1.0, %v1489
  %v1491 = vtanh.pop %v1477
  %v1492 = vxor.u32 %v1478, 2147483648
  %v1493 = vmul.f32 %v1492, 1.442695
  %v1494 = vpow.pop %v1493
  %v1495 = vadd.f32 %v1494, 1.0
  %v1496 = vrcp.pop %v1495
  %v1497 = vmul.f32 1.0, %v1496
  %v1498 = vmul.f32 %v1490, %v1326
  %v1499 = vmul.f32 %v1484, %v1491
  %v1500 = vadd.f32 %v1498, %v1499
  %v1501 = vtanh.pop %v1500
  %v1502 = vmul.f32 %v1497, %v1501
  %v1503 = vld [vmem:[#allocation2 + $0xc0] sm:$0xff]
  %v1504 = vld [vmem:[#allocation2 + $0xc8] sm:$0xff]
  %v1505 = vld [vmem:[#allocation2 + $0xd0] sm:$0xff]
  %v1506 = vld [vmem:[#allocation2 + $0xd8] sm:$0xff]
  %1507 = vmatprep.subr.mxu0 %v400
  %1508 = vmatpush1.msra.mxu0 %v399
  %1509 = vmatprep.subr.mxu0 %v404
  %1510 = vmatpush1.msra.mxu0 %v403
  %1511 = vmatprep.subr.mxu0 %v408
  %1512 = vmatpush1.msra.mxu0 %v407
  %1513 = vmatprep.subr.mxu0 %v412
  %1514 = vmatpush1.msra.mxu0 %v411
  %1515 = vmatprep.subr.mxu0 %v416
  %1516 = vmatpush1.msra.mxu0 %v415
  %1517 = vmatprep.subr.mxu0 %v420
  %1518 = vmatpush1.msra.mxu0 %v419
  %1519 = vmatprep.subr.mxu0 %v424
  %1520 = vmatpush1.msra.mxu0 %v423
  %1521 = vmatprep.subr.mxu0 %v428
  %1522 = vmatpush1.msra.mxu0 %v427
  %1523 = vmatprep.subr.mxu0 %v432
  %1524 = vmatpush1.msra.mxu0 %v431
  %1525 = vmatprep.subr.mxu0 %v436
  %1526 = vmatpush1.msra.mxu0 %v435
  %1527 = vmatprep.subr.mxu0 %v440
  %1528 = vmatpush1.msra.mxu0 %v439
  %1529 = vmatprep.subr.mxu0 %v444
  %1530 = vmatpush1.msra.mxu0 %v443
  %1531 = vmatprep.subr.mxu0 %v448
  %1532 = vmatpush1.msra.mxu0 %v447
  %1533 = vmatprep.subr.mxu0 %v452
  %1534 = vmatpush1.msra.mxu0 %v451
  %1535 = vmatprep.subr.mxu0 %v456
  %1536 = vmatpush1.msra.mxu0 %v455
  %1537 = vmatprep.subr.mxu0 %v460
  %1538 = vmatpush1.msra.mxu0 %v459
  %1539 = vmatprep.subr.mxu0 0.0
  %1540 = vmatpush1.msra.mxu0 0.0
  %1541 = vmatprep.subr.mxu0 0.0
  %1542 = vmatpush1.msra.mxu0 0.0
  %1543 = vmatprep.subr.mxu0 0.0
  %1544 = vmatpush1.msra.mxu0 0.0
  %1545 = vmatprep.subr.mxu0 0.0
  %1546 = vmatpush1.msra.mxu0 0.0
  %1547 = vmatprep.subr.mxu0 0.0
  %1548 = vmatpush1.msra.mxu0 0.0
  %1549 = vmatprep.subr.mxu0 0.0
  %1550 = vmatpush1.msra.mxu0 0.0
  %1551 = vmatprep.subr.mxu0 0.0
  %1552 = vmatpush1.msra.mxu0 0.0
  %1553 = vmatprep.subr.mxu0 0.0
  %1554 = vmatpush1.msra.mxu0 0.0
  %1555 = vmatprep.subr.mxu0 0.0
  %1556 = vmatpush1.msra.mxu0 0.0
  %1557 = vmatprep.subr.mxu0 0.0
  %1558 = vmatpush1.msra.mxu0 0.0
  %1559 = vmatprep.subr.mxu0 0.0
  %1560 = vmatpush1.msra.mxu0 0.0
  %1561 = vmatprep.subr.mxu0 0.0
  %1562 = vmatpush1.msra.mxu0 0.0
  %1563 = vmatprep.subr.mxu0 0.0
  %1564 = vmatpush1.msra.mxu0 0.0
  %1565 = vmatprep.subr.mxu0 0.0
  %1566 = vmatpush1.msra.mxu0 0.0
  %1567 = vmatprep.subr.mxu0 0.0
  %1568 = vmatpush1.msra.mxu0 0.0
  %1569 = vmatprep.subr.mxu0 0.0
  %1570 = vmatpush1.msra.mxu0 0.0
  %1571 = vmatprep.mubr.f32.mxu0 0.0
  %1572 = vmatmul.mubr.f32.gmra.mrb[0].mxu0 %v1502
  %v1573 = vpop.f32.mrb[0].mxu0
  %v1574 = vadd.f32 0.0, %v1573
  %v1575 = vpop.f32.mrb[0].mxu0
  %v1576 = vadd.f32 0.0, %v1575
  %1577 = vdwg.mxu0
  %1578 = vmatprep.subr.mxu0 %v402
  %1579 = vmatpush1.msra.mxu0 %v401
  %1580 = vmatprep.subr.mxu0 %v406
  %1581 = vmatpush1.msra.mxu0 %v405
  %1582 = vmatprep.subr.mxu0 %v410
  %1583 = vmatpush1.msra.mxu0 %v409
  %1584 = vmatprep.subr.mxu0 %v414
  %1585 = vmatpush1.msra.mxu0 %v413
  %1586 = vmatprep.subr.mxu0 %v418
  %1587 = vmatpush1.msra.mxu0 %v417
  %1588 = vmatprep.subr.mxu0 %v422
  %1589 = vmatpush1.msra.mxu0 %v421
  %1590 = vmatprep.subr.mxu0 %v426
  %1591 = vmatpush1.msra.mxu0 %v425
  %1592 = vmatprep.subr.mxu0 %v430
  %1593 = vmatpush1.msra.mxu0 %v429
  %1594 = vmatprep.subr.mxu0 %v434
  %1595 = vmatpush1.msra.mxu0 %v433
  %1596 = vmatprep.subr.mxu0 %v438
  %1597 = vmatpush1.msra.mxu0 %v437
  %1598 = vmatprep.subr.mxu0 %v442
  %1599 = vmatpush1.msra.mxu0 %v441
  %1600 = vmatprep.subr.mxu0 %v446
  %1601 = vmatpush1.msra.mxu0 %v445
  %1602 = vmatprep.subr.mxu0 %v450
  %1603 = vmatpush1.msra.mxu0 %v449
  %1604 = vmatprep.subr.mxu0 %v454
  %1605 = vmatpush1.msra.mxu0 %v453
  %1606 = vmatprep.subr.mxu0 %v458
  %1607 = vmatpush1.msra.mxu0 %v457
  %1608 = vmatprep.subr.mxu0 %v462
  %1609 = vmatpush1.msra.mxu0 %v461
  %1610 = vmatprep.subr.mxu0 0.0
  %1611 = vmatpush1.msra.mxu0 0.0
  %1612 = vmatprep.subr.mxu0 0.0
  %1613 = vmatpush1.msra.mxu0 0.0
  %1614 = vmatprep.subr.mxu0 0.0
  %1615 = vmatpush1.msra.mxu0 0.0
  %1616 = vmatprep.subr.mxu0 0.0
  %1617 = vmatpush1.msra.mxu0 0.0
  %1618 = vmatprep.subr.mxu0 0.0
  %1619 = vmatpush1.msra.mxu0 0.0
  %1620 = vmatprep.subr.mxu0 0.0
  %1621 = vmatpush1.msra.mxu0 0.0
  %1622 = vmatprep.subr.mxu0 0.0
  %1623 = vmatpush1.msra.mxu0 0.0
  %1624 = vmatprep.subr.mxu0 0.0
  %1625 = vmatpush1.msra.mxu0 0.0
  %1626 = vmatprep.subr.mxu0 0.0
  %1627 = vmatpush1.msra.mxu0 0.0
  %1628 = vmatprep.subr.mxu0 0.0
  %1629 = vmatpush1.msra.mxu0 0.0
  %1630 = vmatprep.subr.mxu0 0.0
  %1631 = vmatpush1.msra.mxu0 0.0
  %1632 = vmatprep.subr.mxu0 0.0
  %1633 = vmatpush1.msra.mxu0 0.0
  %1634 = vmatprep.subr.mxu0 0.0
  %1635 = vmatpush1.msra.mxu0 0.0
  %1636 = vmatprep.subr.mxu0 0.0
  %1637 = vmatpush1.msra.mxu0 0.0
  %1638 = vmatprep.subr.mxu0 0.0
  %1639 = vmatpush1.msra.mxu0 0.0
  %1640 = vmatprep.subr.mxu0 0.0
  %1641 = vmatpush1.msra.mxu0 0.0
  %1642 = vmatprep.mubr.f32.mxu0 0.0
  %1643 = vmatmul.mubr.f32.gmra.mrb[0].mxu0 %v1502
  %v1644 = vpop.f32.mrb[0].mxu0
  %v1645 = vadd.f32 0.0, %v1644
  %v1646 = vpop.f32.mrb[0].mxu0
  %v1647 = vadd.f32 0.0, %v1646
  %1648 = vdwg.mxu0
  %v1649 = vadd.f32 %v1503, %v1574
  %v1650 = vadd.f32 %v1504, %v1576
  %v1651 = vadd.f32 %v1505, %v1645
  %v1652 = vadd.f32 %v1506, %v1647
  %v1653 = vxor.u32 %v1649, 2147483648
  %v1654 = vmul.f32 %v1653, 1.442695
  %v1655 = vpow.pop %v1654
  %v1656 = vadd.f32 %v1655, 1.0
  %v1657 = vrcp.pop %v1656
  %v1658 = vmul.f32 1.0, %v1657
  %v1659 = vxor.u32 %v1650, 2147483648
  %v1660 = vmul.f32 %v1659, 1.442695
  %v1661 = vpow.pop %v1660
  %v1662 = vadd.f32 %v1661, 1.0
  %v1663 = vrcp.pop %v1662
  %v1664 = vmul.f32 1.0, %v1663
  %v1665 = vtanh.pop %v1651
  %v1666 = vxor.u32 %v1652, 2147483648
  %v1667 = vmul.f32 %v1666, 1.442695
  %v1668 = vpow.pop %v1667
  %v1669 = vadd.f32 %v1668, 1.0
  %v1670 = vrcp.pop %v1669
  %v1671 = vmul.f32 1.0, %v1670
  %v1672 = vmul.f32 %v1664, %v1500
  %v1673 = vmul.f32 %v1658, %v1665
  %v1674 = vadd.f32 %v1672, %v1673
  %v1675 = vtanh.pop %v1674
  %v1676 = vmul.f32 %v1671, %v1675
  %v1677 = vld [vmem:[#allocation2 + $0xe0] sm:$0xff]
  %v1678 = vld [vmem:[#allocation2 + $0xe8] sm:$0xff]
  %v1679 = vld [vmem:[#allocation2 + $0xf0] sm:$0xff]
  %v1680 = vld [vmem:[#allocation2 + $0xf8] sm:$0xff]
  %1681 = vmatprep.subr.mxu0 %v400
  %1682 = vmatpush1.msra.mxu0 %v399
  %1683 = vmatprep.subr.mxu0 %v404
  %1684 = vmatpush1.msra.mxu0 %v403
  %1685 = vmatprep.subr.mxu0 %v408
  %1686 = vmatpush1.msra.mxu0 %v407
  %1687 = vmatprep.subr.mxu0 %v412
  %1688 = vmatpush1.msra.mxu0 %v411
  %1689 = vmatprep.subr.mxu0 %v416
  %1690 = vmatpush1.msra.mxu0 %v415
  %1691 = vmatprep.subr.mxu0 %v420
  %1692 = vmatpush1.msra.mxu0 %v419
  %1693 = vmatprep.subr.mxu0 %v424
  %1694 = vmatpush1.msra.mxu0 %v423
  %1695 = vmatprep.subr.mxu0 %v428
  %1696 = vmatpush1.msra.mxu0 %v427
  %1697 = vmatprep.subr.mxu0 %v432
  %1698 = vmatpush1.msra.mxu0 %v431
  %1699 = vmatprep.subr.mxu0 %v436
  %1700 = vmatpush1.msra.mxu0 %v435
  %1701 = vmatprep.subr.mxu0 %v440
  %1702 = vmatpush1.msra.mxu0 %v439
  %1703 = vmatprep.subr.mxu0 %v444
  %1704 = vmatpush1.msra.mxu0 %v443
  %1705 = vmatprep.subr.mxu0 %v448
  %1706 = vmatpush1.msra.mxu0 %v447
  %1707 = vmatprep.subr.mxu0 %v452
  %1708 = vmatpush1.msra.mxu0 %v451
  %1709 = vmatprep.subr.mxu0 %v456
  %1710 = vmatpush1.msra.mxu0 %v455
  %1711 = vmatprep.subr.mxu0 %v460
  %1712 = vmatpush1.msra.mxu0 %v459
  %1713 = vmatprep.subr.mxu0 0.0
  %1714 = vmatpush1.msra.mxu0 0.0
  %1715 = vmatprep.subr.mxu0 0.0
  %1716 = vmatpush1.msra.mxu0 0.0
  %1717 = vmatprep.subr.mxu0 0.0
  %1718 = vmatpush1.msra.mxu0 0.0
  %1719 = vmatprep.subr.mxu0 0.0
  %1720 = vmatpush1.msra.mxu0 0.0
  %1721 = vmatprep.subr.mxu0 0.0
  %1722 = vmatpush1.msra.mxu0 0.0
  %1723 = vmatprep.subr.mxu0 0.0
  %1724 = vmatpush1.msra.mxu0 0.0
  %1725 = vmatprep.subr.mxu0 0.0
  %1726 = vmatpush1.msra.mxu0 0.0
  %1727 = vmatprep.subr.mxu0 0.0
  %1728 = vmatpush1.msra.mxu0 0.0
  %1729 = vmatprep.subr.mxu0 0.0
  %1730 = vmatpush1.msra.mxu0 0.0
  %1731 = vmatprep.subr.mxu0 0.0
  %1732 = vmatpush1.msra.mxu0 0.0
  %1733 = vmatprep.subr.mxu0 0.0
  %1734 = vmatpush1.msra.mxu0 0.0
  %1735 = vmatprep.subr.mxu0 0.0
  %1736 = vmatpush1.msra.mxu0 0.0
  %1737 = vmatprep.subr.mxu0 0.0
  %1738 = vmatpush1.msra.mxu0 0.0
  %1739 = vmatprep.subr.mxu0 0.0
  %1740 = vmatpush1.msra.mxu0 0.0
  %1741 = vmatprep.subr.mxu0 0.0
  %1742 = vmatpush1.msra.mxu0 0.0
  %1743 = vmatprep.subr.mxu0 0.0
  %1744 = vmatpush1.msra.mxu0 0.0
  %1745 = vmatprep.mubr.f32.mxu0 0.0
  %1746 = vmatmul.mubr.f32.gmra.mrb[0].mxu0 %v1676
  %v1747 = vpop.f32.mrb[0].mxu0
  %v1748 = vadd.f32 0.0, %v1747
  %v1749 = vpop.f32.mrb[0].mxu0
  %v1750 = vadd.f32 0.0, %v1749
  %1751 = vdwg.mxu0
  %1752 = vmatprep.subr.mxu0 %v402
  %1753 = vmatpush1.msra.mxu0 %v401
  %1754 = vmatprep.subr.mxu0 %v406
  %1755 = vmatpush1.msra.mxu0 %v405
  %1756 = vmatprep.subr.mxu0 %v410
  %1757 = vmatpush1.msra.mxu0 %v409
  %1758 = vmatprep.subr.mxu0 %v414
  %1759 = vmatpush1.msra.mxu0 %v413
  %1760 = vmatprep.subr.mxu0 %v418
  %1761 = vmatpush1.msra.mxu0 %v417
  %1762 = vmatprep.subr.mxu0 %v422
  %1763 = vmatpush1.msra.mxu0 %v421
  %1764 = vmatprep.subr.mxu0 %v426
  %1765 = vmatpush1.msra.mxu0 %v425
  %1766 = vmatprep.subr.mxu0 %v430
  %1767 = vmatpush1.msra.mxu0 %v429
  %1768 = vmatprep.subr.mxu0 %v434
  %1769 = vmatpush1.msra.mxu0 %v433
  %1770 = vmatprep.subr.mxu0 %v438
  %1771 = vmatpush1.msra.mxu0 %v437
  %1772 = vmatprep.subr.mxu0 %v442
  %1773 = vmatpush1.msra.mxu0 %v441
  %1774 = vmatprep.subr.mxu0 %v446
  %1775 = vmatpush1.msra.mxu0 %v445
  %1776 = vmatprep.subr.mxu0 %v450
  %1777 = vmatpush1.msra.mxu0 %v449
  %1778 = vmatprep.subr.mxu0 %v454
  %1779 = vmatpush1.msra.mxu0 %v453
  %1780 = vmatprep.subr.mxu0 %v458
  %1781 = vmatpush1.msra.mxu0 %v457
  %1782 = vmatprep.subr.mxu0 %v462
  %1783 = vmatpush1.msra.mxu0 %v461
  %1784 = vmatprep.subr.mxu0 0.0
  %1785 = vmatpush1.msra.mxu0 0.0
  %1786 = vmatprep.subr.mxu0 0.0
  %1787 = vmatpush1.msra.mxu0 0.0
  %1788 = vmatprep.subr.mxu0 0.0
  %1789 = vmatpush1.msra.mxu0 0.0
  %1790 = vmatprep.subr.mxu0 0.0
  %1791 = vmatpush1.msra.mxu0 0.0
  %1792 = vmatprep.subr.mxu0 0.0
  %1793 = vmatpush1.msra.mxu0 0.0
  %1794 = vmatprep.subr.mxu0 0.0
  %1795 = vmatpush1.msra.mxu0 0.0
  %1796 = vmatprep.subr.mxu0 0.0
  %1797 = vmatpush1.msra.mxu0 0.0
  %1798 = vmatprep.subr.mxu0 0.0
  %1799 = vmatpush1.msra.mxu0 0.0
  %1800 = vmatprep.subr.mxu0 0.0
  %1801 = vmatpush1.msra.mxu0 0.0
  %1802 = vmatprep.subr.mxu0 0.0
  %1803 = vmatpush1.msra.mxu0 0.0
  %1804 = vmatprep.subr.mxu0 0.0
  %1805 = vmatpush1.msra.mxu0 0.0
  %1806 = vmatprep.subr.mxu0 0.0
  %1807 = vmatpush1.msra.mxu0 0.0
  %1808 = vmatprep.subr.mxu0 0.0
  %1809 = vmatpush1.msra.mxu0 0.0
  %1810 = vmatprep.subr.mxu0 0.0
  %1811 = vmatpush1.msra.mxu0 0.0
  %1812 = vmatprep.subr.mxu0 0.0
  %1813 = vmatpush1.msra.mxu0 0.0
  %1814 = vmatprep.subr.mxu0 0.0
  %1815 = vmatpush1.msra.mxu0 0.0
  %1816 = vmatprep.mubr.f32.mxu0 0.0
  %1817 = vmatmul.mubr.f32.gmra.mrb[0].mxu0 %v1676
  %v1818 = vpop.f32.mrb[0].mxu0
  %v1819 = vadd.f32 0.0, %v1818
  %v1820 = vpop.f32.mrb[0].mxu0
  %v1821 = vadd.f32 0.0, %v1820
  %1822 = vdwg.mxu0
  %v1823 = vadd.f32 %v1677, %v1748
  %v1824 = vadd.f32 %v1678, %v1750
  %v1825 = vadd.f32 %v1679, %v1819
  %v1826 = vadd.f32 %v1680, %v1821
  %v1827 = vxor.u32 %v1823, 2147483648
  %v1828 = vmul.f32 %v1827, 1.442695
  %v1829 = vpow.pop %v1828
  %v1830 = vadd.f32 %v1829, 1.0
  %v1831 = vrcp.pop %v1830
  %v1832 = vmul.f32 1.0, %v1831
  %v1833 = vxor.u32 %v1824, 2147483648
  %v1834 = vmul.f32 %v1833, 1.442695
  %v1835 = vpow.pop %v1834
  %v1836 = vadd.f32 %v1835, 1.0
  %v1837 = vrcp.pop %v1836
  %v1838 = vmul.f32 1.0, %v1837
  %v1839 = vtanh.pop %v1825
  %v1840 = vxor.u32 %v1826, 2147483648
  %v1841 = vmul.f32 %v1840, 1.442695
  %v1842 = vpow.pop %v1841
  %v1843 = vadd.f32 %v1842, 1.0
  %v1844 = vrcp.pop %v1843
  %v1845 = vmul.f32 1.0, %v1844
  %v1846 = vmul.f32 %v1838, %v1674
  %v1847 = vmul.f32 %v1832, %v1839
  %v1848 = vadd.f32 %v1846, %v1847
  %v1849 = vtanh.pop %v1848
  %v1850 = vmul.f32 %v1845, %v1849
  %1851 = vst [vmem:[%s12] sm:$0xff] %v1850
  %1852 = vst [vmem:[%s13] sm:$0xff] %v1848
  %v1853 = vld [vmem:[%s4] sm:$0xff]
  %v1854 = vld [vmem:[%s4 + $0x8] sm:$0xff]
  %v1855 = vld [vmem:[%s4 + $0x10] sm:$0xff]
  %v1856 = vld [vmem:[%s4 + $0x18] sm:$0xff]
  %v1857 = vld [vmem:[%s4 + $0x20] sm:$0xff]
  %v1858 = vld [vmem:[%s4 + $0x28] sm:$0xff]
  %v1859 = vld [vmem:[%s4 + $0x30] sm:$0xff]
  %v1860 = vld [vmem:[%s4 + $0x38] sm:$0xff]
  %v1861 = vld [vmem:[%s4 + $0x40] sm:$0xff]
  %v1862 = vld [vmem:[%s4 + $0x48] sm:$0xff]
  %v1863 = vld [vmem:[%s4 + $0x50] sm:$0xff]
  %v1864 = vld [vmem:[%s4 + $0x58] sm:$0xff]
  %v1865 = vld [vmem:[%s4 + $0x60] sm:$0xff]
  %v1866 = vld [vmem:[%s4 + $0x68] sm:$0xff]
  %v1867 = vld [vmem:[%s4 + $0x70] sm:$0xff]
  %v1868 = vld [vmem:[%s4 + $0x78] sm:$0xff]
  %v1869 = vld [vmem:[%s4 + $0x80] sm:$0xff]
  %v1870 = vld [vmem:[%s4 + $0x88] sm:$0xff]
  %v1871 = vld [vmem:[%s4 + $0x90] sm:$0xff]
  %v1872 = vld [vmem:[%s4 + $0x98] sm:$0xff]
  %v1873 = vld [vmem:[%s4 + $0xa0] sm:$0xff]
  %v1874 = vld [vmem:[%s4 + $0xa8] sm:$0xff]
  %v1875 = vld [vmem:[%s4 + $0xb0] sm:$0xff]
  %v1876 = vld [vmem:[%s4 + $0xb8] sm:$0xff]
  %v1877 = vld [vmem:[%s4 + $0xc0] sm:$0xff]
  %v1878 = vld [vmem:[%s4 + $0xc8] sm:$0xff]
  %v1879 = vld [vmem:[%s4 + $0xd0] sm:$0xff]
  %v1880 = vld [vmem:[%s4 + $0xd8] sm:$0xff]
  %v1881 = vld [vmem:[%s4 + $0xe0] sm:$0xff]
  %v1882 = vld [vmem:[%s4 + $0xe8] sm:$0xff]
  %v1883 = vld [vmem:[%s4 + $0xf0] sm:$0xff]
  %v1884 = vld [vmem:[%s4 + $0xf8] sm:$0xff]
  %v1885 = vld [vmem:[%s4 + $0x100] sm:$0xff]
  %v1886 = vld [vmem:[%s4 + $0x108] sm:$0xff]
  %v1887 = vld [vmem:[%s4 + $0x110] sm:$0xff]
  %v1888 = vld [vmem:[%s4 + $0x118] sm:$0xff]
  %v1889 = vld [vmem:[%s4 + $0x120] sm:$0xff]
  %v1890 = vld [vmem:[%s4 + $0x128] sm:$0xff]
  %v1891 = vld [vmem:[%s4 + $0x130] sm:$0xff]
  %v1892 = vld [vmem:[%s4 + $0x138] sm:$0xff]
  %v1893 = vld [vmem:[%s4 + $0x140] sm:$0xff]
  %v1894 = vld [vmem:[%s4 + $0x148] sm:$0xff]
  %v1895 = vld [vmem:[%s4 + $0x150] sm:$0xff]
  %v1896 = vld [vmem:[%s4 + $0x158] sm:$0xff]
  %v1897 = vld [vmem:[%s4 + $0x160] sm:$0xff]
  %v1898 = vld [vmem:[%s4 + $0x168] sm:$0xff]
  %v1899 = vld [vmem:[%s4 + $0x170] sm:$0xff]
  %v1900 = vld [vmem:[%s4 + $0x178] sm:$0xff]
  %v1901 = vld [vmem:[%s4 + $0x180] sm:$0xff]
  %v1902 = vld [vmem:[%s4 + $0x188] sm:$0xff]
  %v1903 = vld [vmem:[%s4 + $0x190] sm:$0xff]
  %v1904 = vld [vmem:[%s4 + $0x198] sm:$0xff]
  %v1905 = vld [vmem:[%s4 + $0x1a0] sm:$0xff]
  %v1906 = vld [vmem:[%s4 + $0x1a8] sm:$0xff]
  %v1907 = vld [vmem:[%s4 + $0x1b0] sm:$0xff]
  %v1908 = vld [vmem:[%s4 + $0x1b8] sm:$0xff]
  %v1909 = vld [vmem:[%s4 + $0x1c0] sm:$0xff]
  %v1910 = vld [vmem:[%s4 + $0x1c8] sm:$0xff]
  %v1911 = vld [vmem:[%s4 + $0x1d0] sm:$0xff]
  %v1912 = vld [vmem:[%s4 + $0x1d8] sm:$0xff]
  %v1913 = vld [vmem:[%s4 + $0x1e0] sm:$0xff]
  %v1914 = vld [vmem:[%s4 + $0x1e8] sm:$0xff]
  %v1915 = vld [vmem:[%s4 + $0x1f0] sm:$0xff]
  %v1916 = vld [vmem:[%s4 + $0x1f8] sm:$0xff]
  %v1917 = vld [vmem:[%s6] sm:$0xf]
  %v1919 = vlaneseq
  %v1920 = vshrl.u32 %v1919, 7
  %v1921 = vsub.s32 0, %v1920
  %v1922 = vrot.slane %v1917, %v1921
  %v1923 = vlaneseq
  %v1924 = vshrl.u32 %v1923, 7
  %v1925 = vsub.s32 1, %v1924
  %v1926 = vrot.slane %v1917, %v1925
  %v1927 = vlaneseq
  %v1928 = vshrl.u32 %v1927, 7
  %v1929 = vsub.s32 2, %v1928
  %v1930 = vrot.slane %v1917, %v1929
  %v1931 = vlaneseq
  %v1932 = vshrl.u32 %v1931, 7
  %v1933 = vsub.s32 3, %v1932
  %v1934 = vrot.slane %v1917, %v1933
  %1939 = vmatprep.subr.mxu0 %v1854
  %1940 = vmatpush1.msra.mxu0 %v1853
  %1941 = vmatprep.subr.mxu0 %v1858
  %1942 = vmatpush1.msra.mxu0 %v1857
  %1943 = vmatprep.subr.mxu0 %v1862
  %1944 = vmatpush1.msra.mxu0 %v1861
  %1945 = vmatprep.subr.mxu0 %v1866
  %1946 = vmatpush1.msra.mxu0 %v1865
  %1947 = vmatprep.subr.mxu0 %v1870
  %1948 = vmatpush1.msra.mxu0 %v1869
  %1949 = vmatprep.subr.mxu0 %v1874
  %1950 = vmatpush1.msra.mxu0 %v1873
  %1951 = vmatprep.subr.mxu0 %v1878
  %1952 = vmatpush1.msra.mxu0 %v1877
  %1953 = vmatprep.subr.mxu0 %v1882
  %1954 = vmatpush1.msra.mxu0 %v1881
  %1955 = vmatprep.subr.mxu0 %v1886
  %1956 = vmatpush1.msra.mxu0 %v1885
  %1957 = vmatprep.subr.mxu0 %v1890
  %1958 = vmatpush1.msra.mxu0 %v1889
  %1959 = vmatprep.subr.mxu0 %v1894
  %1960 = vmatpush1.msra.mxu0 %v1893
  %1961 = vmatprep.subr.mxu0 %v1898
  %1962 = vmatpush1.msra.mxu0 %v1897
  %1963 = vmatprep.subr.mxu0 %v1902
  %1964 = vmatpush1.msra.mxu0 %v1901
  %1965 = vmatprep.subr.mxu0 %v1906
  %1966 = vmatpush1.msra.mxu0 %v1905
  %1967 = vmatprep.subr.mxu0 %v1910
  %1968 = vmatpush1.msra.mxu0 %v1909
  %1969 = vmatprep.subr.mxu0 %v1914
  %1970 = vmatpush1.msra.mxu0 %v1913
  %1971 = vmatprep.subr.mxu0 0.0
  %1972 = vmatpush1.msra.mxu0 0.0
  %1973 = vmatprep.subr.mxu0 0.0
  %1974 = vmatpush1.msra.mxu0 0.0
  %1975 = vmatprep.subr.mxu0 0.0
  %1976 = vmatpush1.msra.mxu0 0.0
  %1977 = vmatprep.subr.mxu0 0.0
  %1978 = vmatpush1.msra.mxu0 0.0
  %1979 = vmatprep.subr.mxu0 0.0
  %1980 = vmatpush1.msra.mxu0 0.0
  %1981 = vmatprep.subr.mxu0 0.0
  %1982 = vmatpush1.msra.mxu0 0.0
  %1983 = vmatprep.subr.mxu0 0.0
  %1984 = vmatpush1.msra.mxu0 0.0
  %1985 = vmatprep.subr.mxu0 0.0
  %1986 = vmatpush1.msra.mxu0 0.0
  %1987 = vmatprep.subr.mxu0 0.0
  %1988 = vmatpush1.msra.mxu0 0.0
  %1989 = vmatprep.subr.mxu0 0.0
  %1990 = vmatpush1.msra.mxu0 0.0
  %1991 = vmatprep.subr.mxu0 0.0
  %1992 = vmatpush1.msra.mxu0 0.0
  %1993 = vmatprep.subr.mxu0 0.0
  %1994 = vmatpush1.msra.mxu0 0.0
  %1995 = vmatprep.subr.mxu0 0.0
  %1996 = vmatpush1.msra.mxu0 0.0
  %1997 = vmatprep.subr.mxu0 0.0
  %1998 = vmatpush1.msra.mxu0 0.0
  %1999 = vmatprep.subr.mxu0 0.0
  %2000 = vmatpush1.msra.mxu0 0.0
  %2001 = vmatprep.subr.mxu0 0.0
  %2002 = vmatpush1.msra.mxu0 0.0
  %2003 = vmatprep.mubr.f32.mxu0 0.0
  %2004 = vmatmul.mubr.f32.gmra.mrb[0].mxu0 %v632
  %v2005 = vpop.f32.mrb[0].mxu0
  %v2006 = vadd.f32 %v1922, %v2005
  %v2007 = vpop.f32.mrb[0].mxu0
  %v2008 = vadd.f32 %v1926, %v2007
  %2009 = vmatprep.mubr.f32.mxu0 0.0
  %2010 = vmatmul.mubr.f32.gmra.mrb[0].mxu0 %v806
  %v2011 = vpop.f32.mrb[0].mxu0
  %v2012 = vadd.f32 %v1922, %v2011
  %v2013 = vpop.f32.mrb[0].mxu0
  %v2014 = vadd.f32 %v1926, %v2013
  %2015 = vmatprep.mubr.f32.mxu0 0.0
  %2016 = vmatmul.mubr.f32.gmra.mrb[0].mxu0 %v980
  %v2017 = vpop.f32.mrb[0].mxu0
  %v2018 = vadd.f32 %v1922, %v2017
  %v2019 = vpop.f32.mrb[0].mxu0
  %v2020 = vadd.f32 %v1926, %v2019
  %2021 = vmatprep.mubr.f32.mxu0 0.0
  %2022 = vmatmul.mubr.f32.gmra.mrb[0].mxu0 %v1154
  %v2023 = vpop.f32.mrb[0].mxu0
  %v2024 = vadd.f32 %v1922, %v2023
  %v2025 = vpop.f32.mrb[0].mxu0
  %v2026 = vadd.f32 %v1926, %v2025
  %2027 = vmatprep.mubr.f32.mxu0 0.0
  %2028 = vmatmul.mubr.f32.gmra.mrb[0].mxu0 %v1328
  %v2029 = vpop.f32.mrb[0].mxu0
  %v2030 = vadd.f32 %v1922, %v2029
  %v2031 = vpop.f32.mrb[0].mxu0
  %v2032 = vadd.f32 %v1926, %v2031
  %2033 = vmatprep.mubr.f32.mxu0 0.0
  %2034 = vmatmul.mubr.f32.gmra.mrb[0].mxu0 %v1502
  %v2035 = vpop.f32.mrb[0].mxu0
  %v2036 = vadd.f32 %v1922, %v2035
  %v2037 = vpop.f32.mrb[0].mxu0
  %v2038 = vadd.f32 %v1926, %v2037
  %2039 = vmatprep.mubr.f32.mxu0 0.0
  %2040 = vmatmul.mubr.f32.gmra.mrb[0].mxu0 %v1676
  %v2041 = vpop.f32.mrb[0].mxu0
  %v2042 = vadd.f32 %v1922, %v2041
  %v2043 = vpop.f32.mrb[0].mxu0
  %v2044 = vadd.f32 %v1926, %v2043
  %2045 = vmatprep.mubr.f32.mxu0 0.0
  %2046 = vmatmul.mubr.f32.gmra.mrb[0].mxu0 %v1850
  %v2047 = vpop.f32.mrb[0].mxu0
  %v2048 = vadd.f32 %v1922, %v2047
  %v2049 = vpop.f32.mrb[0].mxu0
  %v2050 = vadd.f32 %v1926, %v2049
  %2051 = vdwg.mxu0
  %2052 = vmatprep.subr.mxu0 %v1856
  %2053 = vmatpush1.msra.mxu0 %v1855
  %2054 = vmatprep.subr.mxu0 %v1860
  %2055 = vmatpush1.msra.mxu0 %v1859
  %2056 = vmatprep.subr.mxu0 %v1864
  %2057 = vmatpush1.msra.mxu0 %v1863
  %2058 = vmatprep.subr.mxu0 %v1868
  %2059 = vmatpush1.msra.mxu0 %v1867
  %2060 = vmatprep.subr.mxu0 %v1872
  %2061 = vmatpush1.msra.mxu0 %v1871
  %2062 = vmatprep.subr.mxu0 %v1876
  %2063 = vmatpush1.msra.mxu0 %v1875
  %2064 = vmatprep.subr.mxu0 %v1880
  %2065 = vmatpush1.msra.mxu0 %v1879
  %2066 = vmatprep.subr.mxu0 %v1884
  %2067 = vmatpush1.msra.mxu0 %v1883
  %2068 = vmatprep.subr.mxu0 %v1888
  %2069 = vmatpush1.msra.mxu0 %v1887
  %2070 = vmatprep.subr.mxu0 %v1892
  %2071 = vmatpush1.msra.mxu0 %v1891
  %2072 = vmatprep.subr.mxu0 %v1896
  %2073 = vmatpush1.msra.mxu0 %v1895
  %2074 = vmatprep.subr.mxu0 %v1900
  %2075 = vmatpush1.msra.mxu0 %v1899
  %2076 = vmatprep.subr.mxu0 %v1904
  %2077 = vmatpush1.msra.mxu0 %v1903
  %2078 = vmatprep.subr.mxu0 %v1908
  %2079 = vmatpush1.msra.mxu0 %v1907
  %2080 = vmatprep.subr.mxu0 %v1912
  %2081 = vmatpush1.msra.mxu0 %v1911
  %2082 = vmatprep.subr.mxu0 %v1916
  %2083 = vmatpush1.msra.mxu0 %v1915
  %2084 = vmatprep.subr.mxu0 0.0
  %2085 = vmatpush1.msra.mxu0 0.0
  %2086 = vmatprep.subr.mxu0 0.0
  %2087 = vmatpush1.msra.mxu0 0.0
  %2088 = vmatprep.subr.mxu0 0.0
  %2089 = vmatpush1.msra.mxu0 0.0
  %2090 = vmatprep.subr.mxu0 0.0
  %2091 = vmatpush1.msra.mxu0 0.0
  %2092 = vmatprep.subr.mxu0 0.0
  %2093 = vmatpush1.msra.mxu0 0.0
  %2094 = vmatprep.subr.mxu0 0.0
  %2095 = vmatpush1.msra.mxu0 0.0
  %2096 = vmatprep.subr.mxu0 0.0
  %2097 = vmatpush1.msra.mxu0 0.0
  %2098 = vmatprep.subr.mxu0 0.0
  %2099 = vmatpush1.msra.mxu0 0.0
  %2100 = vmatprep.subr.mxu0 0.0
  %2101 = vmatpush1.msra.mxu0 0.0
  %2102 = vmatprep.subr.mxu0 0.0
  %2103 = vmatpush1.msra.mxu0 0.0
  %2104 = vmatprep.subr.mxu0 0.0
  %2105 = vmatpush1.msra.mxu0 0.0
  %2106 = vmatprep.subr.mxu0 0.0
  %2107 = vmatpush1.msra.mxu0 0.0
  %2108 = vmatprep.subr.mxu0 0.0
  %2109 = vmatpush1.msra.mxu0 0.0
  %2110 = vmatprep.subr.mxu0 0.0
  %2111 = vmatpush1.msra.mxu0 0.0
  %2112 = vmatprep.subr.mxu0 0.0
  %2113 = vmatpush1.msra.mxu0 0.0
  %2114 = vmatprep.subr.mxu0 0.0
  %2115 = vmatpush1.msra.mxu0 0.0
  %2116 = vmatprep.mubr.f32.mxu0 0.0
  %2117 = vmatmul.mubr.f32.gmra.mrb[0].mxu0 %v632
  %v2118 = vpop.f32.mrb[0].mxu0
  %v2119 = vadd.f32 %v1930, %v2118
  %v2120 = vpop.f32.mrb[0].mxu0
  %v2121 = vadd.f32 %v1934, %v2120
  %2122 = vmatprep.mubr.f32.mxu0 0.0
  %2123 = vmatmul.mubr.f32.gmra.mrb[0].mxu0 %v806
  %v2124 = vpop.f32.mrb[0].mxu0
  %v2125 = vadd.f32 %v1930, %v2124
  %v2126 = vpop.f32.mrb[0].mxu0
  %v2127 = vadd.f32 %v1934, %v2126
  %2128 = vmatprep.mubr.f32.mxu0 0.0
  %2129 = vmatmul.mubr.f32.gmra.mrb[0].mxu0 %v980
  %v2130 = vpop.f32.mrb[0].mxu0
  %v2131 = vadd.f32 %v1930, %v2130
  %v2132 = vpop.f32.mrb[0].mxu0
  %v2133 = vadd.f32 %v1934, %v2132
  %2134 = vmatprep.mubr.f32.mxu0 0.0
  %2135 = vmatmul.mubr.f32.gmra.mrb[0].mxu0 %v1154
  %v2136 = vpop.f32.mrb[0].mxu0
  %v2137 = vadd.f32 %v1930, %v2136
  %v2138 = vpop.f32.mrb[0].mxu0
  %v2139 = vadd.f32 %v1934, %v2138
  %2140 = vmatprep.mubr.f32.mxu0 0.0
  %2141 = vmatmul.mubr.f32.gmra.mrb[0].mxu0 %v1328
  %v2142 = vpop.f32.mrb[0].mxu0
  %v2143 = vadd.f32 %v1930, %v2142
  %v2144 = vpop.f32.mrb[0].mxu0
  %v2145 = vadd.f32 %v1934, %v2144
  %2146 = vmatprep.mubr.f32.mxu0 0.0
  %2147 = vmatmul.mubr.f32.gmra.mrb[0].mxu0 %v1502
  %v2148 = vpop.f32.mrb[0].mxu0
  %v2149 = vadd.f32 %v1930, %v2148
  %v2150 = vpop.f32.mrb[0].mxu0
  %v2151 = vadd.f32 %v1934, %v2150
  %2152 = vmatprep.mubr.f32.mxu0 0.0
  %2153 = vmatmul.mubr.f32.gmra.mrb[0].mxu0 %v1676
  %v2154 = vpop.f32.mrb[0].mxu0
  %v2155 = vadd.f32 %v1930, %v2154
  %v2156 = vpop.f32.mrb[0].mxu0
  %v2157 = vadd.f32 %v1934, %v2156
  %2158 = vmatprep.mubr.f32.mxu0 0.0
  %2159 = vmatmul.mubr.f32.gmra.mrb[0].mxu0 %v1850
  %v2160 = vpop.f32.mrb[0].mxu0
  %v2161 = vadd.f32 %v1930, %v2160
  %v2162 = vpop.f32.mrb[0].mxu0
  %v2163 = vadd.f32 %v1934, %v2162
  %2164 = vdwg.mxu0
  %2165 = vst [vmem:[#allocation2] sm:$0xff] %v2006
  %2166 = vst [vmem:[#allocation2 + $0x8] sm:$0xff] %v2008
  %2167 = vst [vmem:[#allocation2 + $0x10] sm:$0xff] %v2119
  %2168 = vst [vmem:[#allocation2 + $0x18] sm:$0xff] %v2121
  %2169 = vst [vmem:[#allocation2 + $0x20] sm:$0xff] %v2012
  %2170 = vst [vmem:[#allocation2 + $0x28] sm:$0xff] %v2014
  %2171 = vst [vmem:[#allocation2 + $0x30] sm:$0xff] %v2125
  %2172 = vst [vmem:[#allocation2 + $0x38] sm:$0xff] %v2127
  %2173 = vst [vmem:[#allocation2 + $0x40] sm:$0xff] %v2018
  %2174 = vst [vmem:[#allocation2 + $0x48] sm:$0xff] %v2020
  %2175 = vst [vmem:[#allocation2 + $0x50] sm:$0xff] %v2131
  %2176 = vst [vmem:[#allocation2 + $0x58] sm:$0xff] %v2133
  %2177 = vst [vmem:[#allocation2 + $0x60] sm:$0xff] %v2024
  %2178 = vst [vmem:[#allocation2 + $0x68] sm:$0xff] %v2026
  %2179 = vst [vmem:[#allocation2 + $0x70] sm:$0xff] %v2137
  %2180 = vst [vmem:[#allocation2 + $0x78] sm:$0xff] %v2139
  %2181 = vst [vmem:[#allocation2 + $0x80] sm:$0xff] %v2030
  %2182 = vst [vmem:[#allocation2 + $0x88] sm:$0xff] %v2032
  %2183 = vst [vmem:[#allocation2 + $0x90] sm:$0xff] %v2143
  %2184 = vst [vmem:[#allocation2 + $0x98] sm:$0xff] %v2145
  %2185 = vst [vmem:[#allocation2 + $0xa0] sm:$0xff] %v2036
  %2186 = vst [vmem:[#allocation2 + $0xa8] sm:$0xff] %v2038
  %2187 = vst [vmem:[#allocation2 + $0xb0] sm:$0xff] %v2149
  %2188 = vst [vmem:[#allocation2 + $0xb8] sm:$0xff] %v2151
  %2189 = vst [vmem:[#allocation2 + $0xc0] sm:$0xff] %v2042
  %2190 = vst [vmem:[#allocation2 + $0xc8] sm:$0xff] %v2044
  %2191 = vst [vmem:[#allocation2 + $0xd0] sm:$0xff] %v2155
  %2192 = vst [vmem:[#allocation2 + $0xd8] sm:$0xff] %v2157
  %2193 = vst [vmem:[#allocation2 + $0xe0] sm:$0xff] %v2048
  %2194 = vst [vmem:[#allocation2 + $0xe8] sm:$0xff] %v2050
  %2195 = vst [vmem:[#allocation2 + $0xf0] sm:$0xff] %v2161
  %2196 = vst [vmem:[#allocation2 + $0xf8] sm:$0xff] %v2163
  %s2197 = scalar_lea.vmem %s7, 8
  %v2198 = vld [vmem:[%s2197] sm:$0xff]
  %s2199 = scalar_lea.vmem %s8, 8
  %v2200 = vld [vmem:[%s2199] sm:$0xff]
  %v2201 = vld [vmem:[#allocation2] sm:$0xff]
  %v2202 = vld [vmem:[#allocation2 + $0x8] sm:$0xff]
  %v2203 = vld [vmem:[#allocation2 + $0x10] sm:$0xff]
  %v2204 = vld [vmem:[#allocation2 + $0x18] sm:$0xff]
  %v2205 = vld [vmem:[%s5] sm:$0xff]
  %v2206 = vld [vmem:[%s5 + $0x8] sm:$0xff]
  %v2207 = vld [vmem:[%s5 + $0x10] sm:$0xff]
  %v2208 = vld [vmem:[%s5 + $0x18] sm:$0xff]
  %v2209 = vld [vmem:[%s5 + $0x20] sm:$0xff]
  %v2210 = vld [vmem:[%s5 + $0x28] sm:$0xff]
  %v2211 = vld [vmem:[%s5 + $0x30] sm:$0xff]
  %v2212 = vld [vmem:[%s5 + $0x38] sm:$0xff]
  %v2213 = vld [vmem:[%s5 + $0x40] sm:$0xff]
  %v2214 = vld [vmem:[%s5 + $0x48] sm:$0xff]
  %v2215 = vld [vmem:[%s5 + $0x50] sm:$0xff]
  %v2216 = vld [vmem:[%s5 + $0x58] sm:$0xff]
  %v2217 = vld [vmem:[%s5 + $0x60] sm:$0xff]
  %v2218 = vld [vmem:[%s5 + $0x68] sm:$0xff]
  %v2219 = vld [vmem:[%s5 + $0x70] sm:$0xff]
  %v2220 = vld [vmem:[%s5 + $0x78] sm:$0xff]
  %v2221 = vld [vmem:[%s5 + $0x80] sm:$0xff]
  %v2222 = vld [vmem:[%s5 + $0x88] sm:$0xff]
  %v2223 = vld [vmem:[%s5 + $0x90] sm:$0xff]
  %v2224 = vld [vmem:[%s5 + $0x98] sm:$0xff]
  %v2225 = vld [vmem:[%s5 + $0xa0] sm:$0xff]
  %v2226 = vld [vmem:[%s5 + $0xa8] sm:$0xff]
  %v2227 = vld [vmem:[%s5 + $0xb0] sm:$0xff]
  %v2228 = vld [vmem:[%s5 + $0xb8] sm:$0xff]
  %v2229 = vld [vmem:[%s5 + $0xc0] sm:$0xff]
  %v2230 = vld [vmem:[%s5 + $0xc8] sm:$0xff]
  %v2231 = vld [vmem:[%s5 + $0xd0] sm:$0xff]
  %v2232 = vld [vmem:[%s5 + $0xd8] sm:$0xff]
  %v2233 = vld [vmem:[%s5 + $0xe0] sm:$0xff]
  %v2234 = vld [vmem:[%s5 + $0xe8] sm:$0xff]
  %v2235 = vld [vmem:[%s5 + $0xf0] sm:$0xff]
  %v2236 = vld [vmem:[%s5 + $0xf8] sm:$0xff]
  %v2237 = vld [vmem:[%s5 + $0x100] sm:$0xff]
  %v2238 = vld [vmem:[%s5 + $0x108] sm:$0xff]
  %v2239 = vld [vmem:[%s5 + $0x110] sm:$0xff]
  %v2240 = vld [vmem:[%s5 + $0x118] sm:$0xff]
  %v2241 = vld [vmem:[%s5 + $0x120] sm:$0xff]
  %v2242 = vld [vmem:[%s5 + $0x128] sm:$0xff]
  %v2243 = vld [vmem:[%s5 + $0x130] sm:$0xff]
  %v2244 = vld [vmem:[%s5 + $0x138] sm:$0xff]
  %v2245 = vld [vmem:[%s5 + $0x140] sm:$0xff]
  %v2246 = vld [vmem:[%s5 + $0x148] sm:$0xff]
  %v2247 = vld [vmem:[%s5 + $0x150] sm:$0xff]
  %v2248 = vld [vmem:[%s5 + $0x158] sm:$0xff]
  %v2249 = vld [vmem:[%s5 + $0x160] sm:$0xff]
  %v2250 = vld [vmem:[%s5 + $0x168] sm:$0xff]
  %v2251 = vld [vmem:[%s5 + $0x170] sm:$0xff]
  %v2252 = vld [vmem:[%s5 + $0x178] sm:$0xff]
  %v2253 = vld [vmem:[%s5 + $0x180] sm:$0xff]
  %v2254 = vld [vmem:[%s5 + $0x188] sm:$0xff]
  %v2255 = vld [vmem:[%s5 + $0x190] sm:$0xff]
  %v2256 = vld [vmem:[%s5 + $0x198] sm:$0xff]
  %v2257 = vld [vmem:[%s5 + $0x1a0] sm:$0xff]
  %v2258 = vld [vmem:[%s5 + $0x1a8] sm:$0xff]
  %v2259 = vld [vmem:[%s5 + $0x1b0] sm:$0xff]
  %v2260 = vld [vmem:[%s5 + $0x1b8] sm:$0xff]
  %v2261 = vld [vmem:[%s5 + $0x1c0] sm:$0xff]
  %v2262 = vld [vmem:[%s5 + $0x1c8] sm:$0xff]
  %v2263 = vld [vmem:[%s5 + $0x1d0] sm:$0xff]
  %v2264 = vld [vmem:[%s5 + $0x1d8] sm:$0xff]
  %v2265 = vld [vmem:[%s5 + $0x1e0] sm:$0xff]
  %v2266 = vld [vmem:[%s5 + $0x1e8] sm:$0xff]
  %v2267 = vld [vmem:[%s5 + $0x1f0] sm:$0xff]
  %v2268 = vld [vmem:[%s5 + $0x1f8] sm:$0xff]
  %2269 = vmatprep.subr.mxu0 %v2206
  %2270 = vmatpush1.msra.mxu0 %v2205
  %2271 = vmatprep.subr.mxu0 %v2210
  %2272 = vmatpush1.msra.mxu0 %v2209
  %2273 = vmatprep.subr.mxu0 %v2214
  %2274 = vmatpush1.msra.mxu0 %v2213
  %2275 = vmatprep.subr.mxu0 %v2218
  %2276 = vmatpush1.msra.mxu0 %v2217
  %2277 = vmatprep.subr.mxu0 %v2222
  %2278 = vmatpush1.msra.mxu0 %v2221
  %2279 = vmatprep.subr.mxu0 %v2226
  %2280 = vmatpush1.msra.mxu0 %v2225
  %2281 = vmatprep.subr.mxu0 %v2230
  %2282 = vmatpush1.msra.mxu0 %v2229
  %2283 = vmatprep.subr.mxu0 %v2234
  %2284 = vmatpush1.msra.mxu0 %v2233
  %2285 = vmatprep.subr.mxu0 %v2238
  %2286 = vmatpush1.msra.mxu0 %v2237
  %2287 = vmatprep.subr.mxu0 %v2242
  %2288 = vmatpush1.msra.mxu0 %v2241
  %2289 = vmatprep.subr.mxu0 %v2246
  %2290 = vmatpush1.msra.mxu0 %v2245
  %2291 = vmatprep.subr.mxu0 %v2250
  %2292 = vmatpush1.msra.mxu0 %v2249
  %2293 = vmatprep.subr.mxu0 %v2254
  %2294 = vmatpush1.msra.mxu0 %v2253
  %2295 = vmatprep.subr.mxu0 %v2258
  %2296 = vmatpush1.msra.mxu0 %v2257
  %2297 = vmatprep.subr.mxu0 %v2262
  %2298 = vmatpush1.msra.mxu0 %v2261
  %2299 = vmatprep.subr.mxu0 %v2266
  %2300 = vmatpush1.msra.mxu0 %v2265
  %2301 = vmatprep.subr.mxu0 0.0
  %2302 = vmatpush1.msra.mxu0 0.0
  %2303 = vmatprep.subr.mxu0 0.0
  %2304 = vmatpush1.msra.mxu0 0.0
  %2305 = vmatprep.subr.mxu0 0.0
  %2306 = vmatpush1.msra.mxu0 0.0
  %2307 = vmatprep.subr.mxu0 0.0
  %2308 = vmatpush1.msra.mxu0 0.0
  %2309 = vmatprep.subr.mxu0 0.0
  %2310 = vmatpush1.msra.mxu0 0.0
  %2311 = vmatprep.subr.mxu0 0.0
  %2312 = vmatpush1.msra.mxu0 0.0
  %2313 = vmatprep.subr.mxu0 0.0
  %2314 = vmatpush1.msra.mxu0 0.0
  %2315 = vmatprep.subr.mxu0 0.0
  %2316 = vmatpush1.msra.mxu0 0.0
  %2317 = vmatprep.subr.mxu0 0.0
  %2318 = vmatpush1.msra.mxu0 0.0
  %2319 = vmatprep.subr.mxu0 0.0
  %2320 = vmatpush1.msra.mxu0 0.0
  %2321 = vmatprep.subr.mxu0 0.0
  %2322 = vmatpush1.msra.mxu0 0.0
  %2323 = vmatprep.subr.mxu0 0.0
  %2324 = vmatpush1.msra.mxu0 0.0
  %2325 = vmatprep.subr.mxu0 0.0
  %2326 = vmatpush1.msra.mxu0 0.0
  %2327 = vmatprep.subr.mxu0 0.0
  %2328 = vmatpush1.msra.mxu0 0.0
  %2329 = vmatprep.subr.mxu0 0.0
  %2330 = vmatpush1.msra.mxu0 0.0
  %2331 = vmatprep.subr.mxu0 0.0
  %2332 = vmatpush1.msra.mxu0 0.0
  %2333 = vmatprep.mubr.f32.mxu0 0.0
  %2334 = vmatmul.mubr.f32.gmra.mrb[0].mxu0 %v2198
  %v2335 = vpop.f32.mrb[0].mxu0
  %v2336 = vadd.f32 0.0, %v2335
  %v2337 = vpop.f32.mrb[0].mxu0
  %v2338 = vadd.f32 0.0, %v2337
  %2339 = vdwg.mxu0
  %2340 = vmatprep.subr.mxu0 %v2208
  %2341 = vmatpush1.msra.mxu0 %v2207
  %2342 = vmatprep.subr.mxu0 %v2212
  %2343 = vmatpush1.msra.mxu0 %v2211
  %2344 = vmatprep.subr.mxu0 %v2216
  %2345 = vmatpush1.msra.mxu0 %v2215
  %2346 = vmatprep.subr.mxu0 %v2220
  %2347 = vmatpush1.msra.mxu0 %v2219
  %2348 = vmatprep.subr.mxu0 %v2224
  %2349 = vmatpush1.msra.mxu0 %v2223
  %2350 = vmatprep.subr.mxu0 %v2228
  %2351 = vmatpush1.msra.mxu0 %v2227
  %2352 = vmatprep.subr.mxu0 %v2232
  %2353 = vmatpush1.msra.mxu0 %v2231
  %2354 = vmatprep.subr.mxu0 %v2236
  %2355 = vmatpush1.msra.mxu0 %v2235
  %2356 = vmatprep.subr.mxu0 %v2240
  %2357 = vmatpush1.msra.mxu0 %v2239
  %2358 = vmatprep.subr.mxu0 %v2244
  %2359 = vmatpush1.msra.mxu0 %v2243
  %2360 = vmatprep.subr.mxu0 %v2248
  %2361 = vmatpush1.msra.mxu0 %v2247
  %2362 = vmatprep.subr.mxu0 %v2252
  %2363 = vmatpush1.msra.mxu0 %v2251
  %2364 = vmatprep.subr.mxu0 %v2256
  %2365 = vmatpush1.msra.mxu0 %v2255
  %2366 = vmatprep.subr.mxu0 %v2260
  %2367 = vmatpush1.msra.mxu0 %v2259
  %2368 = vmatprep.subr.mxu0 %v2264
  %2369 = vmatpush1.msra.mxu0 %v2263
  %2370 = vmatprep.subr.mxu0 %v2268
  %2371 = vmatpush1.msra.mxu0 %v2267
  %2372 = vmatprep.subr.mxu0 0.0
  %2373 = vmatpush1.msra.mxu0 0.0
  %2374 = vmatprep.subr.mxu0 0.0
  %2375 = vmatpush1.msra.mxu0 0.0
  %2376 = vmatprep.subr.mxu0 0.0
  %2377 = vmatpush1.msra.mxu0 0.0
  %2378 = vmatprep.subr.mxu0 0.0
  %2379 = vmatpush1.msra.mxu0 0.0
  %2380 = vmatprep.subr.mxu0 0.0
  %2381 = vmatpush1.msra.mxu0 0.0
  %2382 = vmatprep.subr.mxu0 0.0
  %2383 = vmatpush1.msra.mxu0 0.0
  %2384 = vmatprep.subr.mxu0 0.0
  %2385 = vmatpush1.msra.mxu0 0.0
  %2386 = vmatprep.subr.mxu0 0.0
  %2387 = vmatpush1.msra.mxu0 0.0
  %2388 = vmatprep.subr.mxu0 0.0
  %2389 = vmatpush1.msra.mxu0 0.0
  %2390 = vmatprep.subr.mxu0 0.0
  %2391 = vmatpush1.msra.mxu0 0.0
  %2392 = vmatprep.subr.mxu0 0.0
  %2393 = vmatpush1.msra.mxu0 0.0
  %2394 = vmatprep.subr.mxu0 0.0
  %2395 = vmatpush1.msra.mxu0 0.0
  %2396 = vmatprep.subr.mxu0 0.0
  %2397 = vmatpush1.msra.mxu0 0.0
  %2398 = vmatprep.subr.mxu0 0.0
  %2399 = vmatpush1.msra.mxu0 0.0
  %2400 = vmatprep.subr.mxu0 0.0
  %2401 = vmatpush1.msra.mxu0 0.0
  %2402 = vmatprep.subr.mxu0 0.0
  %2403 = vmatpush1.msra.mxu0 0.0
  %2404 = vmatprep.mubr.f32.mxu0 0.0
  %2405 = vmatmul.mubr.f32.gmra.mrb[0].mxu0 %v2198
  %v2406 = vpop.f32.mrb[0].mxu0
  %v2407 = vadd.f32 0.0, %v2406
  %v2408 = vpop.f32.mrb[0].mxu0
  %v2409 = vadd.f32 0.0, %v2408
  %2410 = vdwg.mxu0
  %v2411 = vadd.f32 %v2201, %v2336
  %v2412 = vadd.f32 %v2202, %v2338
  %v2413 = vadd.f32 %v2203, %v2407
  %v2414 = vadd.f32 %v2204, %v2409
  %v2415 = vxor.u32 %v2411, 2147483648
  %v2416 = vmul.f32 %v2415, 1.442695
  %v2417 = vpow.pop %v2416
  %v2418 = vadd.f32 %v2417, 1.0
  %v2419 = vrcp.pop %v2418
  %v2420 = vmul.f32 1.0, %v2419
  %v2421 = vxor.u32 %v2412, 2147483648
  %v2422 = vmul.f32 %v2421, 1.442695
  %v2423 = vpow.pop %v2422
  %v2424 = vadd.f32 %v2423, 1.0
  %v2425 = vrcp.pop %v2424
  %v2426 = vmul.f32 1.0, %v2425
  %v2427 = vtanh.pop %v2413
  %v2428 = vxor.u32 %v2414, 2147483648
  %v2429 = vmul.f32 %v2428, 1.442695
  %v2430 = vpow.pop %v2429
  %v2431 = vadd.f32 %v2430, 1.0
  %v2432 = vrcp.pop %v2431
  %v2433 = vmul.f32 1.0, %v2432
  %v2434 = vmul.f32 %v2426, %v2200
  %v2435 = vmul.f32 %v2420, %v2427
  %v2436 = vadd.f32 %v2434, %v2435
  %v2437 = vtanh.pop %v2436
  %v2438 = vmul.f32 %v2433, %v2437
  %v2439 = vadd.f32 %v2438, 0.0
  %v2440 = vld [vmem:[#allocation2 + $0x20] sm:$0xff]
  %v2441 = vld [vmem:[#allocation2 + $0x28] sm:$0xff]
  %v2442 = vld [vmem:[#allocation2 + $0x30] sm:$0xff]
  %v2443 = vld [vmem:[#allocation2 + $0x38] sm:$0xff]
  %2444 = vmatprep.subr.mxu0 %v2206
  %2445 = vmatpush1.msra.mxu0 %v2205
  %2446 = vmatprep.subr.mxu0 %v2210
  %2447 = vmatpush1.msra.mxu0 %v2209
  %2448 = vmatprep.subr.mxu0 %v2214
  %2449 = vmatpush1.msra.mxu0 %v2213
  %2450 = vmatprep.subr.mxu0 %v2218
  %2451 = vmatpush1.msra.mxu0 %v2217
  %2452 = vmatprep.subr.mxu0 %v2222
  %2453 = vmatpush1.msra.mxu0 %v2221
  %2454 = vmatprep.subr.mxu0 %v2226
  %2455 = vmatpush1.msra.mxu0 %v2225
  %2456 = vmatprep.subr.mxu0 %v2230
  %2457 = vmatpush1.msra.mxu0 %v2229
  %2458 = vmatprep.subr.mxu0 %v2234
  %2459 = vmatpush1.msra.mxu0 %v2233
  %2460 = vmatprep.subr.mxu0 %v2238
  %2461 = vmatpush1.msra.mxu0 %v2237
  %2462 = vmatprep.subr.mxu0 %v2242
  %2463 = vmatpush1.msra.mxu0 %v2241
  %2464 = vmatprep.subr.mxu0 %v2246
  %2465 = vmatpush1.msra.mxu0 %v2245
  %2466 = vmatprep.subr.mxu0 %v2250
  %2467 = vmatpush1.msra.mxu0 %v2249
  %2468 = vmatprep.subr.mxu0 %v2254
  %2469 = vmatpush1.msra.mxu0 %v2253
  %2470 = vmatprep.subr.mxu0 %v2258
  %2471 = vmatpush1.msra.mxu0 %v2257
  %2472 = vmatprep.subr.mxu0 %v2262
  %2473 = vmatpush1.msra.mxu0 %v2261
  %2474 = vmatprep.subr.mxu0 %v2266
  %2475 = vmatpush1.msra.mxu0 %v2265
  %2476 = vmatprep.subr.mxu0 0.0
  %2477 = vmatpush1.msra.mxu0 0.0
  %2478 = vmatprep.subr.mxu0 0.0
  %2479 = vmatpush1.msra.mxu0 0.0
  %2480 = vmatprep.subr.mxu0 0.0
  %2481 = vmatpush1.msra.mxu0 0.0
  %2482 = vmatprep.subr.mxu0 0.0
  %2483 = vmatpush1.msra.mxu0 0.0
  %2484 = vmatprep.subr.mxu0 0.0
  %2485 = vmatpush1.msra.mxu0 0.0
  %2486 = vmatprep.subr.mxu0 0.0
  %2487 = vmatpush1.msra.mxu0 0.0
  %2488 = vmatprep.subr.mxu0 0.0
  %2489 = vmatpush1.msra.mxu0 0.0
  %2490 = vmatprep.subr.mxu0 0.0
  %2491 = vmatpush1.msra.mxu0 0.0
  %2492 = vmatprep.subr.mxu0 0.0
  %2493 = vmatpush1.msra.mxu0 0.0
  %2494 = vmatprep.subr.mxu0 0.0
  %2495 = vmatpush1.msra.mxu0 0.0
  %2496 = vmatprep.subr.mxu0 0.0
  %2497 = vmatpush1.msra.mxu0 0.0
  %2498 = vmatprep.subr.mxu0 0.0
  %2499 = vmatpush1.msra.mxu0 0.0
  %2500 = vmatprep.subr.mxu0 0.0
  %2501 = vmatpush1.msra.mxu0 0.0
  %2502 = vmatprep.subr.mxu0 0.0
  %2503 = vmatpush1.msra.mxu0 0.0
  %2504 = vmatprep.subr.mxu0 0.0
  %2505 = vmatpush1.msra.mxu0 0.0
  %2506 = vmatprep.subr.mxu0 0.0
  %2507 = vmatpush1.msra.mxu0 0.0
  %2508 = vmatprep.mubr.f32.mxu0 0.0
  %2509 = vmatmul.mubr.f32.gmra.mrb[0].mxu0 %v2438
  %v2510 = vpop.f32.mrb[0].mxu0
  %v2511 = vadd.f32 0.0, %v2510
  %v2512 = vpop.f32.mrb[0].mxu0
  %v2513 = vadd.f32 0.0, %v2512
  %2514 = vdwg.mxu0
  %2515 = vmatprep.subr.mxu0 %v2208
  %2516 = vmatpush1.msra.mxu0 %v2207
  %2517 = vmatprep.subr.mxu0 %v2212
  %2518 = vmatpush1.msra.mxu0 %v2211
  %2519 = vmatprep.subr.mxu0 %v2216
  %2520 = vmatpush1.msra.mxu0 %v2215
  %2521 = vmatprep.subr.mxu0 %v2220
  %2522 = vmatpush1.msra.mxu0 %v2219
  %2523 = vmatprep.subr.mxu0 %v2224
  %2524 = vmatpush1.msra.mxu0 %v2223
  %2525 = vmatprep.subr.mxu0 %v2228
  %2526 = vmatpush1.msra.mxu0 %v2227
  %2527 = vmatprep.subr.mxu0 %v2232
  %2528 = vmatpush1.msra.mxu0 %v2231
  %2529 = vmatprep.subr.mxu0 %v2236
  %2530 = vmatpush1.msra.mxu0 %v2235
  %2531 = vmatprep.subr.mxu0 %v2240
  %2532 = vmatpush1.msra.mxu0 %v2239
  %2533 = vmatprep.subr.mxu0 %v2244
  %2534 = vmatpush1.msra.mxu0 %v2243
  %2535 = vmatprep.subr.mxu0 %v2248
  %2536 = vmatpush1.msra.mxu0 %v2247
  %2537 = vmatprep.subr.mxu0 %v2252
  %2538 = vmatpush1.msra.mxu0 %v2251
  %2539 = vmatprep.subr.mxu0 %v2256
  %2540 = vmatpush1.msra.mxu0 %v2255
  %2541 = vmatprep.subr.mxu0 %v2260
  %2542 = vmatpush1.msra.mxu0 %v2259
  %2543 = vmatprep.subr.mxu0 %v2264
  %2544 = vmatpush1.msra.mxu0 %v2263
  %2545 = vmatprep.subr.mxu0 %v2268
  %2546 = vmatpush1.msra.mxu0 %v2267
  %2547 = vmatprep.subr.mxu0 0.0
  %2548 = vmatpush1.msra.mxu0 0.0
  %2549 = vmatprep.subr.mxu0 0.0
  %2550 = vmatpush1.msra.mxu0 0.0
  %2551 = vmatprep.subr.mxu0 0.0
  %2552 = vmatpush1.msra.mxu0 0.0
  %2553 = vmatprep.subr.mxu0 0.0
  %2554 = vmatpush1.msra.mxu0 0.0
  %2555 = vmatprep.subr.mxu0 0.0
  %2556 = vmatpush1.msra.mxu0 0.0
  %2557 = vmatprep.subr.mxu0 0.0
  %2558 = vmatpush1.msra.mxu0 0.0
  %2559 = vmatprep.subr.mxu0 0.0
  %2560 = vmatpush1.msra.mxu0 0.0
  %2561 = vmatprep.subr.mxu0 0.0
  %2562 = vmatpush1.msra.mxu0 0.0
  %2563 = vmatprep.subr.mxu0 0.0
  %2564 = vmatpush1.msra.mxu0 0.0
  %2565 = vmatprep.subr.mxu0 0.0
  %2566 = vmatpush1.msra.mxu0 0.0
  %2567 = vmatprep.subr.mxu0 0.0
  %2568 = vmatpush1.msra.mxu0 0.0
  %2569 = vmatprep.subr.mxu0 0.0
  %2570 = vmatpush1.msra.mxu0 0.0
  %2571 = vmatprep.subr.mxu0 0.0
  %2572 = vmatpush1.msra.mxu0 0.0
  %2573 = vmatprep.subr.mxu0 0.0
  %2574 = vmatpush1.msra.mxu0 0.0
  %2575 = vmatprep.subr.mxu0 0.0
  %2576 = vmatpush1.msra.mxu0 0.0
  %2577 = vmatprep.subr.mxu0 0.0
  %2578 = vmatpush1.msra.mxu0 0.0
  %2579 = vmatprep.mubr.f32.mxu0 0.0
  %2580 = vmatmul.mubr.f32.gmra.mrb[0].mxu0 %v2438
  %v2581 = vpop.f32.mrb[0].mxu0
  %v2582 = vadd.f32 0.0, %v2581
  %v2583 = vpop.f32.mrb[0].mxu0
  %v2584 = vadd.f32 0.0, %v2583
  %2585 = vdwg.mxu0
  %v2586 = vadd.f32 %v2440, %v2511
  %v2587 = vadd.f32 %v2441, %v2513
  %v2588 = vadd.f32 %v2442, %v2582
  %v2589 = vadd.f32 %v2443, %v2584
  %v2590 = vxor.u32 %v2586, 2147483648
  %v2591 = vmul.f32 %v2590, 1.442695
  %v2592 = vpow.pop %v2591
  %v2593 = vadd.f32 %v2592, 1.0
  %v2594 = vrcp.pop %v2593
  %v2595 = vmul.f32 1.0, %v2594
  %v2596 = vxor.u32 %v2587, 2147483648
  %v2597 = vmul.f32 %v2596, 1.442695
  %v2598 = vpow.pop %v2597
  %v2599 = vadd.f32 %v2598, 1.0
  %v2600 = vrcp.pop %v2599
  %v2601 = vmul.f32 1.0, %v2600
  %v2602 = vtanh.pop %v2588
  %v2603 = vxor.u32 %v2589, 2147483648
  %v2604 = vmul.f32 %v2603, 1.442695
  %v2605 = vpow.pop %v2604
  %v2606 = vadd.f32 %v2605, 1.0
  %v2607 = vrcp.pop %v2606
  %v2608 = vmul.f32 1.0, %v2607
  %v2609 = vmul.f32 %v2601, %v2436
  %v2610 = vmul.f32 %v2595, %v2602
  %v2611 = vadd.f32 %v2609, %v2610
  %v2612 = vtanh.pop %v2611
  %v2613 = vmul.f32 %v2608, %v2612
  %v2614 = vadd.f32 %v2439, %v2613
  %v2615 = vld [vmem:[#allocation2 + $0x40] sm:$0xff]
  %v2616 = vld [vmem:[#allocation2 + $0x48] sm:$0xff]
  %v2617 = vld [vmem:[#allocation2 + $0x50] sm:$0xff]
  %v2618 = vld [vmem:[#allocation2 + $0x58] sm:$0xff]
  %2619 = vmatprep.subr.mxu0 %v2206
  %2620 = vmatpush1.msra.mxu0 %v2205
  %2621 = vmatprep.subr.mxu0 %v2210
  %2622 = vmatpush1.msra.mxu0 %v2209
  %2623 = vmatprep.subr.mxu0 %v2214
  %2624 = vmatpush1.msra.mxu0 %v2213
  %2625 = vmatprep.subr.mxu0 %v2218
  %2626 = vmatpush1.msra.mxu0 %v2217
  %2627 = vmatprep.subr.mxu0 %v2222
  %2628 = vmatpush1.msra.mxu0 %v2221
  %2629 = vmatprep.subr.mxu0 %v2226
  %2630 = vmatpush1.msra.mxu0 %v2225
  %2631 = vmatprep.subr.mxu0 %v2230
  %2632 = vmatpush1.msra.mxu0 %v2229
  %2633 = vmatprep.subr.mxu0 %v2234
  %2634 = vmatpush1.msra.mxu0 %v2233
  %2635 = vmatprep.subr.mxu0 %v2238
  %2636 = vmatpush1.msra.mxu0 %v2237
  %2637 = vmatprep.subr.mxu0 %v2242
  %2638 = vmatpush1.msra.mxu0 %v2241
  %2639 = vmatprep.subr.mxu0 %v2246
  %2640 = vmatpush1.msra.mxu0 %v2245
  %2641 = vmatprep.subr.mxu0 %v2250
  %2642 = vmatpush1.msra.mxu0 %v2249
  %2643 = vmatprep.subr.mxu0 %v2254
  %2644 = vmatpush1.msra.mxu0 %v2253
  %2645 = vmatprep.subr.mxu0 %v2258
  %2646 = vmatpush1.msra.mxu0 %v2257
  %2647 = vmatprep.subr.mxu0 %v2262
  %2648 = vmatpush1.msra.mxu0 %v2261
  %2649 = vmatprep.subr.mxu0 %v2266
  %2650 = vmatpush1.msra.mxu0 %v2265
  %2651 = vmatprep.subr.mxu0 0.0
  %2652 = vmatpush1.msra.mxu0 0.0
  %2653 = vmatprep.subr.mxu0 0.0
  %2654 = vmatpush1.msra.mxu0 0.0
  %2655 = vmatprep.subr.mxu0 0.0
  %2656 = vmatpush1.msra.mxu0 0.0
  %2657 = vmatprep.subr.mxu0 0.0
  %2658 = vmatpush1.msra.mxu0 0.0
  %2659 = vmatprep.subr.mxu0 0.0
  %2660 = vmatpush1.msra.mxu0 0.0
  %2661 = vmatprep.subr.mxu0 0.0
  %2662 = vmatpush1.msra.mxu0 0.0
  %2663 = vmatprep.subr.mxu0 0.0
  %2664 = vmatpush1.msra.mxu0 0.0
  %2665 = vmatprep.subr.mxu0 0.0
  %2666 = vmatpush1.msra.mxu0 0.0
  %2667 = vmatprep.subr.mxu0 0.0
  %2668 = vmatpush1.msra.mxu0 0.0
  %2669 = vmatprep.subr.mxu0 0.0
  %2670 = vmatpush1.msra.mxu0 0.0
  %2671 = vmatprep.subr.mxu0 0.0
  %2672 = vmatpush1.msra.mxu0 0.0
  %2673 = vmatprep.subr.mxu0 0.0
  %2674 = vmatpush1.msra.mxu0 0.0
  %2675 = vmatprep.subr.mxu0 0.0
  %2676 = vmatpush1.msra.mxu0 0.0
  %2677 = vmatprep.subr.mxu0 0.0
  %2678 = vmatpush1.msra.mxu0 0.0
  %2679 = vmatprep.subr.mxu0 0.0
  %2680 = vmatpush1.msra.mxu0 0.0
  %2681 = vmatprep.subr.mxu0 0.0
  %2682 = vmatpush1.msra.mxu0 0.0
  %2683 = vmatprep.mubr.f32.mxu0 0.0
  %2684 = vmatmul.mubr.f32.gmra.mrb[0].mxu0 %v2613
  %v2685 = vpop.f32.mrb[0].mxu0
  %v2686 = vadd.f32 0.0, %v2685
  %v2687 = vpop.f32.mrb[0].mxu0
  %v2688 = vadd.f32 0.0, %v2687
  %2689 = vdwg.mxu0
  %2690 = vmatprep.subr.mxu0 %v2208
  %2691 = vmatpush1.msra.mxu0 %v2207
  %2692 = vmatprep.subr.mxu0 %v2212
  %2693 = vmatpush1.msra.mxu0 %v2211
  %2694 = vmatprep.subr.mxu0 %v2216
  %2695 = vmatpush1.msra.mxu0 %v2215
  %2696 = vmatprep.subr.mxu0 %v2220
  %2697 = vmatpush1.msra.mxu0 %v2219
  %2698 = vmatprep.subr.mxu0 %v2224
  %2699 = vmatpush1.msra.mxu0 %v2223
  %2700 = vmatprep.subr.mxu0 %v2228
  %2701 = vmatpush1.msra.mxu0 %v2227
  %2702 = vmatprep.subr.mxu0 %v2232
  %2703 = vmatpush1.msra.mxu0 %v2231
  %2704 = vmatprep.subr.mxu0 %v2236
  %2705 = vmatpush1.msra.mxu0 %v2235
  %2706 = vmatprep.subr.mxu0 %v2240
  %2707 = vmatpush1.msra.mxu0 %v2239
  %2708 = vmatprep.subr.mxu0 %v2244
  %2709 = vmatpush1.msra.mxu0 %v2243
  %2710 = vmatprep.subr.mxu0 %v2248
  %2711 = vmatpush1.msra.mxu0 %v2247
  %2712 = vmatprep.subr.mxu0 %v2252
  %2713 = vmatpush1.msra.mxu0 %v2251
  %2714 = vmatprep.subr.mxu0 %v2256
  %2715 = vmatpush1.msra.mxu0 %v2255
  %2716 = vmatprep.subr.mxu0 %v2260
  %2717 = vmatpush1.msra.mxu0 %v2259
  %2718 = vmatprep.subr.mxu0 %v2264
  %2719 = vmatpush1.msra.mxu0 %v2263
  %2720 = vmatprep.subr.mxu0 %v2268
  %2721 = vmatpush1.msra.mxu0 %v2267
  %2722 = vmatprep.subr.mxu0 0.0
  %2723 = vmatpush1.msra.mxu0 0.0
  %2724 = vmatprep.subr.mxu0 0.0
  %2725 = vmatpush1.msra.mxu0 0.0
  %2726 = vmatprep.subr.mxu0 0.0
  %2727 = vmatpush1.msra.mxu0 0.0
  %2728 = vmatprep.subr.mxu0 0.0
  %2729 = vmatpush1.msra.mxu0 0.0
  %2730 = vmatprep.subr.mxu0 0.0
  %2731 = vmatpush1.msra.mxu0 0.0
  %2732 = vmatprep.subr.mxu0 0.0
  %2733 = vmatpush1.msra.mxu0 0.0
  %2734 = vmatprep.subr.mxu0 0.0
  %2735 = vmatpush1.msra.mxu0 0.0
  %2736 = vmatprep.subr.mxu0 0.0
  %2737 = vmatpush1.msra.mxu0 0.0
  %2738 = vmatprep.subr.mxu0 0.0
  %2739 = vmatpush1.msra.mxu0 0.0
  %2740 = vmatprep.subr.mxu0 0.0
  %2741 = vmatpush1.msra.mxu0 0.0
  %2742 = vmatprep.subr.mxu0 0.0
  %2743 = vmatpush1.msra.mxu0 0.0
  %2744 = vmatprep.subr.mxu0 0.0
  %2745 = vmatpush1.msra.mxu0 0.0
  %2746 = vmatprep.subr.mxu0 0.0
  %2747 = vmatpush1.msra.mxu0 0.0
  %2748 = vmatprep.subr.mxu0 0.0
  %2749 = vmatpush1.msra.mxu0 0.0
  %2750 = vmatprep.subr.mxu0 0.0
  %2751 = vmatpush1.msra.mxu0 0.0
  %2752 = vmatprep.subr.mxu0 0.0
  %2753 = vmatpush1.msra.mxu0 0.0
  %2754 = vmatprep.mubr.f32.mxu0 0.0
  %2755 = vmatmul.mubr.f32.gmra.mrb[0].mxu0 %v2613
  %v2756 = vpop.f32.mrb[0].mxu0
  %v2757 = vadd.f32 0.0, %v2756
  %v2758 = vpop.f32.mrb[0].mxu0
  %v2759 = vadd.f32 0.0, %v2758
  %2760 = vdwg.mxu0
  %v2761 = vadd.f32 %v2615, %v2686
  %v2762 = vadd.f32 %v2616, %v2688
  %v2763 = vadd.f32 %v2617, %v2757
  %v2764 = vadd.f32 %v2618, %v2759
  %v2765 = vxor.u32 %v2761, 2147483648
  %v2766 = vmul.f32 %v2765, 1.442695
  %v2767 = vpow.pop %v2766
  %v2768 = vadd.f32 %v2767, 1.0
  %v2769 = vrcp.pop %v2768
  %v2770 = vmul.f32 1.0, %v2769
  %v2771 = vxor.u32 %v2762, 2147483648
  %v2772 = vmul.f32 %v2771, 1.442695
  %v2773 = vpow.pop %v2772
  %v2774 = vadd.f32 %v2773, 1.0
  %v2775 = vrcp.pop %v2774
  %v2776 = vmul.f32 1.0, %v2775
  %v2777 = vtanh.pop %v2763
  %v2778 = vxor.u32 %v2764, 2147483648
  %v2779 = vmul.f32 %v2778, 1.442695
  %v2780 = vpow.pop %v2779
  %v2781 = vadd.f32 %v2780, 1.0
  %v2782 = vrcp.pop %v2781
  %v2783 = vmul.f32 1.0, %v2782
  %v2784 = vmul.f32 %v2776, %v2611
  %v2785 = vmul.f32 %v2770, %v2777
  %v2786 = vadd.f32 %v2784, %v2785
  %v2787 = vtanh.pop %v2786
  %v2788 = vmul.f32 %v2783, %v2787
  %v2789 = vadd.f32 %v2614, %v2788
  %v2790 = vld [vmem:[#allocation2 + $0x60] sm:$0xff]
  %v2791 = vld [vmem:[#allocation2 + $0x68] sm:$0xff]
  %v2792 = vld [vmem:[#allocation2 + $0x70] sm:$0xff]
  %v2793 = vld [vmem:[#allocation2 + $0x78] sm:$0xff]
  %2794 = vmatprep.subr.mxu0 %v2206
  %2795 = vmatpush1.msra.mxu0 %v2205
  %2796 = vmatprep.subr.mxu0 %v2210
  %2797 = vmatpush1.msra.mxu0 %v2209
  %2798 = vmatprep.subr.mxu0 %v2214
  %2799 = vmatpush1.msra.mxu0 %v2213
  %2800 = vmatprep.subr.mxu0 %v2218
  %2801 = vmatpush1.msra.mxu0 %v2217
  %2802 = vmatprep.subr.mxu0 %v2222
  %2803 = vmatpush1.msra.mxu0 %v2221
  %2804 = vmatprep.subr.mxu0 %v2226
  %2805 = vmatpush1.msra.mxu0 %v2225
  %2806 = vmatprep.subr.mxu0 %v2230
  %2807 = vmatpush1.msra.mxu0 %v2229
  %2808 = vmatprep.subr.mxu0 %v2234
  %2809 = vmatpush1.msra.mxu0 %v2233
  %2810 = vmatprep.subr.mxu0 %v2238
  %2811 = vmatpush1.msra.mxu0 %v2237
  %2812 = vmatprep.subr.mxu0 %v2242
  %2813 = vmatpush1.msra.mxu0 %v2241
  %2814 = vmatprep.subr.mxu0 %v2246
  %2815 = vmatpush1.msra.mxu0 %v2245
  %2816 = vmatprep.subr.mxu0 %v2250
  %2817 = vmatpush1.msra.mxu0 %v2249
  %2818 = vmatprep.subr.mxu0 %v2254
  %2819 = vmatpush1.msra.mxu0 %v2253
  %2820 = vmatprep.subr.mxu0 %v2258
  %2821 = vmatpush1.msra.mxu0 %v2257
  %2822 = vmatprep.subr.mxu0 %v2262
  %2823 = vmatpush1.msra.mxu0 %v2261
  %2824 = vmatprep.subr.mxu0 %v2266
  %2825 = vmatpush1.msra.mxu0 %v2265
  %2826 = vmatprep.subr.mxu0 0.0
  %2827 = vmatpush1.msra.mxu0 0.0
  %2828 = vmatprep.subr.mxu0 0.0
  %2829 = vmatpush1.msra.mxu0 0.0
  %2830 = vmatprep.subr.mxu0 0.0
  %2831 = vmatpush1.msra.mxu0 0.0
  %2832 = vmatprep.subr.mxu0 0.0
  %2833 = vmatpush1.msra.mxu0 0.0
  %2834 = vmatprep.subr.mxu0 0.0
  %2835 = vmatpush1.msra.mxu0 0.0
  %2836 = vmatprep.subr.mxu0 0.0
  %2837 = vmatpush1.msra.mxu0 0.0
  %2838 = vmatprep.subr.mxu0 0.0
  %2839 = vmatpush1.msra.mxu0 0.0
  %2840 = vmatprep.subr.mxu0 0.0
  %2841 = vmatpush1.msra.mxu0 0.0
  %2842 = vmatprep.subr.mxu0 0.0
  %2843 = vmatpush1.msra.mxu0 0.0
  %2844 = vmatprep.subr.mxu0 0.0
  %2845 = vmatpush1.msra.mxu0 0.0
  %2846 = vmatprep.subr.mxu0 0.0
  %2847 = vmatpush1.msra.mxu0 0.0
  %2848 = vmatprep.subr.mxu0 0.0
  %2849 = vmatpush1.msra.mxu0 0.0
  %2850 = vmatprep.subr.mxu0 0.0
  %2851 = vmatpush1.msra.mxu0 0.0
  %2852 = vmatprep.subr.mxu0 0.0
  %2853 = vmatpush1.msra.mxu0 0.0
  %2854 = vmatprep.subr.mxu0 0.0
  %2855 = vmatpush1.msra.mxu0 0.0
  %2856 = vmatprep.subr.mxu0 0.0
  %2857 = vmatpush1.msra.mxu0 0.0
  %2858 = vmatprep.mubr.f32.mxu0 0.0
  %2859 = vmatmul.mubr.f32.gmra.mrb[0].mxu0 %v2788
  %v2860 = vpop.f32.mrb[0].mxu0
  %v2861 = vadd.f32 0.0, %v2860
  %v2862 = vpop.f32.mrb[0].mxu0
  %v2863 = vadd.f32 0.0, %v2862
  %2864 = vdwg.mxu0
  %2865 = vmatprep.subr.mxu0 %v2208
  %2866 = vmatpush1.msra.mxu0 %v2207
  %2867 = vmatprep.subr.mxu0 %v2212
  %2868 = vmatpush1.msra.mxu0 %v2211
  %2869 = vmatprep.subr.mxu0 %v2216
  %2870 = vmatpush1.msra.mxu0 %v2215
  %2871 = vmatprep.subr.mxu0 %v2220
  %2872 = vmatpush1.msra.mxu0 %v2219
  %2873 = vmatprep.subr.mxu0 %v2224
  %2874 = vmatpush1.msra.mxu0 %v2223
  %2875 = vmatprep.subr.mxu0 %v2228
  %2876 = vmatpush1.msra.mxu0 %v2227
  %2877 = vmatprep.subr.mxu0 %v2232
  %2878 = vmatpush1.msra.mxu0 %v2231
  %2879 = vmatprep.subr.mxu0 %v2236
  %2880 = vmatpush1.msra.mxu0 %v2235
  %2881 = vmatprep.subr.mxu0 %v2240
  %2882 = vmatpush1.msra.mxu0 %v2239
  %2883 = vmatprep.subr.mxu0 %v2244
  %2884 = vmatpush1.msra.mxu0 %v2243
  %2885 = vmatprep.subr.mxu0 %v2248
  %2886 = vmatpush1.msra.mxu0 %v2247
  %2887 = vmatprep.subr.mxu0 %v2252
  %2888 = vmatpush1.msra.mxu0 %v2251
  %2889 = vmatprep.subr.mxu0 %v2256
  %2890 = vmatpush1.msra.mxu0 %v2255
  %2891 = vmatprep.subr.mxu0 %v2260
  %2892 = vmatpush1.msra.mxu0 %v2259
  %2893 = vmatprep.subr.mxu0 %v2264
  %2894 = vmatpush1.msra.mxu0 %v2263
  %2895 = vmatprep.subr.mxu0 %v2268
  %2896 = vmatpush1.msra.mxu0 %v2267
  %2897 = vmatprep.subr.mxu0 0.0
  %2898 = vmatpush1.msra.mxu0 0.0
  %2899 = vmatprep.subr.mxu0 0.0
  %2900 = vmatpush1.msra.mxu0 0.0
  %2901 = vmatprep.subr.mxu0 0.0
  %2902 = vmatpush1.msra.mxu0 0.0
  %2903 = vmatprep.subr.mxu0 0.0
  %2904 = vmatpush1.msra.mxu0 0.0
  %2905 = vmatprep.subr.mxu0 0.0
  %2906 = vmatpush1.msra.mxu0 0.0
  %2907 = vmatprep.subr.mxu0 0.0
  %2908 = vmatpush1.msra.mxu0 0.0
  %2909 = vmatprep.subr.mxu0 0.0
  %2910 = vmatpush1.msra.mxu0 0.0
  %2911 = vmatprep.subr.mxu0 0.0
  %2912 = vmatpush1.msra.mxu0 0.0
  %2913 = vmatprep.subr.mxu0 0.0
  %2914 = vmatpush1.msra.mxu0 0.0
  %2915 = vmatprep.subr.mxu0 0.0
  %2916 = vmatpush1.msra.mxu0 0.0
  %2917 = vmatprep.subr.mxu0 0.0
  %2918 = vmatpush1.msra.mxu0 0.0
  %2919 = vmatprep.subr.mxu0 0.0
  %2920 = vmatpush1.msra.mxu0 0.0
  %2921 = vmatprep.subr.mxu0 0.0
  %2922 = vmatpush1.msra.mxu0 0.0
  %2923 = vmatprep.subr.mxu0 0.0
  %2924 = vmatpush1.msra.mxu0 0.0
  %2925 = vmatprep.subr.mxu0 0.0
  %2926 = vmatpush1.msra.mxu0 0.0
  %2927 = vmatprep.subr.mxu0 0.0
  %2928 = vmatpush1.msra.mxu0 0.0
  %2929 = vmatprep.mubr.f32.mxu0 0.0
  %2930 = vmatmul.mubr.f32.gmra.mrb[0].mxu0 %v2788
  %v2931 = vpop.f32.mrb[0].mxu0
  %v2932 = vadd.f32 0.0, %v2931
  %v2933 = vpop.f32.mrb[0].mxu0
  %v2934 = vadd.f32 0.0, %v2933
  %2935 = vdwg.mxu0
  %v2936 = vadd.f32 %v2790, %v2861
  %v2937 = vadd.f32 %v2791, %v2863
  %v2938 = vadd.f32 %v2792, %v2932
  %v2939 = vadd.f32 %v2793, %v2934
  %v2940 = vxor.u32 %v2936, 2147483648
  %v2941 = vmul.f32 %v2940, 1.442695
  %v2942 = vpow.pop %v2941
  %v2943 = vadd.f32 %v2942, 1.0
  %v2944 = vrcp.pop %v2943
  %v2945 = vmul.f32 1.0, %v2944
  %v2946 = vxor.u32 %v2937, 2147483648
  %v2947 = vmul.f32 %v2946, 1.442695
  %v2948 = vpow.pop %v2947
  %v2949 = vadd.f32 %v2948, 1.0
  %v2950 = vrcp.pop %v2949
  %v2951 = vmul.f32 1.0, %v2950
  %v2952 = vtanh.pop %v2938
  %v2953 = vxor.u32 %v2939, 2147483648
  %v2954 = vmul.f32 %v2953, 1.442695
  %v2955 = vpow.pop %v2954
  %v2956 = vadd.f32 %v2955, 1.0
  %v2957 = vrcp.pop %v2956
  %v2958 = vmul.f32 1.0, %v2957
  %v2959 = vmul.f32 %v2951, %v2786
  %v2960 = vmul.f32 %v2945, %v2952
  %v2961 = vadd.f32 %v2959, %v2960
  %v2962 = vtanh.pop %v2961
  %v2963 = vmul.f32 %v2958, %v2962
  %v2964 = vadd.f32 %v2789, %v2963
  %v2965 = vld [vmem:[#allocation2 + $0x80] sm:$0xff]
  %v2966 = vld [vmem:[#allocation2 + $0x88] sm:$0xff]
  %v2967 = vld [vmem:[#allocation2 + $0x90] sm:$0xff]
  %v2968 = vld [vmem:[#allocation2 + $0x98] sm:$0xff]
  %2969 = vmatprep.subr.mxu0 %v2206
  %2970 = vmatpush1.msra.mxu0 %v2205
  %2971 = vmatprep.subr.mxu0 %v2210
  %2972 = vmatpush1.msra.mxu0 %v2209
  %2973 = vmatprep.subr.mxu0 %v2214
  %2974 = vmatpush1.msra.mxu0 %v2213
  %2975 = vmatprep.subr.mxu0 %v2218
  %2976 = vmatpush1.msra.mxu0 %v2217
  %2977 = vmatprep.subr.mxu0 %v2222
  %2978 = vmatpush1.msra.mxu0 %v2221
  %2979 = vmatprep.subr.mxu0 %v2226
  %2980 = vmatpush1.msra.mxu0 %v2225
  %2981 = vmatprep.subr.mxu0 %v2230
  %2982 = vmatpush1.msra.mxu0 %v2229
  %2983 = vmatprep.subr.mxu0 %v2234
  %2984 = vmatpush1.msra.mxu0 %v2233
  %2985 = vmatprep.subr.mxu0 %v2238
  %2986 = vmatpush1.msra.mxu0 %v2237
  %2987 = vmatprep.subr.mxu0 %v2242
  %2988 = vmatpush1.msra.mxu0 %v2241
  %2989 = vmatprep.subr.mxu0 %v2246
  %2990 = vmatpush1.msra.mxu0 %v2245
  %2991 = vmatprep.subr.mxu0 %v2250
  %2992 = vmatpush1.msra.mxu0 %v2249
  %2993 = vmatprep.subr.mxu0 %v2254
  %2994 = vmatpush1.msra.mxu0 %v2253
  %2995 = vmatprep.subr.mxu0 %v2258
  %2996 = vmatpush1.msra.mxu0 %v2257
  %2997 = vmatprep.subr.mxu0 %v2262
  %2998 = vmatpush1.msra.mxu0 %v2261
  %2999 = vmatprep.subr.mxu0 %v2266
  %3000 = vmatpush1.msra.mxu0 %v2265
  %3001 = vmatprep.subr.mxu0 0.0
  %3002 = vmatpush1.msra.mxu0 0.0
  %3003 = vmatprep.subr.mxu0 0.0
  %3004 = vmatpush1.msra.mxu0 0.0
  %3005 = vmatprep.subr.mxu0 0.0
  %3006 = vmatpush1.msra.mxu0 0.0
  %3007 = vmatprep.subr.mxu0 0.0
  %3008 = vmatpush1.msra.mxu0 0.0
  %3009 = vmatprep.subr.mxu0 0.0
  %3010 = vmatpush1.msra.mxu0 0.0
  %3011 = vmatprep.subr.mxu0 0.0
  %3012 = vmatpush1.msra.mxu0 0.0
  %3013 = vmatprep.subr.mxu0 0.0
  %3014 = vmatpush1.msra.mxu0 0.0
  %3015 = vmatprep.subr.mxu0 0.0
  %3016 = vmatpush1.msra.mxu0 0.0
  %3017 = vmatprep.subr.mxu0 0.0
  %3018 = vmatpush1.msra.mxu0 0.0
  %3019 = vmatprep.subr.mxu0 0.0
  %3020 = vmatpush1.msra.mxu0 0.0
  %3021 = vmatprep.subr.mxu0 0.0
  %3022 = vmatpush1.msra.mxu0 0.0
  %3023 = vmatprep.subr.mxu0 0.0
  %3024 = vmatpush1.msra.mxu0 0.0
  %3025 = vmatprep.subr.mxu0 0.0
  %3026 = vmatpush1.msra.mxu0 0.0
  %3027 = vmatprep.subr.mxu0 0.0
  %3028 = vmatpush1.msra.mxu0 0.0
  %3029 = vmatprep.subr.mxu0 0.0
  %3030 = vmatpush1.msra.mxu0 0.0
  %3031 = vmatprep.subr.mxu0 0.0
  %3032 = vmatpush1.msra.mxu0 0.0
  %3033 = vmatprep.mubr.f32.mxu0 0.0
  %3034 = vmatmul.mubr.f32.gmra.mrb[0].mxu0 %v2963
  %v3035 = vpop.f32.mrb[0].mxu0
  %v3036 = vadd.f32 0.0, %v3035
  %v3037 = vpop.f32.mrb[0].mxu0
  %v3038 = vadd.f32 0.0, %v3037
  %3039 = vdwg.mxu0
  %3040 = vmatprep.subr.mxu0 %v2208
  %3041 = vmatpush1.msra.mxu0 %v2207
  %3042 = vmatprep.subr.mxu0 %v2212
  %3043 = vmatpush1.msra.mxu0 %v2211
  %3044 = vmatprep.subr.mxu0 %v2216
  %3045 = vmatpush1.msra.mxu0 %v2215
  %3046 = vmatprep.subr.mxu0 %v2220
  %3047 = vmatpush1.msra.mxu0 %v2219
  %3048 = vmatprep.subr.mxu0 %v2224
  %3049 = vmatpush1.msra.mxu0 %v2223
  %3050 = vmatprep.subr.mxu0 %v2228
  %3051 = vmatpush1.msra.mxu0 %v2227
  %3052 = vmatprep.subr.mxu0 %v2232
  %3053 = vmatpush1.msra.mxu0 %v2231
  %3054 = vmatprep.subr.mxu0 %v2236
  %3055 = vmatpush1.msra.mxu0 %v2235
  %3056 = vmatprep.subr.mxu0 %v2240
  %3057 = vmatpush1.msra.mxu0 %v2239
  %3058 = vmatprep.subr.mxu0 %v2244
  %3059 = vmatpush1.msra.mxu0 %v2243
  %3060 = vmatprep.subr.mxu0 %v2248
  %3061 = vmatpush1.msra.mxu0 %v2247
  %3062 = vmatprep.subr.mxu0 %v2252
  %3063 = vmatpush1.msra.mxu0 %v2251
  %3064 = vmatprep.subr.mxu0 %v2256
  %3065 = vmatpush1.msra.mxu0 %v2255
  %3066 = vmatprep.subr.mxu0 %v2260
  %3067 = vmatpush1.msra.mxu0 %v2259
  %3068 = vmatprep.subr.mxu0 %v2264
  %3069 = vmatpush1.msra.mxu0 %v2263
  %3070 = vmatprep.subr.mxu0 %v2268
  %3071 = vmatpush1.msra.mxu0 %v2267
  %3072 = vmatprep.subr.mxu0 0.0
  %3073 = vmatpush1.msra.mxu0 0.0
  %3074 = vmatprep.subr.mxu0 0.0
  %3075 = vmatpush1.msra.mxu0 0.0
  %3076 = vmatprep.subr.mxu0 0.0
  %3077 = vmatpush1.msra.mxu0 0.0
  %3078 = vmatprep.subr.mxu0 0.0
  %3079 = vmatpush1.msra.mxu0 0.0
  %3080 = vmatprep.subr.mxu0 0.0
  %3081 = vmatpush1.msra.mxu0 0.0
  %3082 = vmatprep.subr.mxu0 0.0
  %3083 = vmatpush1.msra.mxu0 0.0
  %3084 = vmatprep.subr.mxu0 0.0
  %3085 = vmatpush1.msra.mxu0 0.0
  %3086 = vmatprep.subr.mxu0 0.0
  %3087 = vmatpush1.msra.mxu0 0.0
  %3088 = vmatprep.subr.mxu0 0.0
  %3089 = vmatpush1.msra.mxu0 0.0
  %3090 = vmatprep.subr.mxu0 0.0
  %3091 = vmatpush1.msra.mxu0 0.0
  %3092 = vmatprep.subr.mxu0 0.0
  %3093 = vmatpush1.msra.mxu0 0.0
  %3094 = vmatprep.subr.mxu0 0.0
  %3095 = vmatpush1.msra.mxu0 0.0
  %3096 = vmatprep.subr.mxu0 0.0
  %3097 = vmatpush1.msra.mxu0 0.0
  %3098 = vmatprep.subr.mxu0 0.0
  %3099 = vmatpush1.msra.mxu0 0.0
  %3100 = vmatprep.subr.mxu0 0.0
  %3101 = vmatpush1.msra.mxu0 0.0
  %3102 = vmatprep.subr.mxu0 0.0
  %3103 = vmatpush1.msra.mxu0 0.0
  %3104 = vmatprep.mubr.f32.mxu0 0.0
  %3105 = vmatmul.mubr.f32.gmra.mrb[0].mxu0 %v2963
  %v3106 = vpop.f32.mrb[0].mxu0
  %v3107 = vadd.f32 0.0, %v3106
  %v3108 = vpop.f32.mrb[0].mxu0
  %v3109 = vadd.f32 0.0, %v3108
  %3110 = vdwg.mxu0
  %v3111 = vadd.f32 %v2965, %v3036
  %v3112 = vadd.f32 %v2966, %v3038
  %v3113 = vadd.f32 %v2967, %v3107
  %v3114 = vadd.f32 %v2968, %v3109
  %v3115 = vxor.u32 %v3111, 2147483648
  %v3116 = vmul.f32 %v3115, 1.442695
  %v3117 = vpow.pop %v3116
  %v3118 = vadd.f32 %v3117, 1.0
  %v3119 = vrcp.pop %v3118
  %v3120 = vmul.f32 1.0, %v3119
  %v3121 = vxor.u32 %v3112, 2147483648
  %v3122 = vmul.f32 %v3121, 1.442695
  %v3123 = vpow.pop %v3122
  %v3124 = vadd.f32 %v3123, 1.0
  %v3125 = vrcp.pop %v3124
  %v3126 = vmul.f32 1.0, %v3125
  %v3127 = vtanh.pop %v3113
  %v3128 = vxor.u32 %v3114, 2147483648
  %v3129 = vmul.f32 %v3128, 1.442695
  %v3130 = vpow.pop %v3129
  %v3131 = vadd.f32 %v3130, 1.0
  %v3132 = vrcp.pop %v3131
  %v3133 = vmul.f32 1.0, %v3132
  %v3134 = vmul.f32 %v3126, %v2961
  %v3135 = vmul.f32 %v3120, %v3127
  %v3136 = vadd.f32 %v3134, %v3135
  %v3137 = vtanh.pop %v3136
  %v3138 = vmul.f32 %v3133, %v3137
  %v3139 = vadd.f32 %v2964, %v3138
  %v3140 = vld [vmem:[#allocation2 + $0xa0] sm:$0xff]
  %v3141 = vld [vmem:[#allocation2 + $0xa8] sm:$0xff]
  %v3142 = vld [vmem:[#allocation2 + $0xb0] sm:$0xff]
  %v3143 = vld [vmem:[#allocation2 + $0xb8] sm:$0xff]
  %3144 = vmatprep.subr.mxu0 %v2206
  %3145 = vmatpush1.msra.mxu0 %v2205
  %3146 = vmatprep.subr.mxu0 %v2210
  %3147 = vmatpush1.msra.mxu0 %v2209
  %3148 = vmatprep.subr.mxu0 %v2214
  %3149 = vmatpush1.msra.mxu0 %v2213
  %3150 = vmatprep.subr.mxu0 %v2218
  %3151 = vmatpush1.msra.mxu0 %v2217
  %3152 = vmatprep.subr.mxu0 %v2222
  %3153 = vmatpush1.msra.mxu0 %v2221
  %3154 = vmatprep.subr.mxu0 %v2226
  %3155 = vmatpush1.msra.mxu0 %v2225
  %3156 = vmatprep.subr.mxu0 %v2230
  %3157 = vmatpush1.msra.mxu0 %v2229
  %3158 = vmatprep.subr.mxu0 %v2234
  %3159 = vmatpush1.msra.mxu0 %v2233
  %3160 = vmatprep.subr.mxu0 %v2238
  %3161 = vmatpush1.msra.mxu0 %v2237
  %3162 = vmatprep.subr.mxu0 %v2242
  %3163 = vmatpush1.msra.mxu0 %v2241
  %3164 = vmatprep.subr.mxu0 %v2246
  %3165 = vmatpush1.msra.mxu0 %v2245
  %3166 = vmatprep.subr.mxu0 %v2250
  %3167 = vmatpush1.msra.mxu0 %v2249
  %3168 = vmatprep.subr.mxu0 %v2254
  %3169 = vmatpush1.msra.mxu0 %v2253
  %3170 = vmatprep.subr.mxu0 %v2258
  %3171 = vmatpush1.msra.mxu0 %v2257
  %3172 = vmatprep.subr.mxu0 %v2262
  %3173 = vmatpush1.msra.mxu0 %v2261
  %3174 = vmatprep.subr.mxu0 %v2266
  %3175 = vmatpush1.msra.mxu0 %v2265
  %3176 = vmatprep.subr.mxu0 0.0
  %3177 = vmatpush1.msra.mxu0 0.0
  %3178 = vmatprep.subr.mxu0 0.0
  %3179 = vmatpush1.msra.mxu0 0.0
  %3180 = vmatprep.subr.mxu0 0.0
  %3181 = vmatpush1.msra.mxu0 0.0
  %3182 = vmatprep.subr.mxu0 0.0
  %3183 = vmatpush1.msra.mxu0 0.0
  %3184 = vmatprep.subr.mxu0 0.0
  %3185 = vmatpush1.msra.mxu0 0.0
  %3186 = vmatprep.subr.mxu0 0.0
  %3187 = vmatpush1.msra.mxu0 0.0
  %3188 = vmatprep.subr.mxu0 0.0
  %3189 = vmatpush1.msra.mxu0 0.0
  %3190 = vmatprep.subr.mxu0 0.0
  %3191 = vmatpush1.msra.mxu0 0.0
  %3192 = vmatprep.subr.mxu0 0.0
  %3193 = vmatpush1.msra.mxu0 0.0
  %3194 = vmatprep.subr.mxu0 0.0
  %3195 = vmatpush1.msra.mxu0 0.0
  %3196 = vmatprep.subr.mxu0 0.0
  %3197 = vmatpush1.msra.mxu0 0.0
  %3198 = vmatprep.subr.mxu0 0.0
  %3199 = vmatpush1.msra.mxu0 0.0
  %3200 = vmatprep.subr.mxu0 0.0
  %3201 = vmatpush1.msra.mxu0 0.0
  %3202 = vmatprep.subr.mxu0 0.0
  %3203 = vmatpush1.msra.mxu0 0.0
  %3204 = vmatprep.subr.mxu0 0.0
  %3205 = vmatpush1.msra.mxu0 0.0
  %3206 = vmatprep.subr.mxu0 0.0
  %3207 = vmatpush1.msra.mxu0 0.0
  %3208 = vmatprep.mubr.f32.mxu0 0.0
  %3209 = vmatmul.mubr.f32.gmra.mrb[0].mxu0 %v3138
  %v3210 = vpop.f32.mrb[0].mxu0
  %v3211 = vadd.f32 0.0, %v3210
  %v3212 = vpop.f32.mrb[0].mxu0
  %v3213 = vadd.f32 0.0, %v3212
  %3214 = vdwg.mxu0
  %3215 = vmatprep.subr.mxu0 %v2208
  %3216 = vmatpush1.msra.mxu0 %v2207
  %3217 = vmatprep.subr.mxu0 %v2212
  %3218 = vmatpush1.msra.mxu0 %v2211
  %3219 = vmatprep.subr.mxu0 %v2216
  %3220 = vmatpush1.msra.mxu0 %v2215
  %3221 = vmatprep.subr.mxu0 %v2220
  %3222 = vmatpush1.msra.mxu0 %v2219
  %3223 = vmatprep.subr.mxu0 %v2224
  %3224 = vmatpush1.msra.mxu0 %v2223
  %3225 = vmatprep.subr.mxu0 %v2228
  %3226 = vmatpush1.msra.mxu0 %v2227
  %3227 = vmatprep.subr.mxu0 %v2232
  %3228 = vmatpush1.msra.mxu0 %v2231
  %3229 = vmatprep.subr.mxu0 %v2236
  %3230 = vmatpush1.msra.mxu0 %v2235
  %3231 = vmatprep.subr.mxu0 %v2240
  %3232 = vmatpush1.msra.mxu0 %v2239
  %3233 = vmatprep.subr.mxu0 %v2244
  %3234 = vmatpush1.msra.mxu0 %v2243
  %3235 = vmatprep.subr.mxu0 %v2248
  %3236 = vmatpush1.msra.mxu0 %v2247
  %3237 = vmatprep.subr.mxu0 %v2252
  %3238 = vmatpush1.msra.mxu0 %v2251
  %3239 = vmatprep.subr.mxu0 %v2256
  %3240 = vmatpush1.msra.mxu0 %v2255
  %3241 = vmatprep.subr.mxu0 %v2260
  %3242 = vmatpush1.msra.mxu0 %v2259
  %3243 = vmatprep.subr.mxu0 %v2264
  %3244 = vmatpush1.msra.mxu0 %v2263
  %3245 = vmatprep.subr.mxu0 %v2268
  %3246 = vmatpush1.msra.mxu0 %v2267
  %3247 = vmatprep.subr.mxu0 0.0
  %3248 = vmatpush1.msra.mxu0 0.0
  %3249 = vmatprep.subr.mxu0 0.0
  %3250 = vmatpush1.msra.mxu0 0.0
  %3251 = vmatprep.subr.mxu0 0.0
  %3252 = vmatpush1.msra.mxu0 0.0
  %3253 = vmatprep.subr.mxu0 0.0
  %3254 = vmatpush1.msra.mxu0 0.0
  %3255 = vmatprep.subr.mxu0 0.0
  %3256 = vmatpush1.msra.mxu0 0.0
  %3257 = vmatprep.subr.mxu0 0.0
  %3258 = vmatpush1.msra.mxu0 0.0
  %3259 = vmatprep.subr.mxu0 0.0
  %3260 = vmatpush1.msra.mxu0 0.0
  %3261 = vmatprep.subr.mxu0 0.0
  %3262 = vmatpush1.msra.mxu0 0.0
  %3263 = vmatprep.subr.mxu0 0.0
  %3264 = vmatpush1.msra.mxu0 0.0
  %3265 = vmatprep.subr.mxu0 0.0
  %3266 = vmatpush1.msra.mxu0 0.0
  %3267 = vmatprep.subr.mxu0 0.0
  %3268 = vmatpush1.msra.mxu0 0.0
  %3269 = vmatprep.subr.mxu0 0.0
  %3270 = vmatpush1.msra.mxu0 0.0
  %3271 = vmatprep.subr.mxu0 0.0
  %3272 = vmatpush1.msra.mxu0 0.0
  %3273 = vmatprep.subr.mxu0 0.0
  %3274 = vmatpush1.msra.mxu0 0.0
  %3275 = vmatprep.subr.mxu0 0.0
  %3276 = vmatpush1.msra.mxu0 0.0
  %3277 = vmatprep.subr.mxu0 0.0
  %3278 = vmatpush1.msra.mxu0 0.0
  %3279 = vmatprep.mubr.f32.mxu0 0.0
  %3280 = vmatmul.mubr.f32.gmra.mrb[0].mxu0 %v3138
  %v3281 = vpop.f32.mrb[0].mxu0
  %v3282 = vadd.f32 0.0, %v3281
  %v3283 = vpop.f32.mrb[0].mxu0
  %v3284 = vadd.f32 0.0, %v3283
  %3285 = vdwg.mxu0
  %v3286 = vadd.f32 %v3140, %v3211
  %v3287 = vadd.f32 %v3141, %v3213
  %v3288 = vadd.f32 %v3142, %v3282
  %v3289 = vadd.f32 %v3143, %v3284
  %v3290 = vxor.u32 %v3286, 2147483648
  %v3291 = vmul.f32 %v3290, 1.442695
  %v3292 = vpow.pop %v3291
  %v3293 = vadd.f32 %v3292, 1.0
  %v3294 = vrcp.pop %v3293
  %v3295 = vmul.f32 1.0, %v3294
  %v3296 = vxor.u32 %v3287, 2147483648
  %v3297 = vmul.f32 %v3296, 1.442695
  %v3298 = vpow.pop %v3297
  %v3299 = vadd.f32 %v3298, 1.0
  %v3300 = vrcp.pop %v3299
  %v3301 = vmul.f32 1.0, %v3300
  %v3302 = vtanh.pop %v3288
  %v3303 = vxor.u32 %v3289, 2147483648
  %v3304 = vmul.f32 %v3303, 1.442695
  %v3305 = vpow.pop %v3304
  %v3306 = vadd.f32 %v3305, 1.0
  %v3307 = vrcp.pop %v3306
  %v3308 = vmul.f32 1.0, %v3307
  %v3309 = vmul.f32 %v3301, %v3136
  %v3310 = vmul.f32 %v3295, %v3302
  %v3311 = vadd.f32 %v3309, %v3310
  %v3312 = vtanh.pop %v3311
  %v3313 = vmul.f32 %v3308, %v3312
  %v3314 = vadd.f32 %v3139, %v3313
  %v3315 = vld [vmem:[#allocation2 + $0xc0] sm:$0xff]
  %v3316 = vld [vmem:[#allocation2 + $0xc8] sm:$0xff]
  %v3317 = vld [vmem:[#allocation2 + $0xd0] sm:$0xff]
  %v3318 = vld [vmem:[#allocation2 + $0xd8] sm:$0xff]
  %3319 = vmatprep.subr.mxu0 %v2206
  %3320 = vmatpush1.msra.mxu0 %v2205
  %3321 = vmatprep.subr.mxu0 %v2210
  %3322 = vmatpush1.msra.mxu0 %v2209
  %3323 = vmatprep.subr.mxu0 %v2214
  %3324 = vmatpush1.msra.mxu0 %v2213
  %3325 = vmatprep.subr.mxu0 %v2218
  %3326 = vmatpush1.msra.mxu0 %v2217
  %3327 = vmatprep.subr.mxu0 %v2222
  %3328 = vmatpush1.msra.mxu0 %v2221
  %3329 = vmatprep.subr.mxu0 %v2226
  %3330 = vmatpush1.msra.mxu0 %v2225
  %3331 = vmatprep.subr.mxu0 %v2230
  %3332 = vmatpush1.msra.mxu0 %v2229
  %3333 = vmatprep.subr.mxu0 %v2234
  %3334 = vmatpush1.msra.mxu0 %v2233
  %3335 = vmatprep.subr.mxu0 %v2238
  %3336 = vmatpush1.msra.mxu0 %v2237
  %3337 = vmatprep.subr.mxu0 %v2242
  %3338 = vmatpush1.msra.mxu0 %v2241
  %3339 = vmatprep.subr.mxu0 %v2246
  %3340 = vmatpush1.msra.mxu0 %v2245
  %3341 = vmatprep.subr.mxu0 %v2250
  %3342 = vmatpush1.msra.mxu0 %v2249
  %3343 = vmatprep.subr.mxu0 %v2254
  %3344 = vmatpush1.msra.mxu0 %v2253
  %3345 = vmatprep.subr.mxu0 %v2258
  %3346 = vmatpush1.msra.mxu0 %v2257
  %3347 = vmatprep.subr.mxu0 %v2262
  %3348 = vmatpush1.msra.mxu0 %v2261
  %3349 = vmatprep.subr.mxu0 %v2266
  %3350 = vmatpush1.msra.mxu0 %v2265
  %3351 = vmatprep.subr.mxu0 0.0
  %3352 = vmatpush1.msra.mxu0 0.0
  %3353 = vmatprep.subr.mxu0 0.0
  %3354 = vmatpush1.msra.mxu0 0.0
  %3355 = vmatprep.subr.mxu0 0.0
  %3356 = vmatpush1.msra.mxu0 0.0
  %3357 = vmatprep.subr.mxu0 0.0
  %3358 = vmatpush1.msra.mxu0 0.0
  %3359 = vmatprep.subr.mxu0 0.0
  %3360 = vmatpush1.msra.mxu0 0.0
  %3361 = vmatprep.subr.mxu0 0.0
  %3362 = vmatpush1.msra.mxu0 0.0
  %3363 = vmatprep.subr.mxu0 0.0
  %3364 = vmatpush1.msra.mxu0 0.0
  %3365 = vmatprep.subr.mxu0 0.0
  %3366 = vmatpush1.msra.mxu0 0.0
  %3367 = vmatprep.subr.mxu0 0.0
  %3368 = vmatpush1.msra.mxu0 0.0
  %3369 = vmatprep.subr.mxu0 0.0
  %3370 = vmatpush1.msra.mxu0 0.0
  %3371 = vmatprep.subr.mxu0 0.0
  %3372 = vmatpush1.msra.mxu0 0.0
  %3373 = vmatprep.subr.mxu0 0.0
  %3374 = vmatpush1.msra.mxu0 0.0
  %3375 = vmatprep.subr.mxu0 0.0
  %3376 = vmatpush1.msra.mxu0 0.0
  %3377 = vmatprep.subr.mxu0 0.0
  %3378 = vmatpush1.msra.mxu0 0.0
  %3379 = vmatprep.subr.mxu0 0.0
  %3380 = vmatpush1.msra.mxu0 0.0
  %3381 = vmatprep.subr.mxu0 0.0
  %3382 = vmatpush1.msra.mxu0 0.0
  %3383 = vmatprep.mubr.f32.mxu0 0.0
  %3384 = vmatmul.mubr.f32.gmra.mrb[0].mxu0 %v3313
  %v3385 = vpop.f32.mrb[0].mxu0
  %v3386 = vadd.f32 0.0, %v3385
  %v3387 = vpop.f32.mrb[0].mxu0
  %v3388 = vadd.f32 0.0, %v3387
  %3389 = vdwg.mxu0
  %3390 = vmatprep.subr.mxu0 %v2208
  %3391 = vmatpush1.msra.mxu0 %v2207
  %3392 = vmatprep.subr.mxu0 %v2212
  %3393 = vmatpush1.msra.mxu0 %v2211
  %3394 = vmatprep.subr.mxu0 %v2216
  %3395 = vmatpush1.msra.mxu0 %v2215
  %3396 = vmatprep.subr.mxu0 %v2220
  %3397 = vmatpush1.msra.mxu0 %v2219
  %3398 = vmatprep.subr.mxu0 %v2224
  %3399 = vmatpush1.msra.mxu0 %v2223
  %3400 = vmatprep.subr.mxu0 %v2228
  %3401 = vmatpush1.msra.mxu0 %v2227
  %3402 = vmatprep.subr.mxu0 %v2232
  %3403 = vmatpush1.msra.mxu0 %v2231
  %3404 = vmatprep.subr.mxu0 %v2236
  %3405 = vmatpush1.msra.mxu0 %v2235
  %3406 = vmatprep.subr.mxu0 %v2240
  %3407 = vmatpush1.msra.mxu0 %v2239
  %3408 = vmatprep.subr.mxu0 %v2244
  %3409 = vmatpush1.msra.mxu0 %v2243
  %3410 = vmatprep.subr.mxu0 %v2248
  %3411 = vmatpush1.msra.mxu0 %v2247
  %3412 = vmatprep.subr.mxu0 %v2252
  %3413 = vmatpush1.msra.mxu0 %v2251
  %3414 = vmatprep.subr.mxu0 %v2256
  %3415 = vmatpush1.msra.mxu0 %v2255
  %3416 = vmatprep.subr.mxu0 %v2260
  %3417 = vmatpush1.msra.mxu0 %v2259
  %3418 = vmatprep.subr.mxu0 %v2264
  %3419 = vmatpush1.msra.mxu0 %v2263
  %3420 = vmatprep.subr.mxu0 %v2268
  %3421 = vmatpush1.msra.mxu0 %v2267
  %3422 = vmatprep.subr.mxu0 0.0
  %3423 = vmatpush1.msra.mxu0 0.0
  %3424 = vmatprep.subr.mxu0 0.0
  %3425 = vmatpush1.msra.mxu0 0.0
  %3426 = vmatprep.subr.mxu0 0.0
  %3427 = vmatpush1.msra.mxu0 0.0
  %3428 = vmatprep.subr.mxu0 0.0
  %3429 = vmatpush1.msra.mxu0 0.0
  %3430 = vmatprep.subr.mxu0 0.0
  %3431 = vmatpush1.msra.mxu0 0.0
  %3432 = vmatprep.subr.mxu0 0.0
  %3433 = vmatpush1.msra.mxu0 0.0
  %3434 = vmatprep.subr.mxu0 0.0
  %3435 = vmatpush1.msra.mxu0 0.0
  %3436 = vmatprep.subr.mxu0 0.0
  %3437 = vmatpush1.msra.mxu0 0.0
  %3438 = vmatprep.subr.mxu0 0.0
  %3439 = vmatpush1.msra.mxu0 0.0
  %3440 = vmatprep.subr.mxu0 0.0
  %3441 = vmatpush1.msra.mxu0 0.0
  %3442 = vmatprep.subr.mxu0 0.0
  %3443 = vmatpush1.msra.mxu0 0.0
  %3444 = vmatprep.subr.mxu0 0.0
  %3445 = vmatpush1.msra.mxu0 0.0
  %3446 = vmatprep.subr.mxu0 0.0
  %3447 = vmatpush1.msra.mxu0 0.0
  %3448 = vmatprep.subr.mxu0 0.0
  %3449 = vmatpush1.msra.mxu0 0.0
  %3450 = vmatprep.subr.mxu0 0.0
  %3451 = vmatpush1.msra.mxu0 0.0
  %3452 = vmatprep.subr.mxu0 0.0
  %3453 = vmatpush1.msra.mxu0 0.0
  %3454 = vmatprep.mubr.f32.mxu0 0.0
  %3455 = vmatmul.mubr.f32.gmra.mrb[0].mxu0 %v3313
  %v3456 = vpop.f32.mrb[0].mxu0
  %v3457 = vadd.f32 0.0, %v3456
  %v3458 = vpop.f32.mrb[0].mxu0
  %v3459 = vadd.f32 0.0, %v3458
  %3460 = vdwg.mxu0
  %v3461 = vadd.f32 %v3315, %v3386
  %v3462 = vadd.f32 %v3316, %v3388
  %v3463 = vadd.f32 %v3317, %v3457
  %v3464 = vadd.f32 %v3318, %v3459
  %v3465 = vxor.u32 %v3461, 2147483648
  %v3466 = vmul.f32 %v3465, 1.442695
  %v3467 = vpow.pop %v3466
  %v3468 = vadd.f32 %v3467, 1.0
  %v3469 = vrcp.pop %v3468
  %v3470 = vmul.f32 1.0, %v3469
  %v3471 = vxor.u32 %v3462, 2147483648
  %v3472 = vmul.f32 %v3471, 1.442695
  %v3473 = vpow.pop %v3472
  %v3474 = vadd.f32 %v3473, 1.0
  %v3475 = vrcp.pop %v3474
  %v3476 = vmul.f32 1.0, %v3475
  %v3477 = vtanh.pop %v3463
  %v3478 = vxor.u32 %v3464, 2147483648
  %v3479 = vmul.f32 %v3478, 1.442695
  %v3480 = vpow.pop %v3479
  %v3481 = vadd.f32 %v3480, 1.0
  %v3482 = vrcp.pop %v3481
  %v3483 = vmul.f32 1.0, %v3482
  %v3484 = vmul.f32 %v3476, %v3311
  %v3485 = vmul.f32 %v3470, %v3477
  %v3486 = vadd.f32 %v3484, %v3485
  %v3487 = vtanh.pop %v3486
  %v3488 = vmul.f32 %v3483, %v3487
  %v3489 = vadd.f32 %v3314, %v3488
  %v3490 = vld [vmem:[#allocation2 + $0xe0] sm:$0xff]
  %v3491 = vld [vmem:[#allocation2 + $0xe8] sm:$0xff]
  %v3492 = vld [vmem:[#allocation2 + $0xf0] sm:$0xff]
  %v3493 = vld [vmem:[#allocation2 + $0xf8] sm:$0xff]
  %3494 = vmatprep.subr.mxu0 %v2206
  %3495 = vmatpush1.msra.mxu0 %v2205
  %3496 = vmatprep.subr.mxu0 %v2210
  %3497 = vmatpush1.msra.mxu0 %v2209
  %3498 = vmatprep.subr.mxu0 %v2214
  %3499 = vmatpush1.msra.mxu0 %v2213
  %3500 = vmatprep.subr.mxu0 %v2218
  %3501 = vmatpush1.msra.mxu0 %v2217
  %3502 = vmatprep.subr.mxu0 %v2222
  %3503 = vmatpush1.msra.mxu0 %v2221
  %3504 = vmatprep.subr.mxu0 %v2226
  %3505 = vmatpush1.msra.mxu0 %v2225
  %3506 = vmatprep.subr.mxu0 %v2230
  %3507 = vmatpush1.msra.mxu0 %v2229
  %3508 = vmatprep.subr.mxu0 %v2234
  %3509 = vmatpush1.msra.mxu0 %v2233
  %3510 = vmatprep.subr.mxu0 %v2238
  %3511 = vmatpush1.msra.mxu0 %v2237
  %3512 = vmatprep.subr.mxu0 %v2242
  %3513 = vmatpush1.msra.mxu0 %v2241
  %3514 = vmatprep.subr.mxu0 %v2246
  %3515 = vmatpush1.msra.mxu0 %v2245
  %3516 = vmatprep.subr.mxu0 %v2250
  %3517 = vmatpush1.msra.mxu0 %v2249
  %3518 = vmatprep.subr.mxu0 %v2254
  %3519 = vmatpush1.msra.mxu0 %v2253
  %3520 = vmatprep.subr.mxu0 %v2258
  %3521 = vmatpush1.msra.mxu0 %v2257
  %3522 = vmatprep.subr.mxu0 %v2262
  %3523 = vmatpush1.msra.mxu0 %v2261
  %3524 = vmatprep.subr.mxu0 %v2266
  %3525 = vmatpush1.msra.mxu0 %v2265
  %3526 = vmatprep.subr.mxu0 0.0
  %3527 = vmatpush1.msra.mxu0 0.0
  %3528 = vmatprep.subr.mxu0 0.0
  %3529 = vmatpush1.msra.mxu0 0.0
  %3530 = vmatprep.subr.mxu0 0.0
  %3531 = vmatpush1.msra.mxu0 0.0
  %3532 = vmatprep.subr.mxu0 0.0
  %3533 = vmatpush1.msra.mxu0 0.0
  %3534 = vmatprep.subr.mxu0 0.0
  %3535 = vmatpush1.msra.mxu0 0.0
  %3536 = vmatprep.subr.mxu0 0.0
  %3537 = vmatpush1.msra.mxu0 0.0
  %3538 = vmatprep.subr.mxu0 0.0
  %3539 = vmatpush1.msra.mxu0 0.0
  %3540 = vmatprep.subr.mxu0 0.0
  %3541 = vmatpush1.msra.mxu0 0.0
  %3542 = vmatprep.subr.mxu0 0.0
  %3543 = vmatpush1.msra.mxu0 0.0
  %3544 = vmatprep.subr.mxu0 0.0
  %3545 = vmatpush1.msra.mxu0 0.0
  %3546 = vmatprep.subr.mxu0 0.0
  %3547 = vmatpush1.msra.mxu0 0.0
  %3548 = vmatprep.subr.mxu0 0.0
  %3549 = vmatpush1.msra.mxu0 0.0
  %3550 = vmatprep.subr.mxu0 0.0
  %3551 = vmatpush1.msra.mxu0 0.0
  %3552 = vmatprep.subr.mxu0 0.0
  %3553 = vmatpush1.msra.mxu0 0.0
  %3554 = vmatprep.subr.mxu0 0.0
  %3555 = vmatpush1.msra.mxu0 0.0
  %3556 = vmatprep.subr.mxu0 0.0
  %3557 = vmatpush1.msra.mxu0 0.0
  %3558 = vmatprep.mubr.f32.mxu0 0.0
  %3559 = vmatmul.mubr.f32.gmra.mrb[0].mxu0 %v3488
  %v3560 = vpop.f32.mrb[0].mxu0
  %v3561 = vadd.f32 0.0, %v3560
  %v3562 = vpop.f32.mrb[0].mxu0
  %v3563 = vadd.f32 0.0, %v3562
  %3564 = vdwg.mxu0
  %3565 = vmatprep.subr.mxu0 %v2208
  %3566 = vmatpush1.msra.mxu0 %v2207
  %3567 = vmatprep.subr.mxu0 %v2212
  %3568 = vmatpush1.msra.mxu0 %v2211
  %3569 = vmatprep.subr.mxu0 %v2216
  %3570 = vmatpush1.msra.mxu0 %v2215
  %3571 = vmatprep.subr.mxu0 %v2220
  %3572 = vmatpush1.msra.mxu0 %v2219
  %3573 = vmatprep.subr.mxu0 %v2224
  %3574 = vmatpush1.msra.mxu0 %v2223
  %3575 = vmatprep.subr.mxu0 %v2228
  %3576 = vmatpush1.msra.mxu0 %v2227
  %3577 = vmatprep.subr.mxu0 %v2232
  %3578 = vmatpush1.msra.mxu0 %v2231
  %3579 = vmatprep.subr.mxu0 %v2236
  %3580 = vmatpush1.msra.mxu0 %v2235
  %3581 = vmatprep.subr.mxu0 %v2240
  %3582 = vmatpush1.msra.mxu0 %v2239
  %3583 = vmatprep.subr.mxu0 %v2244
  %3584 = vmatpush1.msra.mxu0 %v2243
  %3585 = vmatprep.subr.mxu0 %v2248
  %3586 = vmatpush1.msra.mxu0 %v2247
  %3587 = vmatprep.subr.mxu0 %v2252
  %3588 = vmatpush1.msra.mxu0 %v2251
  %3589 = vmatprep.subr.mxu0 %v2256
  %3590 = vmatpush1.msra.mxu0 %v2255
  %3591 = vmatprep.subr.mxu0 %v2260
  %3592 = vmatpush1.msra.mxu0 %v2259
  %3593 = vmatprep.subr.mxu0 %v2264
  %3594 = vmatpush1.msra.mxu0 %v2263
  %3595 = vmatprep.subr.mxu0 %v2268
  %3596 = vmatpush1.msra.mxu0 %v2267
  %3597 = vmatprep.subr.mxu0 0.0
  %3598 = vmatpush1.msra.mxu0 0.0
  %3599 = vmatprep.subr.mxu0 0.0
  %3600 = vmatpush1.msra.mxu0 0.0
  %3601 = vmatprep.subr.mxu0 0.0
  %3602 = vmatpush1.msra.mxu0 0.0
  %3603 = vmatprep.subr.mxu0 0.0
  %3604 = vmatpush1.msra.mxu0 0.0
  %3605 = vmatprep.subr.mxu0 0.0
  %3606 = vmatpush1.msra.mxu0 0.0
  %3607 = vmatprep.subr.mxu0 0.0
  %3608 = vmatpush1.msra.mxu0 0.0
  %3609 = vmatprep.subr.mxu0 0.0
  %3610 = vmatpush1.msra.mxu0 0.0
  %3611 = vmatprep.subr.mxu0 0.0
  %3612 = vmatpush1.msra.mxu0 0.0
  %3613 = vmatprep.subr.mxu0 0.0
  %3614 = vmatpush1.msra.mxu0 0.0
  %3615 = vmatprep.subr.mxu0 0.0
  %3616 = vmatpush1.msra.mxu0 0.0
  %3617 = vmatprep.subr.mxu0 0.0
  %3618 = vmatpush1.msra.mxu0 0.0
  %3619 = vmatprep.subr.mxu0 0.0
  %3620 = vmatpush1.msra.mxu0 0.0
  %3621 = vmatprep.subr.mxu0 0.0
  %3622 = vmatpush1.msra.mxu0 0.0
  %3623 = vmatprep.subr.mxu0 0.0
  %3624 = vmatpush1.msra.mxu0 0.0
  %3625 = vmatprep.subr.mxu0 0.0
  %3626 = vmatpush1.msra.mxu0 0.0
  %3627 = vmatprep.subr.mxu0 0.0
  %3628 = vmatpush1.msra.mxu0 0.0
  %3629 = vmatprep.mubr.f32.mxu0 0.0
  %3630 = vmatmul.mubr.f32.gmra.mrb[0].mxu0 %v3488
  %v3631 = vpop.f32.mrb[0].mxu0
  %v3632 = vadd.f32 0.0, %v3631
  %v3633 = vpop.f32.mrb[0].mxu0
  %v3634 = vadd.f32 0.0, %v3633
  %3635 = vdwg.mxu0
  %v3636 = vadd.f32 %v3490, %v3561
  %v3637 = vadd.f32 %v3491, %v3563
  %v3638 = vadd.f32 %v3492, %v3632
  %v3639 = vadd.f32 %v3493, %v3634
  %v3640 = vxor.u32 %v3636, 2147483648
  %v3641 = vmul.f32 %v3640, 1.442695
  %v3642 = vpow.pop %v3641
  %v3643 = vadd.f32 %v3642, 1.0
  %v3644 = vrcp.pop %v3643
  %v3645 = vmul.f32 1.0, %v3644
  %v3646 = vxor.u32 %v3637, 2147483648
  %v3647 = vmul.f32 %v3646, 1.442695
  %v3648 = vpow.pop %v3647
  %v3649 = vadd.f32 %v3648, 1.0
  %v3650 = vrcp.pop %v3649
  %v3651 = vmul.f32 1.0, %v3650
  %v3652 = vtanh.pop %v3638
  %v3653 = vxor.u32 %v3639, 2147483648
  %v3654 = vmul.f32 %v3653, 1.442695
  %v3655 = vpow.pop %v3654
  %v3656 = vadd.f32 %v3655, 1.0
  %v3657 = vrcp.pop %v3656
  %v3658 = vmul.f32 1.0, %v3657
  %v3659 = vmul.f32 %v3651, %v3486
  %v3660 = vmul.f32 %v3645, %v3652
  %v3661 = vadd.f32 %v3659, %v3660
  %v3662 = vtanh.pop %v3661
  %v3663 = vmul.f32 %v3658, %v3662
  %v3664 = vadd.f32 %v3489, %v3663
  %s3665 = scalar_lea.vmem %s12, 8
  %3666 = vst [vmem:[%s3665] sm:$0xff] %v3663
  %s3667 = scalar_lea.vmem %s13, 8
  %3668 = vst [vmem:[%s3667] sm:$0xff] %v3661
  %v3669 = vmul.f32 %v3664, 0.125
  %v3670 = vld [vmem:[%s9] sm:$0xff]
  %v3671 = vld [vmem:[%s9 + $0x8] sm:$0xff]
  %v3672 = vld [vmem:[%s9 + $0x10] sm:$0xff]
  %v3673 = vld [vmem:[%s9 + $0x18] sm:$0xff]
  %v3674 = vld [vmem:[%s9 + $0x20] sm:$0xff]
  %v3675 = vld [vmem:[%s9 + $0x28] sm:$0xff]
  %v3676 = vld [vmem:[%s9 + $0x30] sm:$0xff]
  %v3677 = vld [vmem:[%s9 + $0x38] sm:$0xff]
  %v3678 = vld [vmem:[%s9 + $0x40] sm:$0xff]
  %v3679 = vld [vmem:[%s9 + $0x48] sm:$0xff]
  %v3680 = vld [vmem:[%s9 + $0x50] sm:$0xff]
  %v3681 = vld [vmem:[%s9 + $0x58] sm:$0xff]
  %v3682 = vld [vmem:[%s9 + $0x60] sm:$0xff]
  %v3683 = vld [vmem:[%s9 + $0x68] sm:$0xff]
  %v3684 = vld [vmem:[%s9 + $0x70] sm:$0xff]
  %v3685 = vld [vmem:[%s9 + $0x78] sm:$0xff]
  %v3686 = vld [vmem:[%s10] sm:$0x1]
  %v3688 = vlaneseq
  %v3689 = vshrl.u32 %v3688, 7
  %v3690 = vsub.s32 0, %v3689
  %v3691 = vrot.slane %v3686, %v3690
  %3693 = vmatprep.subr.mxu0 0.0
  %3694 = vmatpush1.msra.mxu0 %v3670
  %3695 = vmatprep.subr.mxu0 0.0
  %3696 = vmatpush1.msra.mxu0 %v3671
  %3697 = vmatprep.subr.mxu0 0.0
  %3698 = vmatpush1.msra.mxu0 %v3672
  %3699 = vmatprep.subr.mxu0 0.0
  %3700 = vmatpush1.msra.mxu0 %v3673
  %3701 = vmatprep.subr.mxu0 0.0
  %3702 = vmatpush1.msra.mxu0 %v3674
  %3703 = vmatprep.subr.mxu0 0.0
  %3704 = vmatpush1.msra.mxu0 %v3675
  %3705 = vmatprep.subr.mxu0 0.0
  %3706 = vmatpush1.msra.mxu0 %v3676
  %3707 = vmatprep.subr.mxu0 0.0
  %3708 = vmatpush1.msra.mxu0 %v3677
  %3709 = vmatprep.subr.mxu0 0.0
  %3710 = vmatpush1.msra.mxu0 %v3678
  %3711 = vmatprep.subr.mxu0 0.0
  %3712 = vmatpush1.msra.mxu0 %v3679
  %3713 = vmatprep.subr.mxu0 0.0
  %3714 = vmatpush1.msra.mxu0 %v3680
  %3715 = vmatprep.subr.mxu0 0.0
  %3716 = vmatpush1.msra.mxu0 %v3681
  %3717 = vmatprep.subr.mxu0 0.0
  %3718 = vmatpush1.msra.mxu0 %v3682
  %3719 = vmatprep.subr.mxu0 0.0
  %3720 = vmatpush1.msra.mxu0 %v3683
  %3721 = vmatprep.subr.mxu0 0.0
  %3722 = vmatpush1.msra.mxu0 %v3684
  %3723 = vmatprep.subr.mxu0 0.0
  %3724 = vmatpush1.msra.mxu0 %v3685
  %3725 = vmatprep.subr.mxu0 0.0
  %3726 = vmatpush1.msra.mxu0 0.0
  %3727 = vmatprep.subr.mxu0 0.0
  %3728 = vmatpush1.msra.mxu0 0.0
  %3729 = vmatprep.subr.mxu0 0.0
  %3730 = vmatpush1.msra.mxu0 0.0
  %3731 = vmatprep.subr.mxu0 0.0
  %3732 = vmatpush1.msra.mxu0 0.0
  %3733 = vmatprep.subr.mxu0 0.0
  %3734 = vmatpush1.msra.mxu0 0.0
  %3735 = vmatprep.subr.mxu0 0.0
  %3736 = vmatpush1.msra.mxu0 0.0
  %3737 = vmatprep.subr.mxu0 0.0
  %3738 = vmatpush1.msra.mxu0 0.0
  %3739 = vmatprep.subr.mxu0 0.0
  %3740 = vmatpush1.msra.mxu0 0.0
  %3741 = vmatprep.subr.mxu0 0.0
  %3742 = vmatpush1.msra.mxu0 0.0
  %3743 = vmatprep.subr.mxu0 0.0
  %3744 = vmatpush1.msra.mxu0 0.0
  %3745 = vmatprep.subr.mxu0 0.0
  %3746 = vmatpush1.msra.mxu0 0.0
  %3747 = vmatprep.subr.mxu0 0.0
  %3748 = vmatpush1.msra.mxu0 0.0
  %3749 = vmatprep.subr.mxu0 0.0
  %3750 = vmatpush1.msra.mxu0 0.0
  %3751 = vmatprep.subr.mxu0 0.0
  %3752 = vmatpush1.msra.mxu0 0.0
  %3753 = vmatprep.subr.mxu0 0.0
  %3754 = vmatpush1.msra.mxu0 0.0
  %3755 = vmatprep.subr.mxu0 0.0
  %3756 = vmatpush1.msra.mxu0 0.0
  %3757 = vmatprep.mubr.f32.mxu0 0.0
  %3758 = vmatmul.mubr.f32.gmra.mrb[0].mxu0 %v3669
  %v3759 = vpop.f32.mrb[0].mxu0
  %v3760 = vadd.f32 %v3691, %v3759
  %v3761 = vpop.f32.mrb[0].mxu0
  %3762 = vdwg.mxu0
  %3763 = vmax.xlane.f32.xlu0 %v3760
  %v3764 = vpop.xlane.xlu0 %3763
  %v3765 = vsub.f32 %v3760, %v3764
  %v3766 = vmul.f32 %v3765, 1.442695
  %v3767 = vpow.pop %v3766
  %3768 = vadd.xlane.f32.xlu0 %v3767
  %v3769 = vpop.xlane.xlu0 %3768
  %v3770 = vrcp.pop %v3769
  %v3771 = vmul.f32 %v3767, %v3770
  %3772 = vst [vmem:[%s11] sm:$0xff] %v3771
  // Predicated region
  $region46: #{basic_rnn_forward.1} parent=0 // pred_check
    _
  $region47: #{basic_rnn_forward.1} parent=0 // pred_check_branch
    %3774 = sbr.rel (0) target = $region49
  $region48: #{basic_rnn_forward.1} parent=0 // pred_region
    _
  $region49: #{basic_rnn_forward.1} parent=0 // pred_fallthru
    _
  // Predicated region
  $region50: #{basic_rnn_forward.1} parent=0 // pred_check
    _
  $region51: #{basic_rnn_forward.1} parent=0 // pred_check_branch
    %3776 = sbr.rel (0) target = $region53
  $region52: #{basic_rnn_forward.1} parent=0 // pred_region
    _
  $region53: #{basic_rnn_forward.1} parent=0 // pred_fallthru
    _
  // Predicated region
  $region54: #{basic_rnn_forward.1} parent=0 // pred_check
    _
  $region55: #{basic_rnn_forward.1} parent=0 // pred_check_branch
    %3778 = sbr.rel (0) target = $region57
  $region56: #{basic_rnn_forward.1} parent=0 // pred_region
    _
  $region57: #{basic_rnn_forward.1} parent=0 // pred_fallthru
    _
  // Predicated region
  $region58: #{basic_rnn_forward.1} parent=0 // pred_check
    _
  $region59: #{basic_rnn_forward.1} parent=0 // pred_check_branch
    %3780 = sbr.rel (0) target = $region61
  $region60: #{basic_rnn_forward.1} parent=0 // pred_region
    _
  $region61: #{basic_rnn_forward.1} parent=0 // pred_fallthru
    _
  // Predicated region
  $region62: #{basic_rnn_forward.1} parent=0 // pred_check
    _
  $region63: #{basic_rnn_forward.1} parent=0 // pred_check_branch
    %3782 = sbr.rel (0) target = $region65
  $region64: #{basic_rnn_forward.1} parent=0 // pred_region
    _
  $region65: #{basic_rnn_forward.1} parent=0 // pred_fallthru
    _
  // Predicated region
  $region66: #{basic_rnn_forward.1} parent=0 // pred_check
    _
  $region67: #{basic_rnn_forward.1} parent=0 // pred_check_branch
    %3784 = sbr.rel (0) target = $region69
  $region68: #{basic_rnn_forward.1} parent=0 // pred_region
    _
  $region69: #{basic_rnn_forward.1} parent=0 // pred_fallthru
    _

</llo_original>
